<compile_context>
chip_gen: v7x
topology: tpu7x:2x2x1
jax: 0.10.0
libtpu: 0.0.40
codegen_flags: <defaults>
</compile_context>

<pallas_src>
import jax
import jax.numpy as jnp
from jax import lax
from jax.experimental import pallas as pl
from jax.experimental.pallas import tpu as pltpu

C = 6            # c
R = 16           # r
CR = C * R       # 96
Z_DIM = 100
Z_PAD = 128      # zero-padded contraction dim feeding the first matmul
BN_EPS = 0.8
LRELU_SLOPE = 0.2

# 128-aligned offsets inside the packed small-parameter buffer (1, SMALLS_LEN) f32.
_OFF_B1, _OFF_B2, _OFF_G2, _OFF_BE2 = 0, 128, 384, 640
_OFF_B3, _OFF_G3, _OFF_BE3 = 896, 1408, 1920
_OFF_B4, _OFF_G4, _OFF_BE4 = 2432, 3456, 4480
_OFF_B5 = 5504
SMALLS_LEN = 5632


def _leaky_relu(x):
    # slope < 1  =>  max(x, 0.2*x) == LeakyReLU(0.2)(x); one compare fewer than where().
    return jnp.maximum(x, LRELU_SLOPE * x)


def _linear(x_f32, w_bf16, b_f32):
    # bf16 operands into the MXU, f32 accumulation, f32 bias add.
    return jnp.dot(x_f32.astype(jnp.bfloat16), w_bf16,
                   preferred_element_type=jnp.float32) + b_f32


def _bn_train(x, gamma, beta):
    # training-mode BatchNorm1d: per-batch statistics, biased variance, eps=0.8,
    # folded into per-feature scale/shift so the per-element apply is 2 VPU ops.
    mean = jnp.mean(x, axis=0, keepdims=True)
    var = jnp.mean(x * x, axis=0, keepdims=True) - mean * mean
    scale = gamma * lax.rsqrt(var + BN_EPS)
    shift = beta - mean * scale
    return x * scale + shift


def generator_kernel(z_ref, w1_ref, w2_ref, w3_ref, w4_hbm, w5_hbm,
                     smalls_ref, selt_ref, o_ref,
                     w4_vmem, w5_vmem, dma_sems):
    # Start the big weight copies immediately so they overlap layers 1-3.
    w4_copy = pltpu.make_async_copy(w4_hbm, w4_vmem, dma_sems.at[0])
    w5_copy = pltpu.make_async_copy(w5_hbm, w5_vmem, dma_sems.at[1])
    w4_copy.start()
    w5_copy.start()

    # Static, 128-aligned slices of the packed small-parameter buffer (free views).
    b1 = smalls_ref[:, _OFF_B1:_OFF_B1 + 128]
    b2 = smalls_ref[:, _OFF_B2:_OFF_B2 + 256]
    g2 = smalls_ref[:, _OFF_G2:_OFF_G2 + 256]
    be2 = smalls_ref[:, _OFF_BE2:_OFF_BE2 + 256]
    b3 = smalls_ref[:, _OFF_B3:_OFF_B3 + 512]
    g3 = smalls_ref[:, _OFF_G3:_OFF_G3 + 512]
    be3 = smalls_ref[:, _OFF_BE3:_OFF_BE3 + 512]
    b4 = smalls_ref[:, _OFF_B4:_OFF_B4 + 1024]
    g4 = smalls_ref[:, _OFF_G4:_OFF_G4 + 1024]
    be4 = smalls_ref[:, _OFF_BE4:_OFF_BE4 + 1024]
    b5 = smalls_ref[:, _OFF_B5:_OFF_B5 + CR]

    x = z_ref[...]                                            # (B, 128) f32, zero-padded

    # block(100, 128, normalize=False): Linear + LeakyReLU(0.2)
    h = _leaky_relu(_linear(x, w1_ref[...], b1))                                  # (B, 128)
    # block(in, out): Linear + BatchNorm1d(eps=0.8) + LeakyReLU(0.2)
    h = _leaky_relu(_bn_train(_linear(h, w2_ref[...], b2), g2, be2))              # (B, 256)
    h = _leaky_relu(_bn_train(_linear(h, w3_ref[...], b3), g3, be3))              # (B, 512)

    w4_copy.wait()                                            # 1 MiB copy hidden behind L1-L3
    h = _leaky_relu(_bn_train(_linear(h, w4_vmem[...], b4), g4, be4))             # (B, 1024)

    w5_copy.wait()
    logits = _linear(h, w5_vmem[...], b5)                     # (B, 96) f32

    # ---- grouped softmax over each contiguous run of R lanes (no MXU round-trips) ----
    sel_t = selt_ref[...]                                     # (C, CR) one-hot group->lanes
    # -1e30 mask assumes finite logits (NaN/-inf inputs would propagate; fine here).
    neg = (sel_t - 1.0) * 1e30                                # 0 in-group, -1e30 elsewhere

    # per-group max via masked lane reduction, kept in (B, C, 1) layout
    gmax = jnp.max(logits[:, None, :] + neg[None, :, :], axis=-1, keepdims=True)  # (B, C, 1)
    # broadcast back to 96 lanes via one masked reduce over the group axis
    gmax_b = jnp.sum(gmax * sel_t[None, :, :], axis=1)                            # (B, CR)

    e = jnp.exp(logits - gmax_b)                                                  # (B, CR)
    gsum = jnp.sum(e[:, None, :] * sel_t[None, :, :], axis=-1, keepdims=True)     # (B, C, 1)
    inv = pl.reciprocal(gsum, approx=True)                                        # EUP vrcp
    denom_b = jnp.sum(inv * sel_t[None, :, :], axis=1)                            # (B, CR)

    o_ref[...] = e * denom_b                                  # single lane-dense store


def prepare_params(params):
    """One-time conversion of f32 PyTorch-style params into kernel-ready buffers:
       pre-padded / pre-cast bf16 weights + one packed f32 small-param buffer +
       the softmax one-hot group-selection matrix. Do NOT call this per forward."""
    (w1, b1, w2, b2, g2, be2, w3, b3, g3, be3, w4, b4, g4, be4, w5, b5) = params

    w1p = jnp.pad(w1, ((0, Z_PAD - Z_DIM), (0, 0))).astype(jnp.bfloat16)   # (128, 128)
    w2b = w2.astype(jnp.bfloat16)                                          # (128, 256)
    w3b = w3.astype(jnp.bfloat16)                                          # (256, 512)
    w4b = w4.astype(jnp.bfloat16)                                          # (512, 1024)
    w5b = w5.astype(jnp.bfloat16)                                          # (1024, 96)

    b5p = jnp.pad(b5, ((0, 0), (0, 128 - CR)))                             # 96 -> 128
    smalls = jnp.concatenate(
        [b1, b2, g2, be2, b3, g3, be3, b4, g4, be4, b5p], axis=1)          # (1, 5632)

    grp = jnp.arange(CR, dtype=jnp.int32) // R
    sel_t = (grp[None, :] == jnp.arange(C, dtype=jnp.int32)[:, None]).astype(jnp.float32)

    return (w1p, w2b, w3b, w4b, w5b, smalls, sel_t)


@jax.jit
def generator_forward(z, prepped):
    """z: (B, 100) float32 -> (B, 1, C, R) float32 (matches PyTorch Generator)."""
    B = z.shape[0]
    w1p, w2b, w3b, w4b, w5b, smalls, sel_t = prepped

    # Only per-call prep: zero-pad z's contraction dim to 128 lanes (tiny).
    z_p = jnp.pad(z, ((0, 0), (0, Z_PAD - Z_DIM)))

    w_elems = Z_PAD * 128 + 128 * 256 + 256 * 512 + 512 * 1024 + 1024 * CR
    flops = 2 * B * w_elems
    transcendentals = B * CR + B * C + (256 + 512 + 1024)        # exp + recip + rsqrt
    bytes_accessed = (2 * w_elems                                # bf16 weights
                      + 4 * SMALLS_LEN + 4 * C * CR              # packed smalls + sel_t
                      + 4 * B * Z_PAD + 4 * B * CR)              # z in, probs out

    vmem = pl.BlockSpec(memory_space=pltpu.MemorySpace.VMEM)
    hbm = pl.BlockSpec(memory_space=pl.ANY)                      # manual DMA inside kernel

    out = pl.pallas_call(
        generator_kernel,
        out_shape=jax.ShapeDtypeStruct((B, CR), jnp.float32),
        in_specs=[vmem, vmem, vmem, vmem, hbm, hbm, vmem, vmem],
        out_specs=vmem,
        scratch_shapes=[
            pltpu.VMEM((512, 1024), jnp.bfloat16),               # w4 landing buffer
            pltpu.VMEM((1024, CR), jnp.bfloat16),                # w5 landing buffer
            pltpu.SemaphoreType.DMA((2,)),
        ],
        compiler_params=pltpu.CompilerParams(
            # whole-batch-in-one-tile BN: ~1.6 MiB weights + O(B * 8 KiB) activations;
            # 32 MiB leaves headroom even on v7x (64 MiB physical VMEM).
            vmem_limit_bytes=32 * 1024 * 1024),
        cost_estimate=pl.CostEstimate(flops=flops,
                                      transcendentals=transcendentals,
                                      bytes_accessed=bytes_accessed),
    )(z_p, w1p, w2b, w3b, w4b, w5b, smalls, sel_t)

    # nn.Unflatten(1, (1, c, r)): free reshape in XLA.
    return out.reshape(B, 1, C, R)


def init_params(key):
    """Deterministic parameter init mimicking PyTorch defaults.
       Linear: U(-1/sqrt(fan_in), 1/sqrt(fan_in)) for W and b (W stored as [in, out]).
       BatchNorm: gamma=1, beta=0."""
    dims = [(Z_DIM, 128), (128, 256), (256, 512), (512, 1024), (1024, CR)]
    lins = []
    keys = jax.random.split(key, 2 * len(dims))
    for idx, (fin, fout) in enumerate(dims):
        bound = 1.0 / (fin ** 0.5)
        w = jax.random.uniform(keys[2 * idx], (fin, fout), jnp.float32, -bound, bound)
        b = jax.random.uniform(keys[2 * idx + 1], (1, fout), jnp.float32, -bound, bound)
        lins.append((w, b))

    (w1, b1), (w2, b2), (w3, b3), (w4, b4), (w5, b5) = lins
    g2, be2 = jnp.ones((1, 256), jnp.float32), jnp.zeros((1, 256), jnp.float32)
    g3, be3 = jnp.ones((1, 512), jnp.float32), jnp.zeros((1, 512), jnp.float32)
    g4, be4 = jnp.ones((1, 1024), jnp.float32), jnp.zeros((1, 1024), jnp.float32)

    return (w1, b1, w2, b2, g2, be2, w3, b3, g3, be3, w4, b4, g4, be4, w5, b5)


def _reference_forward(z, params):
    """Pure-JAX f32 reference of the PyTorch module (training-mode BN)."""
    (w1, b1, w2, b2, g2, be2, w3, b3, g3, be3, w4, b4, g4, be4, w5, b5) = params

    def bn(x, g, be):
        m = jnp.mean(x, axis=0, keepdims=True)
        v = jnp.mean((x - m) ** 2, axis=0, keepdims=True)
        return g * (x - m) / jnp.sqrt(v + BN_EPS) + be

    def lrelu(x):
        return jnp.where(x > 0, x, LRELU_SLOPE * x)

    h = lrelu(z @ w1 + b1)
    h = lrelu(bn(h @ w2 + b2, g2, be2))
    h = lrelu(bn(h @ w3 + b3, g3, be3))
    h = lrelu(bn(h @ w4 + b4, g4, be4))
    logits = (h @ w5 + b5).reshape(z.shape[0], 1, C, R)
    return jax.nn.softmax(logits, axis=3)


if __name__ == "__main__":
    key = jax.random.PRNGKey(0)
    k_param, k_z = jax.random.split(key)

    B = 8
    z = jax.random.normal(k_z, (B, Z_DIM), jnp.float32)
    params = init_params(k_param)
    prepped = prepare_params(params)        # one-time pad + bf16 cast + packing

    out = jax.block_until_ready(generator_forward(z, prepped))

    assert out.shape == (B, 1, C, R), out.shape
    # softmax rows over dim=3 sum to 1 (approx reciprocal -> relaxed tolerance)
    row_sums = jnp.sum(out, axis=3)
    assert jnp.allclose(row_sums, 1.0, atol=5e-3), row_sums
    # agree with a pure-JAX f32 reference (tolerance absorbs bf16 weights + vrcp)
    ref = _reference_forward(z, params)
    max_err = float(jnp.max(jnp.abs(out - ref)))
    assert max_err < 2e-2, max_err

    print("KERNEL_OK")
</pallas_src>

<mosaic_0001>
module attributes {stable_mosaic.version = 11 : i64} {
  func.func @generator_kernel(%arg0: memref<8x128xf32, #tpu.memory_space<vmem>>, %arg1: memref<128x128xbf16, #tpu.memory_space<vmem>>, %arg2: memref<128x256xbf16, #tpu.memory_space<vmem>>, %arg3: memref<256x512xbf16, #tpu.memory_space<vmem>>, %arg4: memref<512x1024xbf16, #tpu.memory_space<any>>, %arg5: memref<1024x96xbf16, #tpu.memory_space<any>>, %arg6: memref<1x5632xf32, #tpu.memory_space<vmem>>, %arg7: memref<6x96xf32, #tpu.memory_space<vmem>>, %arg8: memref<8x96xf32, #tpu.memory_space<vmem>>, %arg9: memref<512x1024xbf16, #tpu.memory_space<vmem>>, %arg10: memref<1024x96xbf16, #tpu.memory_space<vmem>>, %arg11: memref<2x!tpu.dma_semaphore, #tpu.memory_space<semaphore_mem>>) attributes {dimension_semantics = [], scalar_prefetch = 0 : i64, scratch_operands = 3 : i64, tpu.core_type = #tpu.core_type<tc>} {
    %c0_i32 = arith.constant 0 : i32
    %0 = tpu.memref_slice %arg11[%c0_i32] : memref<2x!tpu.dma_semaphore, #tpu.memory_space<semaphore_mem>> -> memref<1x!tpu.dma_semaphore, #tpu.memory_space<semaphore_mem>>
    %1 = tpu.memref_squeeze %0 : memref<1x!tpu.dma_semaphore, #tpu.memory_space<semaphore_mem>> -> memref<!tpu.dma_semaphore, #tpu.memory_space<semaphore_mem>>
    tpu.enqueue_dma source(%arg4 : memref<512x1024xbf16, #tpu.memory_space<any>>) target(%arg9 : memref<512x1024xbf16, #tpu.memory_space<vmem>>) target_semaphore(%1 : memref<!tpu.dma_semaphore, #tpu.memory_space<semaphore_mem>>)
    %c1_i32 = arith.constant 1 : i32
    %2 = tpu.memref_slice %arg11[%c1_i32] : memref<2x!tpu.dma_semaphore, #tpu.memory_space<semaphore_mem>> -> memref<1x!tpu.dma_semaphore, #tpu.memory_space<semaphore_mem>>
    %3 = tpu.memref_squeeze %2 : memref<1x!tpu.dma_semaphore, #tpu.memory_space<semaphore_mem>> -> memref<!tpu.dma_semaphore, #tpu.memory_space<semaphore_mem>>
    tpu.enqueue_dma source(%arg5 : memref<1024x96xbf16, #tpu.memory_space<any>>) target(%arg10 : memref<1024x96xbf16, #tpu.memory_space<vmem>>) target_semaphore(%3 : memref<!tpu.dma_semaphore, #tpu.memory_space<semaphore_mem>>)
    %c0 = arith.constant 0 : index
    %c0_0 = arith.constant 0 : index
    %4 = vector.load %arg6[%c0, %c0_0] : memref<1x5632xf32, #tpu.memory_space<vmem>>, vector<1x128xf32>
    %c0_1 = arith.constant 0 : index
    %c128 = arith.constant 128 : index
    %5 = vector.load %arg6[%c0_1, %c128] : memref<1x5632xf32, #tpu.memory_space<vmem>>, vector<1x256xf32>
    %c0_2 = arith.constant 0 : index
    %c384 = arith.constant 384 : index
    %6 = vector.load %arg6[%c0_2, %c384] : memref<1x5632xf32, #tpu.memory_space<vmem>>, vector<1x256xf32>
    %c0_3 = arith.constant 0 : index
    %c640 = arith.constant 640 : index
    %7 = vector.load %arg6[%c0_3, %c640] : memref<1x5632xf32, #tpu.memory_space<vmem>>, vector<1x256xf32>
    %c0_4 = arith.constant 0 : index
    %c896 = arith.constant 896 : index
    %8 = vector.load %arg6[%c0_4, %c896] : memref<1x5632xf32, #tpu.memory_space<vmem>>, vector<1x512xf32>
    %c0_5 = arith.constant 0 : index
    %c1408 = arith.constant 1408 : index
    %9 = vector.load %arg6[%c0_5, %c1408] : memref<1x5632xf32, #tpu.memory_space<vmem>>, vector<1x512xf32>
    %c0_6 = arith.constant 0 : index
    %c1920 = arith.constant 1920 : index
    %10 = vector.load %arg6[%c0_6, %c1920] : memref<1x5632xf32, #tpu.memory_space<vmem>>, vector<1x512xf32>
    %c0_7 = arith.constant 0 : index
    %c2432 = arith.constant 2432 : index
    %11 = vector.load %arg6[%c0_7, %c2432] : memref<1x5632xf32, #tpu.memory_space<vmem>>, vector<1x1024xf32>
    %c0_8 = arith.constant 0 : index
    %c3456 = arith.constant 3456 : index
    %12 = vector.load %arg6[%c0_8, %c3456] : memref<1x5632xf32, #tpu.memory_space<vmem>>, vector<1x1024xf32>
    %c0_9 = arith.constant 0 : index
    %c4480 = arith.constant 4480 : index
    %13 = vector.load %arg6[%c0_9, %c4480] : memref<1x5632xf32, #tpu.memory_space<vmem>>, vector<1x1024xf32>
    %c0_10 = arith.constant 0 : index
    %c5504 = arith.constant 5504 : index
    %14 = vector.load %arg6[%c0_10, %c5504] : memref<1x5632xf32, #tpu.memory_space<vmem>>, vector<1x96xf32>
    %c0_11 = arith.constant 0 : index
    %c0_12 = arith.constant 0 : index
    %15 = vector.load %arg0[%c0_11, %c0_12] : memref<8x128xf32, #tpu.memory_space<vmem>>, vector<8x128xf32>
    %c0_13 = arith.constant 0 : index
    %c0_14 = arith.constant 0 : index
    %16 = vector.load %arg1[%c0_13, %c0_14] : memref<128x128xbf16, #tpu.memory_space<vmem>>, vector<128x128xbf16>
    %17 = arith.truncf %15 : vector<8x128xf32> to vector<8x128xbf16>
    %cst = arith.constant dense<0.000000e+00> : vector<8x128xf32>
    %18 = tpu.matmul %17, %16, %cst {dimension_numbers = #tpu.dot_dimension_numbers<[1], [0], [0], [1], [0, 0, 1, 1], [], []>} : vector<8x128xbf16>, vector<128x128xbf16>, vector<8x128xf32> -> vector<8x128xf32>
    %19 = vector.broadcast %4 : vector<1x128xf32> to vector<8x128xf32>
    %20 = arith.addf %18, %19 : vector<8x128xf32>
    %cst_15 = arith.constant 2.000000e-01 : f32
    %21 = vector.broadcast %cst_15 : f32 to vector<8x128xf32>
    %22 = arith.mulf %21, %20 : vector<8x128xf32>
    %23 = arith.maximumf %20, %22 : vector<8x128xf32>
    %c0_16 = arith.constant 0 : index
    %c0_17 = arith.constant 0 : index
    %24 = vector.load %arg2[%c0_16, %c0_17] : memref<128x256xbf16, #tpu.memory_space<vmem>>, vector<128x256xbf16>
    %25 = arith.truncf %23 : vector<8x128xf32> to vector<8x128xbf16>
    %cst_18 = arith.constant dense<0.000000e+00> : vector<8x256xf32>
    %26 = tpu.matmul %25, %24, %cst_18 {dimension_numbers = #tpu.dot_dimension_numbers<[1], [0], [0], [1], [0, 0, 1, 1], [], []>} : vector<8x128xbf16>, vector<128x256xbf16>, vector<8x256xf32> -> vector<8x256xf32>
    %27 = vector.broadcast %5 : vector<1x256xf32> to vector<8x256xf32>
    %28 = arith.addf %26, %27 : vector<8x256xf32>
    %cst_19 = arith.constant dense<0.000000e+00> : vector<256xf32>
    %29 = vector.multi_reduction <add>, %28, %cst_19 [0] : vector<8x256xf32> to vector<256xf32>
    %30 = vector.shape_cast %29 : vector<256xf32> to vector<1x256xf32>
    %cst_20 = arith.constant 8.000000e+00 : f32
    %31 = vector.broadcast %cst_20 : f32 to vector<1x256xf32>
    %32 = arith.divf %30, %31 : vector<1x256xf32>
    %33 = arith.mulf %28, %28 : vector<8x256xf32>
    %cst_21 = arith.constant dense<0.000000e+00> : vector<256xf32>
    %34 = vector.multi_reduction <add>, %33, %cst_21 [0] : vector<8x256xf32> to vector<256xf32>
    %35 = vector.shape_cast %34 : vector<256xf32> to vector<1x256xf32>
    %cst_22 = arith.constant 8.000000e+00 : f32
    %36 = vector.broadcast %cst_22 : f32 to vector<1x256xf32>
    %37 = arith.divf %35, %36 : vector<1x256xf32>
    %38 = arith.mulf %32, %32 : vector<1x256xf32>
    %39 = arith.subf %37, %38 : vector<1x256xf32>
    %cst_23 = arith.constant 8.000000e-01 : f32
    %40 = vector.broadcast %cst_23 : f32 to vector<1x256xf32>
    %41 = arith.addf %39, %40 : vector<1x256xf32>
    %42 = math.rsqrt %41 : vector<1x256xf32>
    %43 = arith.mulf %6, %42 : vector<1x256xf32>
    %44 = arith.mulf %32, %43 : vector<1x256xf32>
    %45 = arith.subf %7, %44 : vector<1x256xf32>
    %46 = vector.broadcast %43 : vector<1x256xf32> to vector<8x256xf32>
    %47 = arith.mulf %28, %46 : vector<8x256xf32>
    %48 = vector.broadcast %45 : vector<1x256xf32> to vector<8x256xf32>
    %49 = arith.addf %47, %48 : vector<8x256xf32>
    %cst_24 = arith.constant 2.000000e-01 : f32
    %50 = vector.broadcast %cst_24 : f32 to vector<8x256xf32>
    %51 = arith.mulf %50, %49 : vector<8x256xf32>
    %52 = arith.maximumf %49, %51 : vector<8x256xf32>
    %c0_25 = arith.constant 0 : index
    %c0_26 = arith.constant 0 : index
    %53 = vector.load %arg3[%c0_25, %c0_26] : memref<256x512xbf16, #tpu.memory_space<vmem>>, vector<256x512xbf16>
    %54 = arith.truncf %52 : vector<8x256xf32> to vector<8x256xbf16>
    %cst_27 = arith.constant dense<0.000000e+00> : vector<8x512xf32>
    %55 = tpu.matmul %54, %53, %cst_27 {dimension_numbers = #tpu.dot_dimension_numbers<[1], [0], [0], [1], [0, 0, 1, 1], [], []>} : vector<8x256xbf16>, vector<256x512xbf16>, vector<8x512xf32> -> vector<8x512xf32>
    %56 = vector.broadcast %8 : vector<1x512xf32> to vector<8x512xf32>
    %57 = arith.addf %55, %56 : vector<8x512xf32>
    %cst_28 = arith.constant dense<0.000000e+00> : vector<512xf32>
    %58 = vector.multi_reduction <add>, %57, %cst_28 [0] : vector<8x512xf32> to vector<512xf32>
    %59 = vector.shape_cast %58 : vector<512xf32> to vector<1x512xf32>
    %cst_29 = arith.constant 8.000000e+00 : f32
    %60 = vector.broadcast %cst_29 : f32 to vector<1x512xf32>
    %61 = arith.divf %59, %60 : vector<1x512xf32>
    %62 = arith.mulf %57, %57 : vector<8x512xf32>
    %cst_30 = arith.constant dense<0.000000e+00> : vector<512xf32>
    %63 = vector.multi_reduction <add>, %62, %cst_30 [0] : vector<8x512xf32> to vector<512xf32>
    %64 = vector.shape_cast %63 : vector<512xf32> to vector<1x512xf32>
    %cst_31 = arith.constant 8.000000e+00 : f32
    %65 = vector.broadcast %cst_31 : f32 to vector<1x512xf32>
    %66 = arith.divf %64, %65 : vector<1x512xf32>
    %67 = arith.mulf %61, %61 : vector<1x512xf32>
    %68 = arith.subf %66, %67 : vector<1x512xf32>
    %cst_32 = arith.constant 8.000000e-01 : f32
    %69 = vector.broadcast %cst_32 : f32 to vector<1x512xf32>
    %70 = arith.addf %68, %69 : vector<1x512xf32>
    %71 = math.rsqrt %70 : vector<1x512xf32>
    %72 = arith.mulf %9, %71 : vector<1x512xf32>
    %73 = arith.mulf %61, %72 : vector<1x512xf32>
    %74 = arith.subf %10, %73 : vector<1x512xf32>
    %75 = vector.broadcast %72 : vector<1x512xf32> to vector<8x512xf32>
    %76 = arith.mulf %57, %75 : vector<8x512xf32>
    %77 = vector.broadcast %74 : vector<1x512xf32> to vector<8x512xf32>
    %78 = arith.addf %76, %77 : vector<8x512xf32>
    %cst_33 = arith.constant 2.000000e-01 : f32
    %79 = vector.broadcast %cst_33 : f32 to vector<8x512xf32>
    %80 = arith.mulf %79, %78 : vector<8x512xf32>
    %81 = arith.maximumf %78, %80 : vector<8x512xf32>
    %c0_i32_34 = arith.constant 0 : i32
    %82 = tpu.memref_slice %arg11[%c0_i32_34] : memref<2x!tpu.dma_semaphore, #tpu.memory_space<semaphore_mem>> -> memref<1x!tpu.dma_semaphore, #tpu.memory_space<semaphore_mem>>
    %83 = tpu.memref_squeeze %82 : memref<1x!tpu.dma_semaphore, #tpu.memory_space<semaphore_mem>> -> memref<!tpu.dma_semaphore, #tpu.memory_space<semaphore_mem>>
    tpu.wait_dma2 semaphore(%83 : memref<!tpu.dma_semaphore, #tpu.memory_space<semaphore_mem>>) src(%arg4 : memref<512x1024xbf16, #tpu.memory_space<any>>) dst(%arg9 : memref<512x1024xbf16, #tpu.memory_space<vmem>>)
    %c0_35 = arith.constant 0 : index
    %c0_36 = arith.constant 0 : index
    %84 = vector.load %arg9[%c0_35, %c0_36] : memref<512x1024xbf16, #tpu.memory_space<vmem>>, vector<512x1024xbf16>
    %85 = arith.truncf %81 : vector<8x512xf32> to vector<8x512xbf16>
    %cst_37 = arith.constant dense<0.000000e+00> : vector<8x1024xf32>
    %86 = tpu.matmul %85, %84, %cst_37 {dimension_numbers = #tpu.dot_dimension_numbers<[1], [0], [0], [1], [0, 0, 1, 1], [], []>} : vector<8x512xbf16>, vector<512x1024xbf16>, vector<8x1024xf32> -> vector<8x1024xf32>
    %87 = vector.broadcast %11 : vector<1x1024xf32> to vector<8x1024xf32>
    %88 = arith.addf %86, %87 : vector<8x1024xf32>
    %cst_38 = arith.constant dense<0.000000e+00> : vector<1024xf32>
    %89 = vector.multi_reduction <add>, %88, %cst_38 [0] : vector<8x1024xf32> to vector<1024xf32>
    %90 = vector.shape_cast %89 : vector<1024xf32> to vector<1x1024xf32>
    %cst_39 = arith.constant 8.000000e+00 : f32
    %91 = vector.broadcast %cst_39 : f32 to vector<1x1024xf32>
    %92 = arith.divf %90, %91 : vector<1x1024xf32>
    %93 = arith.mulf %88, %88 : vector<8x1024xf32>
    %cst_40 = arith.constant dense<0.000000e+00> : vector<1024xf32>
    %94 = vector.multi_reduction <add>, %93, %cst_40 [0] : vector<8x1024xf32> to vector<1024xf32>
    %95 = vector.shape_cast %94 : vector<1024xf32> to vector<1x1024xf32>
    %cst_41 = arith.constant 8.000000e+00 : f32
    %96 = vector.broadcast %cst_41 : f32 to vector<1x1024xf32>
    %97 = arith.divf %95, %96 : vector<1x1024xf32>
    %98 = arith.mulf %92, %92 : vector<1x1024xf32>
    %99 = arith.subf %97, %98 : vector<1x1024xf32>
    %cst_42 = arith.constant 8.000000e-01 : f32
    %100 = vector.broadcast %cst_42 : f32 to vector<1x1024xf32>
    %101 = arith.addf %99, %100 : vector<1x1024xf32>
    %102 = math.rsqrt %101 : vector<1x1024xf32>
    %103 = arith.mulf %12, %102 : vector<1x1024xf32>
    %104 = arith.mulf %92, %103 : vector<1x1024xf32>
    %105 = arith.subf %13, %104 : vector<1x1024xf32>
    %106 = vector.broadcast %103 : vector<1x1024xf32> to vector<8x1024xf32>
    %107 = arith.mulf %88, %106 : vector<8x1024xf32>
    %108 = vector.broadcast %105 : vector<1x1024xf32> to vector<8x1024xf32>
    %109 = arith.addf %107, %108 : vector<8x1024xf32>
    %cst_43 = arith.constant 2.000000e-01 : f32
    %110 = vector.broadcast %cst_43 : f32 to vector<8x1024xf32>
    %111 = arith.mulf %110, %109 : vector<8x1024xf32>
    %112 = arith.maximumf %109, %111 : vector<8x1024xf32>
    %c1_i32_44 = arith.constant 1 : i32
    %113 = tpu.memref_slice %arg11[%c1_i32_44] : memref<2x!tpu.dma_semaphore, #tpu.memory_space<semaphore_mem>> -> memref<1x!tpu.dma_semaphore, #tpu.memory_space<semaphore_mem>>
    %114 = tpu.memref_squeeze %113 : memref<1x!tpu.dma_semaphore, #tpu.memory_space<semaphore_mem>> -> memref<!tpu.dma_semaphore, #tpu.memory_space<semaphore_mem>>
    tpu.wait_dma2 semaphore(%114 : memref<!tpu.dma_semaphore, #tpu.memory_space<semaphore_mem>>) src(%arg5 : memref<1024x96xbf16, #tpu.memory_space<any>>) dst(%arg10 : memref<1024x96xbf16, #tpu.memory_space<vmem>>)
    %c0_45 = arith.constant 0 : index
    %c0_46 = arith.constant 0 : index
    %115 = vector.load %arg10[%c0_45, %c0_46] : memref<1024x96xbf16, #tpu.memory_space<vmem>>, vector<1024x96xbf16>
    %116 = arith.truncf %112 : vector<8x1024xf32> to vector<8x1024xbf16>
    %cst_47 = arith.constant dense<0.000000e+00> : vector<8x96xf32>
    %117 = tpu.matmul %116, %115, %cst_47 {dimension_numbers = #tpu.dot_dimension_numbers<[1], [0], [0], [1], [0, 0, 1, 1], [], []>} : vector<8x1024xbf16>, vector<1024x96xbf16>, vector<8x96xf32> -> vector<8x96xf32>
    %118 = vector.broadcast %14 : vector<1x96xf32> to vector<8x96xf32>
    %119 = arith.addf %117, %118 : vector<8x96xf32>
    %c0_48 = arith.constant 0 : index
    %c0_49 = arith.constant 0 : index
    %120 = vector.load %arg7[%c0_48, %c0_49] : memref<6x96xf32, #tpu.memory_space<vmem>>, vector<6x96xf32>
    %cst_50 = arith.constant 1.000000e+00 : f32
    %121 = vector.broadcast %cst_50 : f32 to vector<6x96xf32>
    %122 = arith.subf %120, %121 : vector<6x96xf32>
    %cst_51 = arith.constant 1.000000e+30 : f32
    %123 = vector.broadcast %cst_51 : f32 to vector<6x96xf32>
    %124 = arith.mulf %122, %123 : vector<6x96xf32>
    %125 = vector.shape_cast %119 : vector<8x96xf32> to vector<8x1x96xf32>
    %126 = vector.shape_cast %124 : vector<6x96xf32> to vector<1x6x96xf32>
    %127 = vector.broadcast %125 : vector<8x1x96xf32> to vector<8x6x96xf32>
    %128 = vector.broadcast %126 : vector<1x6x96xf32> to vector<8x6x96xf32>
    %129 = arith.addf %127, %128 : vector<8x6x96xf32>
    %cst_52 = arith.constant dense<0xFF800000> : vector<8x6xf32>
    %130 = vector.multi_reduction <maximumf>, %129, %cst_52 [2] : vector<8x6x96xf32> to vector<8x6xf32>
    %131 = vector.shape_cast %130 : vector<8x6xf32> to vector<8x6x1xf32>
    %132 = vector.shape_cast %120 : vector<6x96xf32> to vector<1x6x96xf32>
    %133 = vector.broadcast %131 : vector<8x6x1xf32> to vector<8x6x96xf32>
    %134 = vector.broadcast %132 : vector<1x6x96xf32> to vector<8x6x96xf32>
    %135 = arith.mulf %133, %134 : vector<8x6x96xf32>
    %cst_53 = arith.constant dense<0.000000e+00> : vector<8x96xf32>
    %136 = vector.multi_reduction <add>, %135, %cst_53 [1] : vector<8x6x96xf32> to vector<8x96xf32>
    %137 = arith.subf %119, %136 : vector<8x96xf32>
    %138 = math.exp %137 : vector<8x96xf32>
    %139 = vector.shape_cast %138 : vector<8x96xf32> to vector<8x1x96xf32>
    %140 = vector.shape_cast %120 : vector<6x96xf32> to vector<1x6x96xf32>
    %141 = vector.broadcast %139 : vector<8x1x96xf32> to vector<8x6x96xf32>
    %142 = vector.broadcast %140 : vector<1x6x96xf32> to vector<8x6x96xf32>
    %143 = arith.mulf %141, %142 : vector<8x6x96xf32>
    %cst_54 = arith.constant dense<0.000000e+00> : vector<8x6xf32>
    %144 = vector.multi_reduction <add>, %143, %cst_54 [2] : vector<8x6x96xf32> to vector<8x6xf32>
    %145 = vector.shape_cast %144 : vector<8x6xf32> to vector<8x6x1xf32>
    %146 = tpu.reciprocal %145 {approx = true} : vector<8x6x1xf32> -> vector<8x6x1xf32>
    %147 = vector.shape_cast %120 : vector<6x96xf32> to vector<1x6x96xf32>
    %148 = vector.broadcast %146 : vector<8x6x1xf32> to vector<8x6x96xf32>
    %149 = vector.broadcast %147 : vector<1x6x96xf32> to vector<8x6x96xf32>
    %150 = arith.mulf %148, %149 : vector<8x6x96xf32>
    %cst_55 = arith.constant dense<0.000000e+00> : vector<8x96xf32>
    %151 = vector.multi_reduction <add>, %150, %cst_55 [1] : vector<8x6x96xf32> to vector<8x96xf32>
    %152 = arith.mulf %138, %151 : vector<8x96xf32>
    %c0_56 = arith.constant 0 : index
    %c0_57 = arith.constant 0 : index
    %153 = vector.load %arg8[%c0_56, %c0_57] : memref<8x96xf32, #tpu.memory_space<vmem>>, vector<8x96xf32>
    tpu.vector_store %arg8[%c0_56, %c0_57], %152 {strides = array<i32>} : memref<8x96xf32, #tpu.memory_space<vmem>>, vector<8x96xf32>,
    return
  }
}

</mosaic_0001>

<llo_original>
// kernel: generator_forward.1
$region0: #{generator_forward.1}
  #allocation0 [shape = 'u32[]', space=smem, size = 0x4, offset = 0x4, fixed_abs, tag = 'smem constant byte address 0x4 - core index']
  #allocation1 [shape = 'u32[144,128]{1,0:T(1,128)}', space=vmem, size = 0x12000, scoped, tag = 'internal scratch']
  #allocation2 [shape = 'bf16[512,1024]{1,0:T(16,128)(2,1)}', space=vmem, size = 0x100000, scoped, tag = 'scratch operand']
  #allocation3 [shape = 'bf16[1024,96]{1,0:T(16,128)(2,1)}', space=vmem, size = 0x40000, scoped, tag = 'scratch operand']
  #allocation4 [shape = 's32[2]{0}', space=sflag, size = 0x8, scoped, tag = 'scratch operand']
  #allocation5 [shape = 's32[]', space=sflag, size = 0x4, offset = 0, fixed_abs, tag = 'sflag constant byte address 0x0 - dummy sync flag']
  #allocation7 [shape = 's32[]', space=sflag, size = 0x4, offset = 0, fixed_abs, tag = 'sflag constant byte address 0x0 - dummy sync flag']
  %s0 = inlined_call_operand.vmem [shape: f32[8,128], index: 0, kind: input, shape index: {}]
  %s1 = inlined_call_operand.vmem [shape: bf16[128,128], index: 1, kind: input, shape index: {}]
  %s2 = inlined_call_operand.vmem [shape: bf16[128,256], index: 2, kind: input, shape index: {}]
  %s3 = inlined_call_operand.vmem [shape: bf16[256,512], index: 3, kind: input, shape index: {}]
  %s4 = inlined_call_operand.hbm [shape: bf16[512,1024], index: 4, kind: input, shape index: {}]
  %s5 = inlined_call_operand.vmem [shape: bf16[1024,96], index: 5, kind: input, shape index: {}]
  %s6 = inlined_call_operand.vmem [shape: f32[1,5632], index: 6, kind: input, shape index: {}]
  %s7 = inlined_call_operand.vmem [shape: f32[6,96], index: 7, kind: input, shape index: {}]
  %s8 = inlined_call_operand.vmem [shape: f32[8,96], index: 8, kind: output, shape index: {}]
  %s9 = sld [smem:[#allocation0]]
  $region68: #{generator_forward.1} parent=0
    _
  %s11 = ssub.s32 1, %s9
  %s12 = scalar_select 0, %s11, %s9
  $region1: #{generator_forward.1} parent=0
    #allocation6 [shape = 'u32[9]{0}', space=smem, size = 0x24, scoped, tag = 'DMA stride descriptor']
    // Predicated region
    $region2: #{generator_forward.1} parent=1 // pred_check
      _
    $region3: #{generator_forward.1} parent=1 // pred_check_branch
      %14 = sbr.rel (0) target = $region5
    $region4: #{generator_forward.1} parent=1 // pred_region
      _
    $region5: #{generator_forward.1} parent=1 // pred_fallthru
      _
    // Predicated region
    $region6: #{generator_forward.1} parent=1 // pred_check
      _
    $region7: #{generator_forward.1} parent=1 // pred_check_branch
      %16 = sbr.rel (0) target = $region9
    $region8: #{generator_forward.1} parent=1 // pred_region
      _
    $region9: #{generator_forward.1} parent=1 // pred_fallthru
      _
    // Predicated region
    $region10: #{generator_forward.1} parent=1 // pred_check
      _
    $region11: #{generator_forward.1} parent=1 // pred_check_branch
      %18 = sbr.rel (0) target = $region13
    $region12: #{generator_forward.1} parent=1 // pred_region
      _
    $region13: #{generator_forward.1} parent=1 // pred_fallthru
      _
    // Predicated region
    $region14: #{generator_forward.1} parent=1 // pred_check
      _
    $region15: #{generator_forward.1} parent=1 // pred_check_branch
      %20 = sbr.rel (0) target = $region17
    $region16: #{generator_forward.1} parent=1 // pred_region
      _
    $region17: #{generator_forward.1} parent=1 // pred_fallthru
      _
    // Predicated region
    $region18: #{generator_forward.1} parent=1 // pred_check
      _
    $region19: #{generator_forward.1} parent=1 // pred_check_branch
      %22 = sbr.rel (0) target = $region21
    $region20: #{generator_forward.1} parent=1 // pred_region
      _
    $region21: #{generator_forward.1} parent=1 // pred_fallthru
      _
    // Predicated region
    $region22: #{generator_forward.1} parent=1 // pred_check
      _
    $region23: #{generator_forward.1} parent=1 // pred_check_branch
      %24 = sbr.rel (0) target = $region25
    $region24: #{generator_forward.1} parent=1 // pred_region
      _
    $region25: #{generator_forward.1} parent=1 // pred_fallthru
      _
    %s27 = sshll.u32 1, 14
    %s28 = sxor.u32 4294967295, %s27
    %s30 = sld [smem:[#allocation0]]
    %s31 = sadd.s32 2, %s30
    %s33 = sshll.u32 7, 26
    %s34 = sxor.u32 4294967295, %s33
    %s35 = sand.u32 0, %s34
    %s36 = sshll.u32 %s31, 26
    %s37 = sor.u32 %s35, %s36
    %s38 = sshll.u32 [#allocation2], 4
    %s39 = int_to_ptr.vmem [resolvable:$true] %s38
    %42 = sst [smem:[#allocation6]] 1024
    %s43 = scalar_lea.smem [#allocation6], 1
    %44 = sst [smem:[%s43]] 1024
    %s45 = scalar_lea.smem [#allocation6], 2
    %46 = sst [smem:[%s45]] 8
    %s47 = scalar_lea.smem [#allocation6], 3
    %48 = sst [smem:[%s47]] 64
    %s49 = scalar_lea.smem [#allocation6], 4
    %50 = sst [smem:[%s49]] 128
    %s51 = scalar_lea.smem [#allocation6], 5
    %52 = sst [smem:[%s51]] 2
    %s53 = scalar_lea.smem [#allocation6], 6
    %54 = sst [smem:[%s53]] 512
    %s55 = scalar_lea.smem [#allocation6], 7
    %56 = sst [smem:[%s55]] 64
    %s57 = scalar_lea.smem [#allocation6], 8
    %58 = sst [smem:[%s57]] 4
    %60 = dma.general %s4, 32768, %s39, [#allocation4], [#allocation5], [#allocation6], %s37, 0
    %s61 = scalar_lea.sflag [#allocation4], 1
    %p63 = scmp.lt.u32.totalorder 512, 8
    %p64 = pneg %p63
    // Predicated region
    $region26: #{generator_forward.1} parent=1 // pred_check
      _
    $region27: #{generator_forward.1} parent=1 // pred_check_branch
      %66 = sbr.rel (%p63) target = $region29
    $region28: #{generator_forward.1} parent=1 // pred_region
      %s81 = sand.u32 512, 7
      %p82 = scmp.eq.s32.totalorder %s81, 0
      // Predicated region
      $region41: #{generator_forward.1} parent=28 // pred_check
        %p83 = pneg %p82
      $region42: #{generator_forward.1} parent=28 // pred_check_branch
        %85 = sbr.rel (%p83) target = $region44
      $region43: #{generator_forward.1} parent=28 // pred_region
        loop: start=0, step=1, limit=1
        $region45: #{generator_forward.1} parent=43 // loop_pre_header
          _
        $region46: #{generator_forward.1} parent=43 // loop_header
          %s87 = sphi 0, %s91
          %p88 = scmp.ge.s32.totalorder %s87, 1
          %s92 = sphi %s5, %s5
          %s93 = sphi [#allocation3], [#allocation3]
        $region47: #{generator_forward.1} parent=43 // loop_header_branch
          %90 = sbr.rel (%p88) target = $region51
        $region48: #{generator_forward.1} parent=43 // loop_body
          %v94 = vld [vmem:[%s92] sm:$0xff]
          %95 = vst [vmem:[%s93] sm:$0xff] %v94
          %v96 = vld [vmem:[%s92 + $0x8] sm:$0xff]
          %97 = vst [vmem:[%s93 + $0x8] sm:$0xff] %v96
          %v98 = vld [vmem:[%s92 + $0x10] sm:$0xff]
          %99 = vst [vmem:[%s93 + $0x10] sm:$0xff] %v98
          %v100 = vld [vmem:[%s92 + $0x18] sm:$0xff]
          %101 = vst [vmem:[%s93 + $0x18] sm:$0xff] %v100
          %v102 = vld [vmem:[%s92 + $0x20] sm:$0xff]
          %103 = vst [vmem:[%s93 + $0x20] sm:$0xff] %v102
          %v104 = vld [vmem:[%s92 + $0x28] sm:$0xff]
          %105 = vst [vmem:[%s93 + $0x28] sm:$0xff] %v104
          %v106 = vld [vmem:[%s92 + $0x30] sm:$0xff]
          %107 = vst [vmem:[%s93 + $0x30] sm:$0xff] %v106
          %v108 = vld [vmem:[%s92 + $0x38] sm:$0xff]
          %109 = vst [vmem:[%s93 + $0x38] sm:$0xff] %v108
          %v110 = vld [vmem:[%s92 + $0x40] sm:$0xff]
          %111 = vst [vmem:[%s93 + $0x40] sm:$0xff] %v110
          %v112 = vld [vmem:[%s92 + $0x48] sm:$0xff]
          %113 = vst [vmem:[%s93 + $0x48] sm:$0xff] %v112
          %v114 = vld [vmem:[%s92 + $0x50] sm:$0xff]
          %115 = vst [vmem:[%s93 + $0x50] sm:$0xff] %v114
          %v116 = vld [vmem:[%s92 + $0x58] sm:$0xff]
          %117 = vst [vmem:[%s93 + $0x58] sm:$0xff] %v116
          %v118 = vld [vmem:[%s92 + $0x60] sm:$0xff]
          %119 = vst [vmem:[%s93 + $0x60] sm:$0xff] %v118
          %v120 = vld [vmem:[%s92 + $0x68] sm:$0xff]
          %121 = vst [vmem:[%s93 + $0x68] sm:$0xff] %v120
          %v122 = vld [vmem:[%s92 + $0x70] sm:$0xff]
          %123 = vst [vmem:[%s93 + $0x70] sm:$0xff] %v122
          %v124 = vld [vmem:[%s92 + $0x78] sm:$0xff]
          %125 = vst [vmem:[%s93 + $0x78] sm:$0xff] %v124
          %v126 = vld [vmem:[%s92 + $0x80] sm:$0xff]
          %127 = vst [vmem:[%s93 + $0x80] sm:$0xff] %v126
          %v128 = vld [vmem:[%s92 + $0x88] sm:$0xff]
          %129 = vst [vmem:[%s93 + $0x88] sm:$0xff] %v128
          %v130 = vld [vmem:[%s92 + $0x90] sm:$0xff]
          %131 = vst [vmem:[%s93 + $0x90] sm:$0xff] %v130
          %v132 = vld [vmem:[%s92 + $0x98] sm:$0xff]
          %133 = vst [vmem:[%s93 + $0x98] sm:$0xff] %v132
          %v134 = vld [vmem:[%s92 + $0xa0] sm:$0xff]
          %135 = vst [vmem:[%s93 + $0xa0] sm:$0xff] %v134
          %v136 = vld [vmem:[%s92 + $0xa8] sm:$0xff]
          %137 = vst [vmem:[%s93 + $0xa8] sm:$0xff] %v136
          %v138 = vld [vmem:[%s92 + $0xb0] sm:$0xff]
          %139 = vst [vmem:[%s93 + $0xb0] sm:$0xff] %v138
          %v140 = vld [vmem:[%s92 + $0xb8] sm:$0xff]
          %141 = vst [vmem:[%s93 + $0xb8] sm:$0xff] %v140
          %v142 = vld [vmem:[%s92 + $0xc0] sm:$0xff]
          %143 = vst [vmem:[%s93 + $0xc0] sm:$0xff] %v142
          %v144 = vld [vmem:[%s92 + $0xc8] sm:$0xff]
          %145 = vst [vmem:[%s93 + $0xc8] sm:$0xff] %v144
          %v146 = vld [vmem:[%s92 + $0xd0] sm:$0xff]
          %147 = vst [vmem:[%s93 + $0xd0] sm:$0xff] %v146
          %v148 = vld [vmem:[%s92 + $0xd8] sm:$0xff]
          %149 = vst [vmem:[%s93 + $0xd8] sm:$0xff] %v148
          %v150 = vld [vmem:[%s92 + $0xe0] sm:$0xff]
          %151 = vst [vmem:[%s93 + $0xe0] sm:$0xff] %v150
          %v152 = vld [vmem:[%s92 + $0xe8] sm:$0xff]
          %153 = vst [vmem:[%s93 + $0xe8] sm:$0xff] %v152
          %v154 = vld [vmem:[%s92 + $0xf0] sm:$0xff]
          %155 = vst [vmem:[%s93 + $0xf0] sm:$0xff] %v154
          %v156 = vld [vmem:[%s92 + $0xf8] sm:$0xff]
          %157 = vst [vmem:[%s93 + $0xf8] sm:$0xff] %v156
          %v158 = vld [vmem:[%s92 + $0x100] sm:$0xff]
          %159 = vst [vmem:[%s93 + $0x100] sm:$0xff] %v158
          %v160 = vld [vmem:[%s92 + $0x108] sm:$0xff]
          %161 = vst [vmem:[%s93 + $0x108] sm:$0xff] %v160
          %v162 = vld [vmem:[%s92 + $0x110] sm:$0xff]
          %163 = vst [vmem:[%s93 + $0x110] sm:$0xff] %v162
          %v164 = vld [vmem:[%s92 + $0x118] sm:$0xff]
          %165 = vst [vmem:[%s93 + $0x118] sm:$0xff] %v164
          %v166 = vld [vmem:[%s92 + $0x120] sm:$0xff]
          %167 = vst [vmem:[%s93 + $0x120] sm:$0xff] %v166
          %v168 = vld [vmem:[%s92 + $0x128] sm:$0xff]
          %169 = vst [vmem:[%s93 + $0x128] sm:$0xff] %v168
          %v170 = vld [vmem:[%s92 + $0x130] sm:$0xff]
          %171 = vst [vmem:[%s93 + $0x130] sm:$0xff] %v170
          %v172 = vld [vmem:[%s92 + $0x138] sm:$0xff]
          %173 = vst [vmem:[%s93 + $0x138] sm:$0xff] %v172
          %v174 = vld [vmem:[%s92 + $0x140] sm:$0xff]
          %175 = vst [vmem:[%s93 + $0x140] sm:$0xff] %v174
          %v176 = vld [vmem:[%s92 + $0x148] sm:$0xff]
          %177 = vst [vmem:[%s93 + $0x148] sm:$0xff] %v176
          %v178 = vld [vmem:[%s92 + $0x150] sm:$0xff]
          %179 = vst [vmem:[%s93 + $0x150] sm:$0xff] %v178
          %v180 = vld [vmem:[%s92 + $0x158] sm:$0xff]
          %181 = vst [vmem:[%s93 + $0x158] sm:$0xff] %v180
          %v182 = vld [vmem:[%s92 + $0x160] sm:$0xff]
          %183 = vst [vmem:[%s93 + $0x160] sm:$0xff] %v182
          %v184 = vld [vmem:[%s92 + $0x168] sm:$0xff]
          %185 = vst [vmem:[%s93 + $0x168] sm:$0xff] %v184
          %v186 = vld [vmem:[%s92 + $0x170] sm:$0xff]
          %187 = vst [vmem:[%s93 + $0x170] sm:$0xff] %v186
          %v188 = vld [vmem:[%s92 + $0x178] sm:$0xff]
          %189 = vst [vmem:[%s93 + $0x178] sm:$0xff] %v188
          %v190 = vld [vmem:[%s92 + $0x180] sm:$0xff]
          %191 = vst [vmem:[%s93 + $0x180] sm:$0xff] %v190
          %v192 = vld [vmem:[%s92 + $0x188] sm:$0xff]
          %193 = vst [vmem:[%s93 + $0x188] sm:$0xff] %v192
          %v194 = vld [vmem:[%s92 + $0x190] sm:$0xff]
          %195 = vst [vmem:[%s93 + $0x190] sm:$0xff] %v194
          %v196 = vld [vmem:[%s92 + $0x198] sm:$0xff]
          %197 = vst [vmem:[%s93 + $0x198] sm:$0xff] %v196
          %v198 = vld [vmem:[%s92 + $0x1a0] sm:$0xff]
          %199 = vst [vmem:[%s93 + $0x1a0] sm:$0xff] %v198
          %v200 = vld [vmem:[%s92 + $0x1a8] sm:$0xff]
          %201 = vst [vmem:[%s93 + $0x1a8] sm:$0xff] %v200
          %v202 = vld [vmem:[%s92 + $0x1b0] sm:$0xff]
          %203 = vst [vmem:[%s93 + $0x1b0] sm:$0xff] %v202
          %v204 = vld [vmem:[%s92 + $0x1b8] sm:$0xff]
          %205 = vst [vmem:[%s93 + $0x1b8] sm:$0xff] %v204
          %v206 = vld [vmem:[%s92 + $0x1c0] sm:$0xff]
          %207 = vst [vmem:[%s93 + $0x1c0] sm:$0xff] %v206
          %v208 = vld [vmem:[%s92 + $0x1c8] sm:$0xff]
          %209 = vst [vmem:[%s93 + $0x1c8] sm:$0xff] %v208
          %v210 = vld [vmem:[%s92 + $0x1d0] sm:$0xff]
          %211 = vst [vmem:[%s93 + $0x1d0] sm:$0xff] %v210
          %v212 = vld [vmem:[%s92 + $0x1d8] sm:$0xff]
          %213 = vst [vmem:[%s93 + $0x1d8] sm:$0xff] %v212
          %v214 = vld [vmem:[%s92 + $0x1e0] sm:$0xff]
          %215 = vst [vmem:[%s93 + $0x1e0] sm:$0xff] %v214
          %v216 = vld [vmem:[%s92 + $0x1e8] sm:$0xff]
          %217 = vst [vmem:[%s93 + $0x1e8] sm:$0xff] %v216
          %v218 = vld [vmem:[%s92 + $0x1f0] sm:$0xff]
          %219 = vst [vmem:[%s93 + $0x1f0] sm:$0xff] %v218
          %v220 = vld [vmem:[%s92 + $0x1f8] sm:$0xff]
          %221 = vst [vmem:[%s93 + $0x1f8] sm:$0xff] %v220
        $region49: #{generator_forward.1} parent=43 // loop_footer
          %s91 = sadd.s32 1, %s87
        $region50: #{generator_forward.1} parent=43 // loop_footer_branch
          %86 = sbr.rel target = $region46
        $region51: #{generator_forward.1} parent=43 // loop_exit
          _
      $region44: #{generator_forward.1} parent=28 // pred_fallthru
        _
      %p222 = pneg %p82
      // Predicated region
      $region52: #{generator_forward.1} parent=28 // pred_check
        _
      $region53: #{generator_forward.1} parent=28 // pred_check_branch
        %224 = sbr.rel (%p82) target = $region55
      $region54: #{generator_forward.1} parent=28 // pred_region
        %s225 = sand.u32 512, 7
      $region55: #{generator_forward.1} parent=28 // pred_fallthru
        _
    $region29: #{generator_forward.1} parent=1 // pred_fallthru
      _
    // Predicated region
    $region30: #{generator_forward.1} parent=1 // pred_check
      %p67 = pneg %p63
    $region31: #{generator_forward.1} parent=1 // pred_check_branch
      %69 = sbr.rel (%p67) target = $region33
    $region32: #{generator_forward.1} parent=1 // pred_region
      %s70 = sshllo.u32 0, 512
      loop: start=0, step=1, limit=1
      $region34: #{generator_forward.1} parent=32 // loop_pre_header
        _
      $region35: #{generator_forward.1} parent=32 // loop_header
        %s72 = sphi 0, %s76
        %p73 = scmp.ge.s32.totalorder %s72, 1
        %s77 = sphi %s5, %s5
        %s78 = sphi [#allocation3], [#allocation3]
      $region36: #{generator_forward.1} parent=32 // loop_header_branch
        %75 = sbr.rel (%p73) target = $region40
      $region37: #{generator_forward.1} parent=32 // loop_body
        %v79 = vld [vmem:[%s77] sm:%s70]
        %80 = vst [vmem:[%s78] sm:%s70] %v79
      $region38: #{generator_forward.1} parent=32 // loop_footer
        %s76 = sadd.s32 1, %s72
      $region39: #{generator_forward.1} parent=32 // loop_footer_branch
        %71 = sbr.rel target = $region35
      $region40: #{generator_forward.1} parent=32 // loop_exit
        _
    $region33: #{generator_forward.1} parent=1 // pred_fallthru
      _
    // Predicated region
    $region56: #{generator_forward.1} parent=1 // pred_check
      _
    $region57: #{generator_forward.1} parent=1 // pred_check_branch
      %228 = sbr.rel (0) target = $region59
    $region58: #{generator_forward.1} parent=1 // pred_region
      %229 = vsyncadd %s61, 8192
    $region59: #{generator_forward.1} parent=1 // pred_fallthru
      _
    %v230 = vld [vmem:[%s6] sm:$0x1]
    %v231 = vld [vmem:[%s6 + $0x1] sm:$0x3]
    %v232 = vld [vmem:[%s6 + $0x3] sm:$0x3]
    %v233 = vld [vmem:[%s6 + $0x5] sm:$0x3]
    %v234 = vld [vmem:[%s6 + $0x7] sm:$0xf]
    %v235 = vld [vmem:[%s6 + $0xb] sm:$0xf]
    %v236 = vld [vmem:[%s6 + $0xf] sm:$0xf]
    %v237 = vld [vmem:[%s6 + $0x13] sm:$0xff]
    %v238 = vld [vmem:[%s6 + $0x1b] sm:$0xff]
    %v239 = vld [vmem:[%s6 + $0x23] sm:$0xff]
    %v240 = vld [vmem:[%s6 + $0x2b] sm:$0x1]
    %v241 = vld [vmem:[%s0] sm:$0xff]
    %v242 = vld [vmem:[%s1] sm:$0xf]
    %v243 = vld [vmem:[%s1 + $0x4] sm:$0xf]
    %v244 = vld [vmem:[%s1 + $0x8] sm:$0xf]
    %v245 = vld [vmem:[%s1 + $0xc] sm:$0xf]
    %v246 = vld [vmem:[%s1 + $0x10] sm:$0xf]
    %v247 = vld [vmem:[%s1 + $0x14] sm:$0xf]
    %v248 = vld [vmem:[%s1 + $0x18] sm:$0xf]
    %v249 = vld [vmem:[%s1 + $0x1c] sm:$0xf]
    %v250 = vld [vmem:[%s1 + $0x20] sm:$0xf]
    %v251 = vld [vmem:[%s1 + $0x24] sm:$0xf]
    %v252 = vld [vmem:[%s1 + $0x28] sm:$0xf]
    %v253 = vld [vmem:[%s1 + $0x2c] sm:$0xf]
    %v254 = vld [vmem:[%s1 + $0x30] sm:$0xf]
    %v255 = vld [vmem:[%s1 + $0x34] sm:$0xf]
    %v256 = vld [vmem:[%s1 + $0x38] sm:$0xf]
    %v257 = vld [vmem:[%s1 + $0x3c] sm:$0xf]
    %v258 = vpack.c.bf16 %v241, %v241
    %v260 = vlaneseq
    %v261 = vshrl.u32 %v260, 7
    %v262 = vsub.s32 0, %v261
    %v263 = vrot.slane %v230, %v262
    %v281 = vunpack.c.l.b16 %v242
    %v282 = vunpack.c.l.b16 %v243
    %v283 = vunpack.c.l.b16 %v244
    %v284 = vunpack.c.l.b16 %v245
    %v285 = vunpack.c.l.b16 %v246
    %v286 = vunpack.c.l.b16 %v247
    %v287 = vunpack.c.l.b16 %v248
    %v288 = vunpack.c.l.b16 %v249
    %v289 = vunpack.c.l.b16 %v250
    %v290 = vunpack.c.l.b16 %v251
    %v291 = vunpack.c.l.b16 %v252
    %v292 = vunpack.c.l.b16 %v253
    %v293 = vunpack.c.l.b16 %v254
    %v294 = vunpack.c.l.b16 %v255
    %v295 = vunpack.c.l.b16 %v256
    %v296 = vunpack.c.l.b16 %v257
    %v297 = vpack.c.b16 %v282, %v281
    %v298 = vpack.c.b16 %v284, %v283
    %v299 = vpack.c.b16 %v286, %v285
    %v300 = vpack.c.b16 %v288, %v287
    %v301 = vpack.c.b16 %v290, %v289
    %v302 = vpack.c.b16 %v292, %v291
    %v303 = vpack.c.b16 %v294, %v293
    %v304 = vpack.c.b16 %v296, %v295
    %313 = vmatprep.subr.bf16.mxu0 0
    %314 = vmatpush1.bf16.msra.mxu0 %v297
    %315 = vmatprep.subr.bf16.mxu0 0
    %316 = vmatpush1.bf16.msra.mxu0 %v298
    %317 = vmatprep.subr.bf16.mxu0 0
    %318 = vmatpush1.bf16.msra.mxu0 %v299
    %319 = vmatprep.subr.bf16.mxu0 0
    %320 = vmatpush1.bf16.msra.mxu0 %v300
    %321 = vmatprep.subr.bf16.mxu0 0
    %322 = vmatpush1.bf16.msra.mxu0 %v301
    %323 = vmatprep.subr.bf16.mxu0 0
    %324 = vmatpush1.bf16.msra.mxu0 %v302
    %325 = vmatprep.subr.bf16.mxu0 0
    %326 = vmatpush1.bf16.msra.mxu0 %v303
    %327 = vmatprep.subr.bf16.mxu0 0
    %328 = vmatpush1.bf16.msra.mxu0 %v304
    %329 = vmatprep.subr.bf16.mxu0 0
    %330 = vmatpush1.bf16.msra.mxu0 0
    %331 = vmatprep.subr.bf16.mxu0 0
    %332 = vmatpush1.bf16.msra.mxu0 0
    %333 = vmatprep.subr.bf16.mxu0 0
    %334 = vmatpush1.bf16.msra.mxu0 0
    %335 = vmatprep.subr.bf16.mxu0 0
    %336 = vmatpush1.bf16.msra.mxu0 0
    %337 = vmatprep.subr.bf16.mxu0 0
    %338 = vmatpush1.bf16.msra.mxu0 0
    %339 = vmatprep.subr.bf16.mxu0 0
    %340 = vmatpush1.bf16.msra.mxu0 0
    %341 = vmatprep.subr.bf16.mxu0 0
    %342 = vmatpush1.bf16.msra.mxu0 0
    %343 = vmatprep.subr.bf16.mxu0 0
    %344 = vmatpush1.bf16.msra.mxu0 0
    %345 = vmatprep.mubr.bf16.mxu0 0
    %346 = vmatmul.mubr.bf16.gmra.mrb[0].mxu0 %v258
    %v347 = vpop.f32.mrb[0].mxu0
    %v348 = vadd.f32 %v263, %v347
    %v349 = vpop.f32.mrb[0].mxu0
    %v350 = vpop.f32.mrb[0].mxu0
    %v351 = vpop.f32.mrb[0].mxu0
    %352 = vdwg.mxu0
    %v353 = vmul.f32 %v348, 0.2
    %v354 = vmax.f32 %v348, %v353
    %v355 = vld [vmem:[%s2] sm:$0xff]
    %v356 = vld [vmem:[%s2 + $0x8] sm:$0xff]
    %v357 = vld [vmem:[%s2 + $0x10] sm:$0xff]
    %v358 = vld [vmem:[%s2 + $0x18] sm:$0xff]
    %v359 = vld [vmem:[%s2 + $0x20] sm:$0xff]
    %v360 = vld [vmem:[%s2 + $0x28] sm:$0xff]
    %v361 = vld [vmem:[%s2 + $0x30] sm:$0xff]
    %v362 = vld [vmem:[%s2 + $0x38] sm:$0xff]
    %v363 = vld [vmem:[%s2 + $0x40] sm:$0xff]
    %v364 = vld [vmem:[%s2 + $0x48] sm:$0xff]
    %v365 = vld [vmem:[%s2 + $0x50] sm:$0xff]
    %v366 = vld [vmem:[%s2 + $0x58] sm:$0xff]
    %v367 = vld [vmem:[%s2 + $0x60] sm:$0xff]
    %v368 = vld [vmem:[%s2 + $0x68] sm:$0xff]
    %v369 = vld [vmem:[%s2 + $0x70] sm:$0xff]
    %v370 = vld [vmem:[%s2 + $0x78] sm:$0xff]
    %v371 = vpack.c.bf16 %v354, %v354
    %v373 = vlaneseq
    %v374 = vshrl.u32 %v373, 7
    %v375 = vsub.s32 0, %v374
    %v376 = vrot.slane %v231, %v375
    %v377 = vlaneseq
    %v378 = vshrl.u32 %v377, 7
    %v379 = vsub.s32 1, %v378
    %v380 = vrot.slane %v231, %v379
    %v399 = vunpack.c.l.b16 %v355
    %v400 = vunpack.c.h.b16 %v355
    %v401 = vunpack.c.l.b16 %v356
    %v402 = vunpack.c.h.b16 %v356
    %v403 = vunpack.c.l.b16 %v357
    %v404 = vunpack.c.h.b16 %v357
    %v405 = vunpack.c.l.b16 %v358
    %v406 = vunpack.c.h.b16 %v358
    %v407 = vunpack.c.l.b16 %v359
    %v408 = vunpack.c.h.b16 %v359
    %v409 = vunpack.c.l.b16 %v360
    %v410 = vunpack.c.h.b16 %v360
    %v411 = vunpack.c.l.b16 %v361
    %v412 = vunpack.c.h.b16 %v361
    %v413 = vunpack.c.l.b16 %v362
    %v414 = vunpack.c.h.b16 %v362
    %v415 = vunpack.c.l.b16 %v363
    %v416 = vunpack.c.h.b16 %v363
    %v417 = vunpack.c.l.b16 %v364
    %v418 = vunpack.c.h.b16 %v364
    %v419 = vunpack.c.l.b16 %v365
    %v420 = vunpack.c.h.b16 %v365
    %v421 = vunpack.c.l.b16 %v366
    %v422 = vunpack.c.h.b16 %v366
    %v423 = vunpack.c.l.b16 %v367
    %v424 = vunpack.c.h.b16 %v367
    %v425 = vunpack.c.l.b16 %v368
    %v426 = vunpack.c.h.b16 %v368
    %v427 = vunpack.c.l.b16 %v369
    %v428 = vunpack.c.h.b16 %v369
    %v429 = vunpack.c.l.b16 %v370
    %v430 = vunpack.c.h.b16 %v370
    %v431 = vpack.c.b16 %v401, %v399
    %v432 = vpack.c.b16 %v402, %v400
    %v433 = vpack.c.b16 %v405, %v403
    %v434 = vpack.c.b16 %v406, %v404
    %v435 = vpack.c.b16 %v409, %v407
    %v436 = vpack.c.b16 %v410, %v408
    %v437 = vpack.c.b16 %v413, %v411
    %v438 = vpack.c.b16 %v414, %v412
    %v439 = vpack.c.b16 %v417, %v415
    %v440 = vpack.c.b16 %v418, %v416
    %v441 = vpack.c.b16 %v421, %v419
    %v442 = vpack.c.b16 %v422, %v420
    %v443 = vpack.c.b16 %v425, %v423
    %v444 = vpack.c.b16 %v426, %v424
    %v445 = vpack.c.b16 %v429, %v427
    %v446 = vpack.c.b16 %v430, %v428
    %463 = vmatprep.subr.bf16.mxu0 %v432
    %464 = vmatpush1.bf16.msra.mxu0 %v431
    %465 = vmatprep.subr.bf16.mxu0 %v434
    %466 = vmatpush1.bf16.msra.mxu0 %v433
    %467 = vmatprep.subr.bf16.mxu0 %v436
    %468 = vmatpush1.bf16.msra.mxu0 %v435
    %469 = vmatprep.subr.bf16.mxu0 %v438
    %470 = vmatpush1.bf16.msra.mxu0 %v437
    %471 = vmatprep.subr.bf16.mxu0 %v440
    %472 = vmatpush1.bf16.msra.mxu0 %v439
    %473 = vmatprep.subr.bf16.mxu0 %v442
    %474 = vmatpush1.bf16.msra.mxu0 %v441
    %475 = vmatprep.subr.bf16.mxu0 %v444
    %476 = vmatpush1.bf16.msra.mxu0 %v443
    %477 = vmatprep.subr.bf16.mxu0 %v446
    %478 = vmatpush1.bf16.msra.mxu0 %v445
    %479 = vmatprep.subr.bf16.mxu0 0
    %480 = vmatpush1.bf16.msra.mxu0 0
    %481 = vmatprep.subr.bf16.mxu0 0
    %482 = vmatpush1.bf16.msra.mxu0 0
    %483 = vmatprep.subr.bf16.mxu0 0
    %484 = vmatpush1.bf16.msra.mxu0 0
    %485 = vmatprep.subr.bf16.mxu0 0
    %486 = vmatpush1.bf16.msra.mxu0 0
    %487 = vmatprep.subr.bf16.mxu0 0
    %488 = vmatpush1.bf16.msra.mxu0 0
    %489 = vmatprep.subr.bf16.mxu0 0
    %490 = vmatpush1.bf16.msra.mxu0 0
    %491 = vmatprep.subr.bf16.mxu0 0
    %492 = vmatpush1.bf16.msra.mxu0 0
    %493 = vmatprep.subr.bf16.mxu0 0
    %494 = vmatpush1.bf16.msra.mxu0 0
    %495 = vmatprep.mubr.bf16.mxu0 0
    %496 = vmatmul.mubr.bf16.gmra.mrb[0].mxu0 %v371
    %v497 = vpop.f32.mrb[0].mxu0
    %v498 = vadd.f32 %v376, %v497
    %v499 = vpop.f32.mrb[0].mxu0
    %v500 = vadd.f32 %v380, %v499
    %v501 = vpop.f32.mrb[0].mxu0
    %v502 = vpop.f32.mrb[0].mxu0
    %503 = vdwg.mxu0
    %v504 = vrot.slane %v498, 4
    %v505 = vadd.f32 %v498, %v504
    %v506 = vrot.slane %v505, 2
    %v507 = vadd.f32 %v505, %v506
    %v508 = vrot.slane %v507, 1
    %v509 = vadd.f32 %v507, %v508
    %v510 = vrot.slane %v500, 4
    %v511 = vadd.f32 %v500, %v510
    %v512 = vrot.slane %v511, 2
    %v513 = vadd.f32 %v511, %v512
    %v514 = vrot.slane %v513, 1
    %v515 = vadd.f32 %v513, %v514
    %v516 = vrcp.pop 8.0
    %v517 = vmul.f32 %v509, %v516
    %v518 = vmul.f32 %v515, %v516
    %v519 = vmul.f32 %v498, %v498
    %v520 = vmul.f32 %v500, %v500
    %v521 = vrot.slane %v519, 4
    %v522 = vadd.f32 %v519, %v521
    %v523 = vrot.slane %v522, 2
    %v524 = vadd.f32 %v522, %v523
    %v525 = vrot.slane %v524, 1
    %v526 = vadd.f32 %v524, %v525
    %v527 = vrot.slane %v520, 4
    %v528 = vadd.f32 %v520, %v527
    %v529 = vrot.slane %v528, 2
    %v530 = vadd.f32 %v528, %v529
    %v531 = vrot.slane %v530, 1
    %v532 = vadd.f32 %v530, %v531
    %v533 = vmul.f32 %v526, %v516
    %v534 = vmul.f32 %v532, %v516
    %v535 = vmul.f32 %v517, %v517
    %v536 = vmul.f32 %v518, %v518
    %v537 = vsub.f32 %v533, %v535
    %v538 = vsub.f32 %v534, %v536
    %v539 = vadd.f32 %v537, 0.8
    %v540 = vadd.f32 %v538, 0.8
    %v541 = vrsqrt.pop %v539
    %v542 = vrsqrt.pop %v540
    %v545 = vcombine.low %v541, %v542
    %v547 = vunpack.c.l.s4 1966171168
    %v548 = vunpack.c.0.s8 %v547
    %v549 = vlaneseq
    %v550 = vshrl.u32 %v549, 7
    %v551 = vsub.s32 %v548, %v550
    %v552 = vrot.slane %v545, %v551
    %v554 = vunpack.c.l.s4 1966171168
    %v555 = vunpack.c.0.s8 %v554
    %v556 = vlaneseq
    %v557 = vshrl.u32 %v556, 7
    %v558 = vsub.s32 %v555, %v557
    %v559 = vrot.slane %v552, %v558
    %v561 = vmul.f32 %v232, %v559
    %v563 = vlaneseq
    %v564 = vshrl.u32 %v563, 7
    %v565 = vsub.s32 0, %v564
    %v566 = vrot.slane %v561, %v565
    %v567 = vlaneseq
    %v568 = vshrl.u32 %v567, 7
    %v569 = vsub.s32 1, %v568
    %v570 = vrot.slane %v561, %v569
    %v573 = vmul.f32 %v517, %v566
    %v574 = vmul.f32 %v518, %v570
    %v577 = vcombine.low %v573, %v574
    %v579 = vunpack.c.l.s4 1966171168
    %v580 = vunpack.c.0.s8 %v579
    %v581 = vlaneseq
    %v582 = vshrl.u32 %v581, 7
    %v583 = vsub.s32 %v580, %v582
    %v584 = vrot.slane %v577, %v583
    %v586 = vunpack.c.l.s4 1966171168
    %v587 = vunpack.c.0.s8 %v586
    %v588 = vlaneseq
    %v589 = vshrl.u32 %v588, 7
    %v590 = vsub.s32 %v587, %v589
    %v591 = vrot.slane %v584, %v590
    %v593 = vsub.f32 %v233, %v591
    %v594 = vmul.f32 %v498, %v566
    %v595 = vmul.f32 %v500, %v570
    %v597 = vlaneseq
    %v598 = vshrl.u32 %v597, 7
    %v599 = vsub.s32 0, %v598
    %v600 = vrot.slane %v593, %v599
    %v601 = vlaneseq
    %v602 = vshrl.u32 %v601, 7
    %v603 = vsub.s32 1, %v602
    %v604 = vrot.slane %v593, %v603
    %v607 = vadd.f32 %v594, %v600
    %v608 = vadd.f32 %v595, %v604
    %v609 = vmul.f32 %v607, 0.2
    %v610 = vmul.f32 %v608, 0.2
    %v611 = vmax.f32 %v607, %v609
    %v612 = vmax.f32 %v608, %v610
    %v613 = vld [vmem:[%s3] sm:$0xff]
    %v614 = vld [vmem:[%s3 + $0x8] sm:$0xff]
    %v615 = vld [vmem:[%s3 + $0x10] sm:$0xff]
    %v616 = vld [vmem:[%s3 + $0x18] sm:$0xff]
    %v617 = vld [vmem:[%s3 + $0x20] sm:$0xff]
    %v618 = vld [vmem:[%s3 + $0x28] sm:$0xff]
    %v619 = vld [vmem:[%s3 + $0x30] sm:$0xff]
    %v620 = vld [vmem:[%s3 + $0x38] sm:$0xff]
    %v621 = vld [vmem:[%s3 + $0x40] sm:$0xff]
    %v622 = vld [vmem:[%s3 + $0x48] sm:$0xff]
    %v623 = vld [vmem:[%s3 + $0x50] sm:$0xff]
    %v624 = vld [vmem:[%s3 + $0x58] sm:$0xff]
    %v625 = vld [vmem:[%s3 + $0x60] sm:$0xff]
    %v626 = vld [vmem:[%s3 + $0x68] sm:$0xff]
    %v627 = vld [vmem:[%s3 + $0x70] sm:$0xff]
    %v628 = vld [vmem:[%s3 + $0x78] sm:$0xff]
    %v629 = vld [vmem:[%s3 + $0x80] sm:$0xff]
    %v630 = vld [vmem:[%s3 + $0x88] sm:$0xff]
    %v631 = vld [vmem:[%s3 + $0x90] sm:$0xff]
    %v632 = vld [vmem:[%s3 + $0x98] sm:$0xff]
    %v633 = vld [vmem:[%s3 + $0xa0] sm:$0xff]
    %v634 = vld [vmem:[%s3 + $0xa8] sm:$0xff]
    %v635 = vld [vmem:[%s3 + $0xb0] sm:$0xff]
    %v636 = vld [vmem:[%s3 + $0xb8] sm:$0xff]
    %v637 = vld [vmem:[%s3 + $0xc0] sm:$0xff]
    %v638 = vld [vmem:[%s3 + $0xc8] sm:$0xff]
    %v639 = vld [vmem:[%s3 + $0xd0] sm:$0xff]
    %v640 = vld [vmem:[%s3 + $0xd8] sm:$0xff]
    %v641 = vld [vmem:[%s3 + $0xe0] sm:$0xff]
    %v642 = vld [vmem:[%s3 + $0xe8] sm:$0xff]
    %v643 = vld [vmem:[%s3 + $0xf0] sm:$0xff]
    %v644 = vld [vmem:[%s3 + $0xf8] sm:$0xff]
    %v645 = vld [vmem:[%s3 + $0x100] sm:$0xff]
    %v646 = vld [vmem:[%s3 + $0x108] sm:$0xff]
    %v647 = vld [vmem:[%s3 + $0x110] sm:$0xff]
    %v648 = vld [vmem:[%s3 + $0x118] sm:$0xff]
    %v649 = vld [vmem:[%s3 + $0x120] sm:$0xff]
    %v650 = vld [vmem:[%s3 + $0x128] sm:$0xff]
    %v651 = vld [vmem:[%s3 + $0x130] sm:$0xff]
    %v652 = vld [vmem:[%s3 + $0x138] sm:$0xff]
    %v653 = vld [vmem:[%s3 + $0x140] sm:$0xff]
    %v654 = vld [vmem:[%s3 + $0x148] sm:$0xff]
    %v655 = vld [vmem:[%s3 + $0x150] sm:$0xff]
    %v656 = vld [vmem:[%s3 + $0x158] sm:$0xff]
    %v657 = vld [vmem:[%s3 + $0x160] sm:$0xff]
    %v658 = vld [vmem:[%s3 + $0x168] sm:$0xff]
    %v659 = vld [vmem:[%s3 + $0x170] sm:$0xff]
    %v660 = vld [vmem:[%s3 + $0x178] sm:$0xff]
    %v661 = vld [vmem:[%s3 + $0x180] sm:$0xff]
    %v662 = vld [vmem:[%s3 + $0x188] sm:$0xff]
    %v663 = vld [vmem:[%s3 + $0x190] sm:$0xff]
    %v664 = vld [vmem:[%s3 + $0x198] sm:$0xff]
    %v665 = vld [vmem:[%s3 + $0x1a0] sm:$0xff]
    %v666 = vld [vmem:[%s3 + $0x1a8] sm:$0xff]
    %v667 = vld [vmem:[%s3 + $0x1b0] sm:$0xff]
    %v668 = vld [vmem:[%s3 + $0x1b8] sm:$0xff]
    %v669 = vld [vmem:[%s3 + $0x1c0] sm:$0xff]
    %v670 = vld [vmem:[%s3 + $0x1c8] sm:$0xff]
    %v671 = vld [vmem:[%s3 + $0x1d0] sm:$0xff]
    %v672 = vld [vmem:[%s3 + $0x1d8] sm:$0xff]
    %v673 = vld [vmem:[%s3 + $0x1e0] sm:$0xff]
    %v674 = vld [vmem:[%s3 + $0x1e8] sm:$0xff]
    %v675 = vld [vmem:[%s3 + $0x1f0] sm:$0xff]
    %v676 = vld [vmem:[%s3 + $0x1f8] sm:$0xff]
    %v677 = vpack.c.bf16 %v611, %v611
    %v678 = vpack.c.bf16 %v612, %v612
    %v680 = vlaneseq
    %v681 = vshrl.u32 %v680, 7
    %v682 = vsub.s32 0, %v681
    %v683 = vrot.slane %v234, %v682
    %v684 = vlaneseq
    %v685 = vshrl.u32 %v684, 7
    %v686 = vsub.s32 1, %v685
    %v687 = vrot.slane %v234, %v686
    %v688 = vlaneseq
    %v689 = vshrl.u32 %v688, 7
    %v690 = vsub.s32 2, %v689
    %v691 = vrot.slane %v234, %v690
    %v692 = vlaneseq
    %v693 = vshrl.u32 %v692, 7
    %v694 = vsub.s32 3, %v693
    %v695 = vrot.slane %v234, %v694
    %v764 = vunpack.c.l.b16 %v613
    %v765 = vunpack.c.h.b16 %v613
    %v766 = vunpack.c.l.b16 %v614
    %v767 = vunpack.c.h.b16 %v614
    %v768 = vunpack.c.l.b16 %v615
    %v769 = vunpack.c.h.b16 %v615
    %v770 = vunpack.c.l.b16 %v616
    %v771 = vunpack.c.h.b16 %v616
    %v772 = vunpack.c.l.b16 %v617
    %v773 = vunpack.c.h.b16 %v617
    %v774 = vunpack.c.l.b16 %v618
    %v775 = vunpack.c.h.b16 %v618
    %v776 = vunpack.c.l.b16 %v619
    %v777 = vunpack.c.h.b16 %v619
    %v778 = vunpack.c.l.b16 %v620
    %v779 = vunpack.c.h.b16 %v620
    %v780 = vunpack.c.l.b16 %v621
    %v781 = vunpack.c.h.b16 %v621
    %v782 = vunpack.c.l.b16 %v622
    %v783 = vunpack.c.h.b16 %v622
    %v784 = vunpack.c.l.b16 %v623
    %v785 = vunpack.c.h.b16 %v623
    %v786 = vunpack.c.l.b16 %v624
    %v787 = vunpack.c.h.b16 %v624
    %v788 = vunpack.c.l.b16 %v625
    %v789 = vunpack.c.h.b16 %v625
    %v790 = vunpack.c.l.b16 %v626
    %v791 = vunpack.c.h.b16 %v626
    %v792 = vunpack.c.l.b16 %v627
    %v793 = vunpack.c.h.b16 %v627
    %v794 = vunpack.c.l.b16 %v628
    %v795 = vunpack.c.h.b16 %v628
    %v796 = vunpack.c.l.b16 %v629
    %v797 = vunpack.c.h.b16 %v629
    %v798 = vunpack.c.l.b16 %v630
    %v799 = vunpack.c.h.b16 %v630
    %v800 = vunpack.c.l.b16 %v631
    %v801 = vunpack.c.h.b16 %v631
    %v802 = vunpack.c.l.b16 %v632
    %v803 = vunpack.c.h.b16 %v632
    %v804 = vunpack.c.l.b16 %v633
    %v805 = vunpack.c.h.b16 %v633
    %v806 = vunpack.c.l.b16 %v634
    %v807 = vunpack.c.h.b16 %v634
    %v808 = vunpack.c.l.b16 %v635
    %v809 = vunpack.c.h.b16 %v635
    %v810 = vunpack.c.l.b16 %v636
    %v811 = vunpack.c.h.b16 %v636
    %v812 = vunpack.c.l.b16 %v637
    %v813 = vunpack.c.h.b16 %v637
    %v814 = vunpack.c.l.b16 %v638
    %v815 = vunpack.c.h.b16 %v638
    %v816 = vunpack.c.l.b16 %v639
    %v817 = vunpack.c.h.b16 %v639
    %v818 = vunpack.c.l.b16 %v640
    %v819 = vunpack.c.h.b16 %v640
    %v820 = vunpack.c.l.b16 %v641
    %v821 = vunpack.c.h.b16 %v641
    %v822 = vunpack.c.l.b16 %v642
    %v823 = vunpack.c.h.b16 %v642
    %v824 = vunpack.c.l.b16 %v643
    %v825 = vunpack.c.h.b16 %v643
    %v826 = vunpack.c.l.b16 %v644
    %v827 = vunpack.c.h.b16 %v644
    %v828 = vunpack.c.l.b16 %v645
    %v829 = vunpack.c.h.b16 %v645
    %v830 = vunpack.c.l.b16 %v646
    %v831 = vunpack.c.h.b16 %v646
    %v832 = vunpack.c.l.b16 %v647
    %v833 = vunpack.c.h.b16 %v647
    %v834 = vunpack.c.l.b16 %v648
    %v835 = vunpack.c.h.b16 %v648
    %v836 = vunpack.c.l.b16 %v649
    %v837 = vunpack.c.h.b16 %v649
    %v838 = vunpack.c.l.b16 %v650
    %v839 = vunpack.c.h.b16 %v650
    %v840 = vunpack.c.l.b16 %v651
    %v841 = vunpack.c.h.b16 %v651
    %v842 = vunpack.c.l.b16 %v652
    %v843 = vunpack.c.h.b16 %v652
    %v844 = vunpack.c.l.b16 %v653
    %v845 = vunpack.c.h.b16 %v653
    %v846 = vunpack.c.l.b16 %v654
    %v847 = vunpack.c.h.b16 %v654
    %v848 = vunpack.c.l.b16 %v655
    %v849 = vunpack.c.h.b16 %v655
    %v850 = vunpack.c.l.b16 %v656
    %v851 = vunpack.c.h.b16 %v656
    %v852 = vunpack.c.l.b16 %v657
    %v853 = vunpack.c.h.b16 %v657
    %v854 = vunpack.c.l.b16 %v658
    %v855 = vunpack.c.h.b16 %v658
    %v856 = vunpack.c.l.b16 %v659
    %v857 = vunpack.c.h.b16 %v659
    %v858 = vunpack.c.l.b16 %v660
    %v859 = vunpack.c.h.b16 %v660
    %v860 = vunpack.c.l.b16 %v661
    %v861 = vunpack.c.h.b16 %v661
    %v862 = vunpack.c.l.b16 %v662
    %v863 = vunpack.c.h.b16 %v662
    %v864 = vunpack.c.l.b16 %v663
    %v865 = vunpack.c.h.b16 %v663
    %v866 = vunpack.c.l.b16 %v664
    %v867 = vunpack.c.h.b16 %v664
    %v868 = vunpack.c.l.b16 %v665
    %v869 = vunpack.c.h.b16 %v665
    %v870 = vunpack.c.l.b16 %v666
    %v871 = vunpack.c.h.b16 %v666
    %v872 = vunpack.c.l.b16 %v667
    %v873 = vunpack.c.h.b16 %v667
    %v874 = vunpack.c.l.b16 %v668
    %v875 = vunpack.c.h.b16 %v668
    %v876 = vunpack.c.l.b16 %v669
    %v877 = vunpack.c.h.b16 %v669
    %v878 = vunpack.c.l.b16 %v670
    %v879 = vunpack.c.h.b16 %v670
    %v880 = vunpack.c.l.b16 %v671
    %v881 = vunpack.c.h.b16 %v671
    %v882 = vunpack.c.l.b16 %v672
    %v883 = vunpack.c.h.b16 %v672
    %v884 = vunpack.c.l.b16 %v673
    %v885 = vunpack.c.h.b16 %v673
    %v886 = vunpack.c.l.b16 %v674
    %v887 = vunpack.c.h.b16 %v674
    %v888 = vunpack.c.l.b16 %v675
    %v889 = vunpack.c.h.b16 %v675
    %v890 = vunpack.c.l.b16 %v676
    %v891 = vunpack.c.h.b16 %v676
    %v892 = vpack.c.b16 %v768, %v764
    %v893 = vpack.c.b16 %v769, %v765
    %v894 = vpack.c.b16 %v770, %v766
    %v895 = vpack.c.b16 %v771, %v767
    %v896 = vpack.c.b16 %v776, %v772
    %v897 = vpack.c.b16 %v777, %v773
    %v898 = vpack.c.b16 %v778, %v774
    %v899 = vpack.c.b16 %v779, %v775
    %v900 = vpack.c.b16 %v784, %v780
    %v901 = vpack.c.b16 %v785, %v781
    %v902 = vpack.c.b16 %v786, %v782
    %v903 = vpack.c.b16 %v787, %v783
    %v904 = vpack.c.b16 %v792, %v788
    %v905 = vpack.c.b16 %v793, %v789
    %v906 = vpack.c.b16 %v794, %v790
    %v907 = vpack.c.b16 %v795, %v791
    %v908 = vpack.c.b16 %v800, %v796
    %v909 = vpack.c.b16 %v801, %v797
    %v910 = vpack.c.b16 %v802, %v798
    %v911 = vpack.c.b16 %v803, %v799
    %v912 = vpack.c.b16 %v808, %v804
    %v913 = vpack.c.b16 %v809, %v805
    %v914 = vpack.c.b16 %v810, %v806
    %v915 = vpack.c.b16 %v811, %v807
    %v916 = vpack.c.b16 %v816, %v812
    %v917 = vpack.c.b16 %v817, %v813
    %v918 = vpack.c.b16 %v818, %v814
    %v919 = vpack.c.b16 %v819, %v815
    %v920 = vpack.c.b16 %v824, %v820
    %v921 = vpack.c.b16 %v825, %v821
    %v922 = vpack.c.b16 %v826, %v822
    %v923 = vpack.c.b16 %v827, %v823
    %v924 = vpack.c.b16 %v832, %v828
    %v925 = vpack.c.b16 %v833, %v829
    %v926 = vpack.c.b16 %v834, %v830
    %v927 = vpack.c.b16 %v835, %v831
    %v928 = vpack.c.b16 %v840, %v836
    %v929 = vpack.c.b16 %v841, %v837
    %v930 = vpack.c.b16 %v842, %v838
    %v931 = vpack.c.b16 %v843, %v839
    %v932 = vpack.c.b16 %v848, %v844
    %v933 = vpack.c.b16 %v849, %v845
    %v934 = vpack.c.b16 %v850, %v846
    %v935 = vpack.c.b16 %v851, %v847
    %v936 = vpack.c.b16 %v856, %v852
    %v937 = vpack.c.b16 %v857, %v853
    %v938 = vpack.c.b16 %v858, %v854
    %v939 = vpack.c.b16 %v859, %v855
    %v940 = vpack.c.b16 %v864, %v860
    %v941 = vpack.c.b16 %v865, %v861
    %v942 = vpack.c.b16 %v866, %v862
    %v943 = vpack.c.b16 %v867, %v863
    %v944 = vpack.c.b16 %v872, %v868
    %v945 = vpack.c.b16 %v873, %v869
    %v946 = vpack.c.b16 %v874, %v870
    %v947 = vpack.c.b16 %v875, %v871
    %v948 = vpack.c.b16 %v880, %v876
    %v949 = vpack.c.b16 %v881, %v877
    %v950 = vpack.c.b16 %v882, %v878
    %v951 = vpack.c.b16 %v883, %v879
    %v952 = vpack.c.b16 %v888, %v884
    %v953 = vpack.c.b16 %v889, %v885
    %v954 = vpack.c.b16 %v890, %v886
    %v955 = vpack.c.b16 %v891, %v887
    %1020 = vmatprep.subr.bf16.mxu0 %v893
    %1021 = vmatpush1.bf16.msra.mxu0 %v892
    %1022 = vmatprep.subr.bf16.mxu0 %v897
    %1023 = vmatpush1.bf16.msra.mxu0 %v896
    %1024 = vmatprep.subr.bf16.mxu0 %v901
    %1025 = vmatpush1.bf16.msra.mxu0 %v900
    %1026 = vmatprep.subr.bf16.mxu0 %v905
    %1027 = vmatpush1.bf16.msra.mxu0 %v904
    %1028 = vmatprep.subr.bf16.mxu0 %v909
    %1029 = vmatpush1.bf16.msra.mxu0 %v908
    %1030 = vmatprep.subr.bf16.mxu0 %v913
    %1031 = vmatpush1.bf16.msra.mxu0 %v912
    %1032 = vmatprep.subr.bf16.mxu0 %v917
    %1033 = vmatpush1.bf16.msra.mxu0 %v916
    %1034 = vmatprep.subr.bf16.mxu0 %v921
    %1035 = vmatpush1.bf16.msra.mxu0 %v920
    %1036 = vmatprep.subr.bf16.mxu0 %v925
    %1037 = vmatpush1.bf16.msra.mxu0 %v924
    %1038 = vmatprep.subr.bf16.mxu0 %v929
    %1039 = vmatpush1.bf16.msra.mxu0 %v928
    %1040 = vmatprep.subr.bf16.mxu0 %v933
    %1041 = vmatpush1.bf16.msra.mxu0 %v932
    %1042 = vmatprep.subr.bf16.mxu0 %v937
    %1043 = vmatpush1.bf16.msra.mxu0 %v936
    %1044 = vmatprep.subr.bf16.mxu0 %v941
    %1045 = vmatpush1.bf16.msra.mxu0 %v940
    %1046 = vmatprep.subr.bf16.mxu0 %v945
    %1047 = vmatpush1.bf16.msra.mxu0 %v944
    %1048 = vmatprep.subr.bf16.mxu0 %v949
    %1049 = vmatpush1.bf16.msra.mxu0 %v948
    %1050 = vmatprep.subr.bf16.mxu0 %v953
    %1051 = vmatpush1.bf16.msra.mxu0 %v952
    %1052 = vmatprep.mubr.bf16.mxu0 %v678
    %1053 = vmatmul.mubr.bf16.gmra.mrb[0].mxu0 %v677
    %v1054 = vpop.f32.mrb[0].mxu0
    %v1055 = vadd.f32 %v683, %v1054
    %v1056 = vpop.f32.mrb[0].mxu0
    %v1057 = vadd.f32 %v687, %v1056
    %v1058 = vpop.f32.mrb[0].mxu0
    %v1059 = vpop.f32.mrb[0].mxu0
    %1060 = vdwg.mxu0
    %1061 = vmatprep.subr.bf16.mxu0 %v895
    %1062 = vmatpush1.bf16.msra.mxu0 %v894
    %1063 = vmatprep.subr.bf16.mxu0 %v899
    %1064 = vmatpush1.bf16.msra.mxu0 %v898
    %1065 = vmatprep.subr.bf16.mxu0 %v903
    %1066 = vmatpush1.bf16.msra.mxu0 %v902
    %1067 = vmatprep.subr.bf16.mxu0 %v907
    %1068 = vmatpush1.bf16.msra.mxu0 %v906
    %1069 = vmatprep.subr.bf16.mxu0 %v911
    %1070 = vmatpush1.bf16.msra.mxu0 %v910
    %1071 = vmatprep.subr.bf16.mxu0 %v915
    %1072 = vmatpush1.bf16.msra.mxu0 %v914
    %1073 = vmatprep.subr.bf16.mxu0 %v919
    %1074 = vmatpush1.bf16.msra.mxu0 %v918
    %1075 = vmatprep.subr.bf16.mxu0 %v923
    %1076 = vmatpush1.bf16.msra.mxu0 %v922
    %1077 = vmatprep.subr.bf16.mxu0 %v927
    %1078 = vmatpush1.bf16.msra.mxu0 %v926
    %1079 = vmatprep.subr.bf16.mxu0 %v931
    %1080 = vmatpush1.bf16.msra.mxu0 %v930
    %1081 = vmatprep.subr.bf16.mxu0 %v935
    %1082 = vmatpush1.bf16.msra.mxu0 %v934
    %1083 = vmatprep.subr.bf16.mxu0 %v939
    %1084 = vmatpush1.bf16.msra.mxu0 %v938
    %1085 = vmatprep.subr.bf16.mxu0 %v943
    %1086 = vmatpush1.bf16.msra.mxu0 %v942
    %1087 = vmatprep.subr.bf16.mxu0 %v947
    %1088 = vmatpush1.bf16.msra.mxu0 %v946
    %1089 = vmatprep.subr.bf16.mxu0 %v951
    %1090 = vmatpush1.bf16.msra.mxu0 %v950
    %1091 = vmatprep.subr.bf16.mxu0 %v955
    %1092 = vmatpush1.bf16.msra.mxu0 %v954
    %1093 = vmatprep.mubr.bf16.mxu0 %v678
    %1094 = vmatmul.mubr.bf16.gmra.mrb[0].mxu0 %v677
    %v1095 = vpop.f32.mrb[0].mxu0
    %v1096 = vadd.f32 %v691, %v1095
    %v1097 = vpop.f32.mrb[0].mxu0
    %v1098 = vadd.f32 %v695, %v1097
    %v1099 = vpop.f32.mrb[0].mxu0
    %v1100 = vpop.f32.mrb[0].mxu0
    %1101 = vdwg.mxu0
    %v1102 = vrot.slane %v1055, 4
    %v1103 = vadd.f32 %v1055, %v1102
    %v1104 = vrot.slane %v1103, 2
    %v1105 = vadd.f32 %v1103, %v1104
    %v1106 = vrot.slane %v1105, 1
    %v1107 = vadd.f32 %v1105, %v1106
    %v1108 = vrot.slane %v1057, 4
    %v1109 = vadd.f32 %v1057, %v1108
    %v1110 = vrot.slane %v1109, 2
    %v1111 = vadd.f32 %v1109, %v1110
    %v1112 = vrot.slane %v1111, 1
    %v1113 = vadd.f32 %v1111, %v1112
    %v1114 = vrot.slane %v1096, 4
    %v1115 = vadd.f32 %v1096, %v1114
    %v1116 = vrot.slane %v1115, 2
    %v1117 = vadd.f32 %v1115, %v1116
    %v1118 = vrot.slane %v1117, 1
    %v1119 = vadd.f32 %v1117, %v1118
    %v1120 = vrot.slane %v1098, 4
    %v1121 = vadd.f32 %v1098, %v1120
    %v1122 = vrot.slane %v1121, 2
    %v1123 = vadd.f32 %v1121, %v1122
    %v1124 = vrot.slane %v1123, 1
    %v1125 = vadd.f32 %v1123, %v1124
    %v1126 = vmul.f32 %v1107, %v516
    %v1127 = vmul.f32 %v1113, %v516
    %v1128 = vmul.f32 %v1119, %v516
    %v1129 = vmul.f32 %v1125, %v516
    %v1130 = vmul.f32 %v1055, %v1055
    %v1131 = vmul.f32 %v1057, %v1057
    %v1132 = vmul.f32 %v1096, %v1096
    %v1133 = vmul.f32 %v1098, %v1098
    %v1134 = vrot.slane %v1130, 4
    %v1135 = vadd.f32 %v1130, %v1134
    %v1136 = vrot.slane %v1135, 2
    %v1137 = vadd.f32 %v1135, %v1136
    %v1138 = vrot.slane %v1137, 1
    %v1139 = vadd.f32 %v1137, %v1138
    %v1140 = vrot.slane %v1131, 4
    %v1141 = vadd.f32 %v1131, %v1140
    %v1142 = vrot.slane %v1141, 2
    %v1143 = vadd.f32 %v1141, %v1142
    %v1144 = vrot.slane %v1143, 1
    %v1145 = vadd.f32 %v1143, %v1144
    %v1146 = vrot.slane %v1132, 4
    %v1147 = vadd.f32 %v1132, %v1146
    %v1148 = vrot.slane %v1147, 2
    %v1149 = vadd.f32 %v1147, %v1148
    %v1150 = vrot.slane %v1149, 1
    %v1151 = vadd.f32 %v1149, %v1150
    %v1152 = vrot.slane %v1133, 4
    %v1153 = vadd.f32 %v1133, %v1152
    %v1154 = vrot.slane %v1153, 2
    %v1155 = vadd.f32 %v1153, %v1154
    %v1156 = vrot.slane %v1155, 1
    %v1157 = vadd.f32 %v1155, %v1156
    %v1158 = vmul.f32 %v1139, %v516
    %v1159 = vmul.f32 %v1145, %v516
    %v1160 = vmul.f32 %v1151, %v516
    %v1161 = vmul.f32 %v1157, %v516
    %v1162 = vmul.f32 %v1126, %v1126
    %v1163 = vmul.f32 %v1127, %v1127
    %v1164 = vmul.f32 %v1128, %v1128
    %v1165 = vmul.f32 %v1129, %v1129
    %v1166 = vsub.f32 %v1158, %v1162
    %v1167 = vsub.f32 %v1159, %v1163
    %v1168 = vsub.f32 %v1160, %v1164
    %v1169 = vsub.f32 %v1161, %v1165
    %v1170 = vadd.f32 %v1166, 0.8
    %v1171 = vadd.f32 %v1167, 0.8
    %v1172 = vadd.f32 %v1168, 0.8
    %v1173 = vadd.f32 %v1169, 0.8
    %v1174 = vrsqrt.pop %v1170
    %v1175 = vrsqrt.pop %v1171
    %v1176 = vrsqrt.pop %v1172
    %v1177 = vrsqrt.pop %v1173
    %v1182 = vcombine.low %v1174, %v1175
    %v1183 = vcombine.low %v1176, %v1177
    %v1185 = vunpack.c.l.s4 1966171168
    %v1186 = vunpack.c.0.s8 %v1185
    %v1187 = vlaneseq
    %v1188 = vshrl.u32 %v1187, 7
    %v1189 = vsub.s32 %v1186, %v1188
    %v1190 = vrot.slane %v1182, %v1189
    %v1192 = vunpack.c.l.s4 1966171168
    %v1193 = vunpack.c.0.s8 %v1192
    %v1194 = vlaneseq
    %v1195 = vshrl.u32 %v1194, 7
    %v1196 = vsub.s32 %v1193, %v1195
    %v1197 = vrot.slane %v1183, %v1196
    %v1198 = vcombine.low %v1190, %v1197
    %v1200 = vunpack.c.l.s4 1966171168
    %v1201 = vunpack.c.0.s8 %v1200
    %v1202 = vlaneseq
    %v1203 = vshrl.u32 %v1202, 7
    %v1204 = vsub.s32 %v1201, %v1203
    %v1205 = vrot.slane %v1198, %v1204
    %v1207 = vmul.f32 %v235, %v1205
    %v1209 = vlaneseq
    %v1210 = vshrl.u32 %v1209, 7
    %v1211 = vsub.s32 0, %v1210
    %v1212 = vrot.slane %v1207, %v1211
    %v1213 = vlaneseq
    %v1214 = vshrl.u32 %v1213, 7
    %v1215 = vsub.s32 1, %v1214
    %v1216 = vrot.slane %v1207, %v1215
    %v1217 = vlaneseq
    %v1218 = vshrl.u32 %v1217, 7
    %v1219 = vsub.s32 2, %v1218
    %v1220 = vrot.slane %v1207, %v1219
    %v1221 = vlaneseq
    %v1222 = vshrl.u32 %v1221, 7
    %v1223 = vsub.s32 3, %v1222
    %v1224 = vrot.slane %v1207, %v1223
    %v1229 = vmul.f32 %v1126, %v1212
    %v1230 = vmul.f32 %v1127, %v1216
    %v1231 = vmul.f32 %v1128, %v1220
    %v1232 = vmul.f32 %v1129, %v1224
    %v1237 = vcombine.low %v1229, %v1230
    %v1238 = vcombine.low %v1231, %v1232
    %v1240 = vunpack.c.l.s4 1966171168
    %v1241 = vunpack.c.0.s8 %v1240
    %v1242 = vlaneseq
    %v1243 = vshrl.u32 %v1242, 7
    %v1244 = vsub.s32 %v1241, %v1243
    %v1245 = vrot.slane %v1237, %v1244
    %v1247 = vunpack.c.l.s4 1966171168
    %v1248 = vunpack.c.0.s8 %v1247
    %v1249 = vlaneseq
    %v1250 = vshrl.u32 %v1249, 7
    %v1251 = vsub.s32 %v1248, %v1250
    %v1252 = vrot.slane %v1238, %v1251
    %v1253 = vcombine.low %v1245, %v1252
    %v1255 = vunpack.c.l.s4 1966171168
    %v1256 = vunpack.c.0.s8 %v1255
    %v1257 = vlaneseq
    %v1258 = vshrl.u32 %v1257, 7
    %v1259 = vsub.s32 %v1256, %v1258
    %v1260 = vrot.slane %v1253, %v1259
    %v1262 = vsub.f32 %v236, %v1260
    %v1263 = vmul.f32 %v1055, %v1212
    %v1264 = vmul.f32 %v1057, %v1216
    %v1265 = vmul.f32 %v1096, %v1220
    %v1266 = vmul.f32 %v1098, %v1224
    %v1268 = vlaneseq
    %v1269 = vshrl.u32 %v1268, 7
    %v1270 = vsub.s32 0, %v1269
    %v1271 = vrot.slane %v1262, %v1270
    %v1272 = vlaneseq
    %v1273 = vshrl.u32 %v1272, 7
    %v1274 = vsub.s32 1, %v1273
    %v1275 = vrot.slane %v1262, %v1274
    %v1276 = vlaneseq
    %v1277 = vshrl.u32 %v1276, 7
    %v1278 = vsub.s32 2, %v1277
    %v1279 = vrot.slane %v1262, %v1278
    %v1280 = vlaneseq
    %v1281 = vshrl.u32 %v1280, 7
    %v1282 = vsub.s32 3, %v1281
    %v1283 = vrot.slane %v1262, %v1282
    %v1288 = vadd.f32 %v1263, %v1271
    %v1289 = vadd.f32 %v1264, %v1275
    %v1290 = vadd.f32 %v1265, %v1279
    %v1291 = vadd.f32 %v1266, %v1283
    %v1292 = vmul.f32 %v1288, 0.2
    %v1293 = vmul.f32 %v1289, 0.2
    %v1294 = vmul.f32 %v1290, 0.2
    %v1295 = vmul.f32 %v1291, 0.2
    %v1296 = vmax.f32 %v1288, %v1292
    %v1297 = vmax.f32 %v1289, %v1293
    %v1298 = vmax.f32 %v1290, %v1294
    %v1299 = vmax.f32 %v1291, %v1295
    %s1300 = smul.u32 4, 64
    %s1301 = smul.u32 %s1300, 8
    %s1302 = sshll.u32 %s1301, 4
    %1303 = dma.done [#allocation4], %s1302
    %v1304 = vld [vmem:[#allocation2] sm:$0xff]
    %v1305 = vld [vmem:[#allocation2 + $0x8] sm:$0xff]
    %v1306 = vld [vmem:[#allocation2 + $0x10] sm:$0xff]
    %v1307 = vld [vmem:[#allocation2 + $0x18] sm:$0xff]
    %v1308 = vld [vmem:[#allocation2 + $0x20] sm:$0xff]
    %v1309 = vld [vmem:[#allocation2 + $0x28] sm:$0xff]
    %v1310 = vld [vmem:[#allocation2 + $0x30] sm:$0xff]
    %v1311 = vld [vmem:[#allocation2 + $0x38] sm:$0xff]
    %v1312 = vld [vmem:[#allocation2 + $0x40] sm:$0xff]
    %v1313 = vld [vmem:[#allocation2 + $0x48] sm:$0xff]
    %v1314 = vld [vmem:[#allocation2 + $0x50] sm:$0xff]
    %v1315 = vld [vmem:[#allocation2 + $0x58] sm:$0xff]
    %v1316 = vld [vmem:[#allocation2 + $0x60] sm:$0xff]
    %v1317 = vld [vmem:[#allocation2 + $0x68] sm:$0xff]
    %v1318 = vld [vmem:[#allocation2 + $0x70] sm:$0xff]
    %v1319 = vld [vmem:[#allocation2 + $0x78] sm:$0xff]
    %v1320 = vld [vmem:[#allocation2 + $0x80] sm:$0xff]
    %v1321 = vld [vmem:[#allocation2 + $0x88] sm:$0xff]
    %v1322 = vld [vmem:[#allocation2 + $0x90] sm:$0xff]
    %v1323 = vld [vmem:[#allocation2 + $0x98] sm:$0xff]
    %v1324 = vld [vmem:[#allocation2 + $0xa0] sm:$0xff]
    %v1325 = vld [vmem:[#allocation2 + $0xa8] sm:$0xff]
    %v1326 = vld [vmem:[#allocation2 + $0xb0] sm:$0xff]
    %v1327 = vld [vmem:[#allocation2 + $0xb8] sm:$0xff]
    %v1328 = vld [vmem:[#allocation2 + $0xc0] sm:$0xff]
    %v1329 = vld [vmem:[#allocation2 + $0xc8] sm:$0xff]
    %v1330 = vld [vmem:[#allocation2 + $0xd0] sm:$0xff]
    %v1331 = vld [vmem:[#allocation2 + $0xd8] sm:$0xff]
    %v1332 = vld [vmem:[#allocation2 + $0xe0] sm:$0xff]
    %v1333 = vld [vmem:[#allocation2 + $0xe8] sm:$0xff]
    %v1334 = vld [vmem:[#allocation2 + $0xf0] sm:$0xff]
    %v1335 = vld [vmem:[#allocation2 + $0xf8] sm:$0xff]
    %v1336 = vld [vmem:[#allocation2 + $0x100] sm:$0xff]
    %v1337 = vld [vmem:[#allocation2 + $0x108] sm:$0xff]
    %v1338 = vld [vmem:[#allocation2 + $0x110] sm:$0xff]
    %v1339 = vld [vmem:[#allocation2 + $0x118] sm:$0xff]
    %v1340 = vld [vmem:[#allocation2 + $0x120] sm:$0xff]
    %v1341 = vld [vmem:[#allocation2 + $0x128] sm:$0xff]
    %v1342 = vld [vmem:[#allocation2 + $0x130] sm:$0xff]
    %v1343 = vld [vmem:[#allocation2 + $0x138] sm:$0xff]
    %v1344 = vld [vmem:[#allocation2 + $0x140] sm:$0xff]
    %v1345 = vld [vmem:[#allocation2 + $0x148] sm:$0xff]
    %v1346 = vld [vmem:[#allocation2 + $0x150] sm:$0xff]
    %v1347 = vld [vmem:[#allocation2 + $0x158] sm:$0xff]
    %v1348 = vld [vmem:[#allocation2 + $0x160] sm:$0xff]
    %v1349 = vld [vmem:[#allocation2 + $0x168] sm:$0xff]
    %v1350 = vld [vmem:[#allocation2 + $0x170] sm:$0xff]
    %v1351 = vld [vmem:[#allocation2 + $0x178] sm:$0xff]
    %v1352 = vld [vmem:[#allocation2 + $0x180] sm:$0xff]
    %v1353 = vld [vmem:[#allocation2 + $0x188] sm:$0xff]
    %v1354 = vld [vmem:[#allocation2 + $0x190] sm:$0xff]
    %v1355 = vld [vmem:[#allocation2 + $0x198] sm:$0xff]
    %v1356 = vld [vmem:[#allocation2 + $0x1a0] sm:$0xff]
    %v1357 = vld [vmem:[#allocation2 + $0x1a8] sm:$0xff]
    %v1358 = vld [vmem:[#allocation2 + $0x1b0] sm:$0xff]
    %v1359 = vld [vmem:[#allocation2 + $0x1b8] sm:$0xff]
    %v1360 = vld [vmem:[#allocation2 + $0x1c0] sm:$0xff]
    %v1361 = vld [vmem:[#allocation2 + $0x1c8] sm:$0xff]
    %v1362 = vld [vmem:[#allocation2 + $0x1d0] sm:$0xff]
    %v1363 = vld [vmem:[#allocation2 + $0x1d8] sm:$0xff]
    %v1364 = vld [vmem:[#allocation2 + $0x1e0] sm:$0xff]
    %v1365 = vld [vmem:[#allocation2 + $0x1e8] sm:$0xff]
    %v1366 = vld [vmem:[#allocation2 + $0x1f0] sm:$0xff]
    %v1367 = vld [vmem:[#allocation2 + $0x1f8] sm:$0xff]
    %v1368 = vld [vmem:[#allocation2 + $0x200] sm:$0xff]
    %v1369 = vld [vmem:[#allocation2 + $0x208] sm:$0xff]
    %v1370 = vld [vmem:[#allocation2 + $0x210] sm:$0xff]
    %v1371 = vld [vmem:[#allocation2 + $0x218] sm:$0xff]
    %v1372 = vld [vmem:[#allocation2 + $0x220] sm:$0xff]
    %v1373 = vld [vmem:[#allocation2 + $0x228] sm:$0xff]
    %v1374 = vld [vmem:[#allocation2 + $0x230] sm:$0xff]
    %v1375 = vld [vmem:[#allocation2 + $0x238] sm:$0xff]
    %v1376 = vld [vmem:[#allocation2 + $0x240] sm:$0xff]
    %v1377 = vld [vmem:[#allocation2 + $0x248] sm:$0xff]
    %v1378 = vld [vmem:[#allocation2 + $0x250] sm:$0xff]
    %v1379 = vld [vmem:[#allocation2 + $0x258] sm:$0xff]
    %v1380 = vld [vmem:[#allocation2 + $0x260] sm:$0xff]
    %v1381 = vld [vmem:[#allocation2 + $0x268] sm:$0xff]
    %v1382 = vld [vmem:[#allocation2 + $0x270] sm:$0xff]
    %v1383 = vld [vmem:[#allocation2 + $0x278] sm:$0xff]
    %v1384 = vld [vmem:[#allocation2 + $0x280] sm:$0xff]
    %v1385 = vld [vmem:[#allocation2 + $0x288] sm:$0xff]
    %v1386 = vld [vmem:[#allocation2 + $0x290] sm:$0xff]
    %v1387 = vld [vmem:[#allocation2 + $0x298] sm:$0xff]
    %v1388 = vld [vmem:[#allocation2 + $0x2a0] sm:$0xff]
    %v1389 = vld [vmem:[#allocation2 + $0x2a8] sm:$0xff]
    %v1390 = vld [vmem:[#allocation2 + $0x2b0] sm:$0xff]
    %v1391 = vld [vmem:[#allocation2 + $0x2b8] sm:$0xff]
    %v1392 = vld [vmem:[#allocation2 + $0x2c0] sm:$0xff]
    %v1393 = vld [vmem:[#allocation2 + $0x2c8] sm:$0xff]
    %v1394 = vld [vmem:[#allocation2 + $0x2d0] sm:$0xff]
    %v1395 = vld [vmem:[#allocation2 + $0x2d8] sm:$0xff]
    %v1396 = vld [vmem:[#allocation2 + $0x2e0] sm:$0xff]
    %v1397 = vld [vmem:[#allocation2 + $0x2e8] sm:$0xff]
    %v1398 = vld [vmem:[#allocation2 + $0x2f0] sm:$0xff]
    %v1399 = vld [vmem:[#allocation2 + $0x2f8] sm:$0xff]
    %v1400 = vld [vmem:[#allocation2 + $0x300] sm:$0xff]
    %v1401 = vld [vmem:[#allocation2 + $0x308] sm:$0xff]
    %v1402 = vld [vmem:[#allocation2 + $0x310] sm:$0xff]
    %v1403 = vld [vmem:[#allocation2 + $0x318] sm:$0xff]
    %v1404 = vld [vmem:[#allocation2 + $0x320] sm:$0xff]
    %v1405 = vld [vmem:[#allocation2 + $0x328] sm:$0xff]
    %v1406 = vld [vmem:[#allocation2 + $0x330] sm:$0xff]
    %v1407 = vld [vmem:[#allocation2 + $0x338] sm:$0xff]
    %v1408 = vld [vmem:[#allocation2 + $0x340] sm:$0xff]
    %v1409 = vld [vmem:[#allocation2 + $0x348] sm:$0xff]
    %v1410 = vld [vmem:[#allocation2 + $0x350] sm:$0xff]
    %v1411 = vld [vmem:[#allocation2 + $0x358] sm:$0xff]
    %v1412 = vld [vmem:[#allocation2 + $0x360] sm:$0xff]
    %v1413 = vld [vmem:[#allocation2 + $0x368] sm:$0xff]
    %v1414 = vld [vmem:[#allocation2 + $0x370] sm:$0xff]
    %v1415 = vld [vmem:[#allocation2 + $0x378] sm:$0xff]
    %v1416 = vld [vmem:[#allocation2 + $0x380] sm:$0xff]
    %v1417 = vld [vmem:[#allocation2 + $0x388] sm:$0xff]
    %v1418 = vld [vmem:[#allocation2 + $0x390] sm:$0xff]
    %v1419 = vld [vmem:[#allocation2 + $0x398] sm:$0xff]
    %v1420 = vld [vmem:[#allocation2 + $0x3a0] sm:$0xff]
    %v1421 = vld [vmem:[#allocation2 + $0x3a8] sm:$0xff]
    %v1422 = vld [vmem:[#allocation2 + $0x3b0] sm:$0xff]
    %v1423 = vld [vmem:[#allocation2 + $0x3b8] sm:$0xff]
    %v1424 = vld [vmem:[#allocation2 + $0x3c0] sm:$0xff]
    %v1425 = vld [vmem:[#allocation2 + $0x3c8] sm:$0xff]
    %v1426 = vld [vmem:[#allocation2 + $0x3d0] sm:$0xff]
    %v1427 = vld [vmem:[#allocation2 + $0x3d8] sm:$0xff]
    %v1428 = vld [vmem:[#allocation2 + $0x3e0] sm:$0xff]
    %v1429 = vld [vmem:[#allocation2 + $0x3e8] sm:$0xff]
    %v1430 = vld [vmem:[#allocation2 + $0x3f0] sm:$0xff]
    %v1431 = vld [vmem:[#allocation2 + $0x3f8] sm:$0xff]
    %v1432 = vld [vmem:[#allocation2 + $0x400] sm:$0xff]
    %v1433 = vld [vmem:[#allocation2 + $0x408] sm:$0xff]
    %v1434 = vld [vmem:[#allocation2 + $0x410] sm:$0xff]
    %v1435 = vld [vmem:[#allocation2 + $0x418] sm:$0xff]
    %v1436 = vld [vmem:[#allocation2 + $0x420] sm:$0xff]
    %v1437 = vld [vmem:[#allocation2 + $0x428] sm:$0xff]
    %v1438 = vld [vmem:[#allocation2 + $0x430] sm:$0xff]
    %v1439 = vld [vmem:[#allocation2 + $0x438] sm:$0xff]
    %v1440 = vld [vmem:[#allocation2 + $0x440] sm:$0xff]
    %v1441 = vld [vmem:[#allocation2 + $0x448] sm:$0xff]
    %v1442 = vld [vmem:[#allocation2 + $0x450] sm:$0xff]
    %v1443 = vld [vmem:[#allocation2 + $0x458] sm:$0xff]
    %v1444 = vld [vmem:[#allocation2 + $0x460] sm:$0xff]
    %v1445 = vld [vmem:[#allocation2 + $0x468] sm:$0xff]
    %v1446 = vld [vmem:[#allocation2 + $0x470] sm:$0xff]
    %v1447 = vld [vmem:[#allocation2 + $0x478] sm:$0xff]
    %v1448 = vld [vmem:[#allocation2 + $0x480] sm:$0xff]
    %v1449 = vld [vmem:[#allocation2 + $0x488] sm:$0xff]
    %v1450 = vld [vmem:[#allocation2 + $0x490] sm:$0xff]
    %v1451 = vld [vmem:[#allocation2 + $0x498] sm:$0xff]
    %v1452 = vld [vmem:[#allocation2 + $0x4a0] sm:$0xff]
    %v1453 = vld [vmem:[#allocation2 + $0x4a8] sm:$0xff]
    %v1454 = vld [vmem:[#allocation2 + $0x4b0] sm:$0xff]
    %v1455 = vld [vmem:[#allocation2 + $0x4b8] sm:$0xff]
    %v1456 = vld [vmem:[#allocation2 + $0x4c0] sm:$0xff]
    %v1457 = vld [vmem:[#allocation2 + $0x4c8] sm:$0xff]
    %v1458 = vld [vmem:[#allocation2 + $0x4d0] sm:$0xff]
    %v1459 = vld [vmem:[#allocation2 + $0x4d8] sm:$0xff]
    %v1460 = vld [vmem:[#allocation2 + $0x4e0] sm:$0xff]
    %v1461 = vld [vmem:[#allocation2 + $0x4e8] sm:$0xff]
    %v1462 = vld [vmem:[#allocation2 + $0x4f0] sm:$0xff]
    %v1463 = vld [vmem:[#allocation2 + $0x4f8] sm:$0xff]
    %v1464 = vld [vmem:[#allocation2 + $0x500] sm:$0xff]
    %v1465 = vld [vmem:[#allocation2 + $0x508] sm:$0xff]
    %v1466 = vld [vmem:[#allocation2 + $0x510] sm:$0xff]
    %v1467 = vld [vmem:[#allocation2 + $0x518] sm:$0xff]
    %v1468 = vld [vmem:[#allocation2 + $0x520] sm:$0xff]
    %v1469 = vld [vmem:[#allocation2 + $0x528] sm:$0xff]
    %v1470 = vld [vmem:[#allocation2 + $0x530] sm:$0xff]
    %v1471 = vld [vmem:[#allocation2 + $0x538] sm:$0xff]
    %v1472 = vld [vmem:[#allocation2 + $0x540] sm:$0xff]
    %v1473 = vld [vmem:[#allocation2 + $0x548] sm:$0xff]
    %v1474 = vld [vmem:[#allocation2 + $0x550] sm:$0xff]
    %v1475 = vld [vmem:[#allocation2 + $0x558] sm:$0xff]
    %v1476 = vld [vmem:[#allocation2 + $0x560] sm:$0xff]
    %v1477 = vld [vmem:[#allocation2 + $0x568] sm:$0xff]
    %v1478 = vld [vmem:[#allocation2 + $0x570] sm:$0xff]
    %v1479 = vld [vmem:[#allocation2 + $0x578] sm:$0xff]
    %v1480 = vld [vmem:[#allocation2 + $0x580] sm:$0xff]
    %v1481 = vld [vmem:[#allocation2 + $0x588] sm:$0xff]
    %v1482 = vld [vmem:[#allocation2 + $0x590] sm:$0xff]
    %v1483 = vld [vmem:[#allocation2 + $0x598] sm:$0xff]
    %v1484 = vld [vmem:[#allocation2 + $0x5a0] sm:$0xff]
    %v1485 = vld [vmem:[#allocation2 + $0x5a8] sm:$0xff]
    %v1486 = vld [vmem:[#allocation2 + $0x5b0] sm:$0xff]
    %v1487 = vld [vmem:[#allocation2 + $0x5b8] sm:$0xff]
    %v1488 = vld [vmem:[#allocation2 + $0x5c0] sm:$0xff]
    %v1489 = vld [vmem:[#allocation2 + $0x5c8] sm:$0xff]
    %v1490 = vld [vmem:[#allocation2 + $0x5d0] sm:$0xff]
    %v1491 = vld [vmem:[#allocation2 + $0x5d8] sm:$0xff]
    %v1492 = vld [vmem:[#allocation2 + $0x5e0] sm:$0xff]
    %v1493 = vld [vmem:[#allocation2 + $0x5e8] sm:$0xff]
    %v1494 = vld [vmem:[#allocation2 + $0x5f0] sm:$0xff]
    %v1495 = vld [vmem:[#allocation2 + $0x5f8] sm:$0xff]
    %v1496 = vld [vmem:[#allocation2 + $0x600] sm:$0xff]
    %v1497 = vld [vmem:[#allocation2 + $0x608] sm:$0xff]
    %v1498 = vld [vmem:[#allocation2 + $0x610] sm:$0xff]
    %v1499 = vld [vmem:[#allocation2 + $0x618] sm:$0xff]
    %v1500 = vld [vmem:[#allocation2 + $0x620] sm:$0xff]
    %v1501 = vld [vmem:[#allocation2 + $0x628] sm:$0xff]
    %v1502 = vld [vmem:[#allocation2 + $0x630] sm:$0xff]
    %v1503 = vld [vmem:[#allocation2 + $0x638] sm:$0xff]
    %v1504 = vld [vmem:[#allocation2 + $0x640] sm:$0xff]
    %v1505 = vld [vmem:[#allocation2 + $0x648] sm:$0xff]
    %v1506 = vld [vmem:[#allocation2 + $0x650] sm:$0xff]
    %v1507 = vld [vmem:[#allocation2 + $0x658] sm:$0xff]
    %v1508 = vld [vmem:[#allocation2 + $0x660] sm:$0xff]
    %v1509 = vld [vmem:[#allocation2 + $0x668] sm:$0xff]
    %v1510 = vld [vmem:[#allocation2 + $0x670] sm:$0xff]
    %v1511 = vld [vmem:[#allocation2 + $0x678] sm:$0xff]
    %v1512 = vld [vmem:[#allocation2 + $0x680] sm:$0xff]
    %v1513 = vld [vmem:[#allocation2 + $0x688] sm:$0xff]
    %v1514 = vld [vmem:[#allocation2 + $0x690] sm:$0xff]
    %v1515 = vld [vmem:[#allocation2 + $0x698] sm:$0xff]
    %v1516 = vld [vmem:[#allocation2 + $0x6a0] sm:$0xff]
    %v1517 = vld [vmem:[#allocation2 + $0x6a8] sm:$0xff]
    %v1518 = vld [vmem:[#allocation2 + $0x6b0] sm:$0xff]
    %v1519 = vld [vmem:[#allocation2 + $0x6b8] sm:$0xff]
    %v1520 = vld [vmem:[#allocation2 + $0x6c0] sm:$0xff]
    %v1521 = vld [vmem:[#allocation2 + $0x6c8] sm:$0xff]
    %v1522 = vld [vmem:[#allocation2 + $0x6d0] sm:$0xff]
    %v1523 = vld [vmem:[#allocation2 + $0x6d8] sm:$0xff]
    %v1524 = vld [vmem:[#allocation2 + $0x6e0] sm:$0xff]
    %v1525 = vld [vmem:[#allocation2 + $0x6e8] sm:$0xff]
    %v1526 = vld [vmem:[#allocation2 + $0x6f0] sm:$0xff]
    %v1527 = vld [vmem:[#allocation2 + $0x6f8] sm:$0xff]
    %v1528 = vld [vmem:[#allocation2 + $0x700] sm:$0xff]
    %v1529 = vld [vmem:[#allocation2 + $0x708] sm:$0xff]
    %v1530 = vld [vmem:[#allocation2 + $0x710] sm:$0xff]
    %v1531 = vld [vmem:[#allocation2 + $0x718] sm:$0xff]
    %v1532 = vld [vmem:[#allocation2 + $0x720] sm:$0xff]
    %v1533 = vld [vmem:[#allocation2 + $0x728] sm:$0xff]
    %v1534 = vld [vmem:[#allocation2 + $0x730] sm:$0xff]
    %v1535 = vld [vmem:[#allocation2 + $0x738] sm:$0xff]
    %v1536 = vld [vmem:[#allocation2 + $0x740] sm:$0xff]
    %v1537 = vld [vmem:[#allocation2 + $0x748] sm:$0xff]
    %v1538 = vld [vmem:[#allocation2 + $0x750] sm:$0xff]
    %v1539 = vld [vmem:[#allocation2 + $0x758] sm:$0xff]
    %v1540 = vld [vmem:[#allocation2 + $0x760] sm:$0xff]
    %v1541 = vld [vmem:[#allocation2 + $0x768] sm:$0xff]
    %v1542 = vld [vmem:[#allocation2 + $0x770] sm:$0xff]
    %v1543 = vld [vmem:[#allocation2 + $0x778] sm:$0xff]
    %v1544 = vld [vmem:[#allocation2 + $0x780] sm:$0xff]
    %v1545 = vld [vmem:[#allocation2 + $0x788] sm:$0xff]
    %v1546 = vld [vmem:[#allocation2 + $0x790] sm:$0xff]
    %v1547 = vld [vmem:[#allocation2 + $0x798] sm:$0xff]
    %v1548 = vld [vmem:[#allocation2 + $0x7a0] sm:$0xff]
    %v1549 = vld [vmem:[#allocation2 + $0x7a8] sm:$0xff]
    %v1550 = vld [vmem:[#allocation2 + $0x7b0] sm:$0xff]
    %v1551 = vld [vmem:[#allocation2 + $0x7b8] sm:$0xff]
    %v1552 = vld [vmem:[#allocation2 + $0x7c0] sm:$0xff]
    %v1553 = vld [vmem:[#allocation2 + $0x7c8] sm:$0xff]
    %v1554 = vld [vmem:[#allocation2 + $0x7d0] sm:$0xff]
    %v1555 = vld [vmem:[#allocation2 + $0x7d8] sm:$0xff]
    %v1556 = vld [vmem:[#allocation2 + $0x7e0] sm:$0xff]
    %v1557 = vld [vmem:[#allocation2 + $0x7e8] sm:$0xff]
    %v1558 = vld [vmem:[#allocation2 + $0x7f0] sm:$0xff]
    %v1559 = vld [vmem:[#allocation2 + $0x7f8] sm:$0xff]
    %v1560 = vpack.c.bf16 %v1296, %v1296
    %v1561 = vpack.c.bf16 %v1297, %v1297
    %v1562 = vpack.c.bf16 %v1298, %v1298
    %v1563 = vpack.c.bf16 %v1299, %v1299
    %v1565 = vlaneseq
    %v1566 = vshrl.u32 %v1565, 7
    %v1567 = vsub.s32 0, %v1566
    %v1568 = vrot.slane %v237, %v1567
    %v1569 = vlaneseq
    %v1570 = vshrl.u32 %v1569, 7
    %v1571 = vsub.s32 1, %v1570
    %v1572 = vrot.slane %v237, %v1571
    %v1573 = vlaneseq
    %v1574 = vshrl.u32 %v1573, 7
    %v1575 = vsub.s32 2, %v1574
    %v1576 = vrot.slane %v237, %v1575
    %v1577 = vlaneseq
    %v1578 = vshrl.u32 %v1577, 7
    %v1579 = vsub.s32 3, %v1578
    %v1580 = vrot.slane %v237, %v1579
    %v1581 = vlaneseq
    %v1582 = vshrl.u32 %v1581, 7
    %v1583 = vsub.s32 4, %v1582
    %v1584 = vrot.slane %v237, %v1583
    %v1585 = vlaneseq
    %v1586 = vshrl.u32 %v1585, 7
    %v1587 = vsub.s32 5, %v1586
    %v1588 = vrot.slane %v237, %v1587
    %v1589 = vlaneseq
    %v1590 = vshrl.u32 %v1589, 7
    %v1591 = vsub.s32 6, %v1590
    %v1592 = vrot.slane %v237, %v1591
    %v1593 = vlaneseq
    %v1594 = vshrl.u32 %v1593, 7
    %v1595 = vsub.s32 7, %v1594
    %v1596 = vrot.slane %v237, %v1595
    %1605 = vmatprep.subr.bf16.mxu0 %v1305
    %1606 = vmatpush1.bf16.msra.mxu0 %v1304
    %1607 = vmatprep.subr.bf16.mxu0 %v1313
    %1608 = vmatpush1.bf16.msra.mxu0 %v1312
    %1609 = vmatprep.subr.bf16.mxu0 %v1321
    %1610 = vmatpush1.bf16.msra.mxu0 %v1320
    %1611 = vmatprep.subr.bf16.mxu0 %v1329
    %1612 = vmatpush1.bf16.msra.mxu0 %v1328
    %1613 = vmatprep.subr.bf16.mxu0 %v1337
    %1614 = vmatpush1.bf16.msra.mxu0 %v1336
    %1615 = vmatprep.subr.bf16.mxu0 %v1345
    %1616 = vmatpush1.bf16.msra.mxu0 %v1344
    %1617 = vmatprep.subr.bf16.mxu0 %v1353
    %1618 = vmatpush1.bf16.msra.mxu0 %v1352
    %1619 = vmatprep.subr.bf16.mxu0 %v1361
    %1620 = vmatpush1.bf16.msra.mxu0 %v1360
    %1621 = vmatprep.subr.bf16.mxu0 %v1369
    %1622 = vmatpush1.bf16.msra.mxu0 %v1368
    %1623 = vmatprep.subr.bf16.mxu0 %v1377
    %1624 = vmatpush1.bf16.msra.mxu0 %v1376
    %1625 = vmatprep.subr.bf16.mxu0 %v1385
    %1626 = vmatpush1.bf16.msra.mxu0 %v1384
    %1627 = vmatprep.subr.bf16.mxu0 %v1393
    %1628 = vmatpush1.bf16.msra.mxu0 %v1392
    %1629 = vmatprep.subr.bf16.mxu0 %v1401
    %1630 = vmatpush1.bf16.msra.mxu0 %v1400
    %1631 = vmatprep.subr.bf16.mxu0 %v1409
    %1632 = vmatpush1.bf16.msra.mxu0 %v1408
    %1633 = vmatprep.subr.bf16.mxu0 %v1417
    %1634 = vmatpush1.bf16.msra.mxu0 %v1416
    %1635 = vmatprep.subr.bf16.mxu0 %v1425
    %1636 = vmatpush1.bf16.msra.mxu0 %v1424
    %1637 = vmatprep.mubr.bf16.mxu0 %v1561
    %1638 = vmatmul.mubr.bf16.gmra.mrb[0].mxu0 %v1560
    %v1639 = vpop.f32.mrb[0].mxu0
    %v1640 = vadd.f32 %v1568, %v1639
    %v1641 = vpop.f32.mrb[0].mxu0
    %v1642 = vadd.f32 %v1572, %v1641
    %v1643 = vpop.f32.mrb[0].mxu0
    %v1644 = vpop.f32.mrb[0].mxu0
    %1645 = vdwg.mxu0
    %1646 = vmatprep.subr.bf16.mxu0 %v1433
    %1647 = vmatpush1.bf16.msra.mxu0 %v1432
    %1648 = vmatprep.subr.bf16.mxu0 %v1441
    %1649 = vmatpush1.bf16.msra.mxu0 %v1440
    %1650 = vmatprep.subr.bf16.mxu0 %v1449
    %1651 = vmatpush1.bf16.msra.mxu0 %v1448
    %1652 = vmatprep.subr.bf16.mxu0 %v1457
    %1653 = vmatpush1.bf16.msra.mxu0 %v1456
    %1654 = vmatprep.subr.bf16.mxu0 %v1465
    %1655 = vmatpush1.bf16.msra.mxu0 %v1464
    %1656 = vmatprep.subr.bf16.mxu0 %v1473
    %1657 = vmatpush1.bf16.msra.mxu0 %v1472
    %1658 = vmatprep.subr.bf16.mxu0 %v1481
    %1659 = vmatpush1.bf16.msra.mxu0 %v1480
    %1660 = vmatprep.subr.bf16.mxu0 %v1489
    %1661 = vmatpush1.bf16.msra.mxu0 %v1488
    %1662 = vmatprep.subr.bf16.mxu0 %v1497
    %1663 = vmatpush1.bf16.msra.mxu0 %v1496
    %1664 = vmatprep.subr.bf16.mxu0 %v1505
    %1665 = vmatpush1.bf16.msra.mxu0 %v1504
    %1666 = vmatprep.subr.bf16.mxu0 %v1513
    %1667 = vmatpush1.bf16.msra.mxu0 %v1512
    %1668 = vmatprep.subr.bf16.mxu0 %v1521
    %1669 = vmatpush1.bf16.msra.mxu0 %v1520
    %1670 = vmatprep.subr.bf16.mxu0 %v1529
    %1671 = vmatpush1.bf16.msra.mxu0 %v1528
    %1672 = vmatprep.subr.bf16.mxu0 %v1537
    %1673 = vmatpush1.bf16.msra.mxu0 %v1536
    %1674 = vmatprep.subr.bf16.mxu0 %v1545
    %1675 = vmatpush1.bf16.msra.mxu0 %v1544
    %1676 = vmatprep.subr.bf16.mxu0 %v1553
    %1677 = vmatpush1.bf16.msra.mxu0 %v1552
    %1678 = vmatprep.mubr.bf16.mxu0 %v1563
    %1679 = vmatmul.mubr.bf16.gmra.mrb[0].mxu0 %v1562
    %v1680 = vpop.f32.mrb[0].mxu0
    %v1681 = vadd.f32 %v1640, %v1680
    %v1682 = vpop.f32.mrb[0].mxu0
    %v1683 = vadd.f32 %v1642, %v1682
    %v1684 = vpop.f32.mrb[0].mxu0
    %v1685 = vpop.f32.mrb[0].mxu0
    %1686 = vdwg.mxu0
    %1687 = vmatprep.subr.bf16.mxu0 %v1307
    %1688 = vmatpush1.bf16.msra.mxu0 %v1306
    %1689 = vmatprep.subr.bf16.mxu0 %v1315
    %1690 = vmatpush1.bf16.msra.mxu0 %v1314
    %1691 = vmatprep.subr.bf16.mxu0 %v1323
    %1692 = vmatpush1.bf16.msra.mxu0 %v1322
    %1693 = vmatprep.subr.bf16.mxu0 %v1331
    %1694 = vmatpush1.bf16.msra.mxu0 %v1330
    %1695 = vmatprep.subr.bf16.mxu0 %v1339
    %1696 = vmatpush1.bf16.msra.mxu0 %v1338
    %1697 = vmatprep.subr.bf16.mxu0 %v1347
    %1698 = vmatpush1.bf16.msra.mxu0 %v1346
    %1699 = vmatprep.subr.bf16.mxu0 %v1355
    %1700 = vmatpush1.bf16.msra.mxu0 %v1354
    %1701 = vmatprep.subr.bf16.mxu0 %v1363
    %1702 = vmatpush1.bf16.msra.mxu0 %v1362
    %1703 = vmatprep.subr.bf16.mxu0 %v1371
    %1704 = vmatpush1.bf16.msra.mxu0 %v1370
    %1705 = vmatprep.subr.bf16.mxu0 %v1379
    %1706 = vmatpush1.bf16.msra.mxu0 %v1378
    %1707 = vmatprep.subr.bf16.mxu0 %v1387
    %1708 = vmatpush1.bf16.msra.mxu0 %v1386
    %1709 = vmatprep.subr.bf16.mxu0 %v1395
    %1710 = vmatpush1.bf16.msra.mxu0 %v1394
    %1711 = vmatprep.subr.bf16.mxu0 %v1403
    %1712 = vmatpush1.bf16.msra.mxu0 %v1402
    %1713 = vmatprep.subr.bf16.mxu0 %v1411
    %1714 = vmatpush1.bf16.msra.mxu0 %v1410
    %1715 = vmatprep.subr.bf16.mxu0 %v1419
    %1716 = vmatpush1.bf16.msra.mxu0 %v1418
    %1717 = vmatprep.subr.bf16.mxu0 %v1427
    %1718 = vmatpush1.bf16.msra.mxu0 %v1426
    %1719 = vmatprep.mubr.bf16.mxu0 %v1561
    %1720 = vmatmul.mubr.bf16.gmra.mrb[0].mxu0 %v1560
    %v1721 = vpop.f32.mrb[0].mxu0
    %v1722 = vadd.f32 %v1576, %v1721
    %v1723 = vpop.f32.mrb[0].mxu0
    %v1724 = vadd.f32 %v1580, %v1723
    %v1725 = vpop.f32.mrb[0].mxu0
    %v1726 = vpop.f32.mrb[0].mxu0
    %1727 = vdwg.mxu0
    %1728 = vmatprep.subr.bf16.mxu0 %v1435
    %1729 = vmatpush1.bf16.msra.mxu0 %v1434
    %1730 = vmatprep.subr.bf16.mxu0 %v1443
    %1731 = vmatpush1.bf16.msra.mxu0 %v1442
    %1732 = vmatprep.subr.bf16.mxu0 %v1451
    %1733 = vmatpush1.bf16.msra.mxu0 %v1450
    %1734 = vmatprep.subr.bf16.mxu0 %v1459
    %1735 = vmatpush1.bf16.msra.mxu0 %v1458
    %1736 = vmatprep.subr.bf16.mxu0 %v1467
    %1737 = vmatpush1.bf16.msra.mxu0 %v1466
    %1738 = vmatprep.subr.bf16.mxu0 %v1475
    %1739 = vmatpush1.bf16.msra.mxu0 %v1474
    %1740 = vmatprep.subr.bf16.mxu0 %v1483
    %1741 = vmatpush1.bf16.msra.mxu0 %v1482
    %1742 = vmatprep.subr.bf16.mxu0 %v1491
    %1743 = vmatpush1.bf16.msra.mxu0 %v1490
    %1744 = vmatprep.subr.bf16.mxu0 %v1499
    %1745 = vmatpush1.bf16.msra.mxu0 %v1498
    %1746 = vmatprep.subr.bf16.mxu0 %v1507
    %1747 = vmatpush1.bf16.msra.mxu0 %v1506
    %1748 = vmatprep.subr.bf16.mxu0 %v1515
    %1749 = vmatpush1.bf16.msra.mxu0 %v1514
    %1750 = vmatprep.subr.bf16.mxu0 %v1523
    %1751 = vmatpush1.bf16.msra.mxu0 %v1522
    %1752 = vmatprep.subr.bf16.mxu0 %v1531
    %1753 = vmatpush1.bf16.msra.mxu0 %v1530
    %1754 = vmatprep.subr.bf16.mxu0 %v1539
    %1755 = vmatpush1.bf16.msra.mxu0 %v1538
    %1756 = vmatprep.subr.bf16.mxu0 %v1547
    %1757 = vmatpush1.bf16.msra.mxu0 %v1546
    %1758 = vmatprep.subr.bf16.mxu0 %v1555
    %1759 = vmatpush1.bf16.msra.mxu0 %v1554
    %1760 = vmatprep.mubr.bf16.mxu0 %v1563
    %1761 = vmatmul.mubr.bf16.gmra.mrb[0].mxu0 %v1562
    %v1762 = vpop.f32.mrb[0].mxu0
    %v1763 = vadd.f32 %v1722, %v1762
    %v1764 = vpop.f32.mrb[0].mxu0
    %v1765 = vadd.f32 %v1724, %v1764
    %v1766 = vpop.f32.mrb[0].mxu0
    %v1767 = vpop.f32.mrb[0].mxu0
    %1768 = vdwg.mxu0
    %1769 = vmatprep.subr.bf16.mxu0 %v1309
    %1770 = vmatpush1.bf16.msra.mxu0 %v1308
    %1771 = vmatprep.subr.bf16.mxu0 %v1317
    %1772 = vmatpush1.bf16.msra.mxu0 %v1316
    %1773 = vmatprep.subr.bf16.mxu0 %v1325
    %1774 = vmatpush1.bf16.msra.mxu0 %v1324
    %1775 = vmatprep.subr.bf16.mxu0 %v1333
    %1776 = vmatpush1.bf16.msra.mxu0 %v1332
    %1777 = vmatprep.subr.bf16.mxu0 %v1341
    %1778 = vmatpush1.bf16.msra.mxu0 %v1340
    %1779 = vmatprep.subr.bf16.mxu0 %v1349
    %1780 = vmatpush1.bf16.msra.mxu0 %v1348
    %1781 = vmatprep.subr.bf16.mxu0 %v1357
    %1782 = vmatpush1.bf16.msra.mxu0 %v1356
    %1783 = vmatprep.subr.bf16.mxu0 %v1365
    %1784 = vmatpush1.bf16.msra.mxu0 %v1364
    %1785 = vmatprep.subr.bf16.mxu0 %v1373
    %1786 = vmatpush1.bf16.msra.mxu0 %v1372
    %1787 = vmatprep.subr.bf16.mxu0 %v1381
    %1788 = vmatpush1.bf16.msra.mxu0 %v1380
    %1789 = vmatprep.subr.bf16.mxu0 %v1389
    %1790 = vmatpush1.bf16.msra.mxu0 %v1388
    %1791 = vmatprep.subr.bf16.mxu0 %v1397
    %1792 = vmatpush1.bf16.msra.mxu0 %v1396
    %1793 = vmatprep.subr.bf16.mxu0 %v1405
    %1794 = vmatpush1.bf16.msra.mxu0 %v1404
    %1795 = vmatprep.subr.bf16.mxu0 %v1413
    %1796 = vmatpush1.bf16.msra.mxu0 %v1412
    %1797 = vmatprep.subr.bf16.mxu0 %v1421
    %1798 = vmatpush1.bf16.msra.mxu0 %v1420
    %1799 = vmatprep.subr.bf16.mxu0 %v1429
    %1800 = vmatpush1.bf16.msra.mxu0 %v1428
    %1801 = vmatprep.mubr.bf16.mxu0 %v1561
    %1802 = vmatmul.mubr.bf16.gmra.mrb[0].mxu0 %v1560
    %v1803 = vpop.f32.mrb[0].mxu0
    %v1804 = vadd.f32 %v1584, %v1803
    %v1805 = vpop.f32.mrb[0].mxu0
    %v1806 = vadd.f32 %v1588, %v1805
    %v1807 = vpop.f32.mrb[0].mxu0
    %v1808 = vpop.f32.mrb[0].mxu0
    %1809 = vdwg.mxu0
    %1810 = vmatprep.subr.bf16.mxu0 %v1437
    %1811 = vmatpush1.bf16.msra.mxu0 %v1436
    %1812 = vmatprep.subr.bf16.mxu0 %v1445
    %1813 = vmatpush1.bf16.msra.mxu0 %v1444
    %1814 = vmatprep.subr.bf16.mxu0 %v1453
    %1815 = vmatpush1.bf16.msra.mxu0 %v1452
    %1816 = vmatprep.subr.bf16.mxu0 %v1461
    %1817 = vmatpush1.bf16.msra.mxu0 %v1460
    %1818 = vmatprep.subr.bf16.mxu0 %v1469
    %1819 = vmatpush1.bf16.msra.mxu0 %v1468
    %1820 = vmatprep.subr.bf16.mxu0 %v1477
    %1821 = vmatpush1.bf16.msra.mxu0 %v1476
    %1822 = vmatprep.subr.bf16.mxu0 %v1485
    %1823 = vmatpush1.bf16.msra.mxu0 %v1484
    %1824 = vmatprep.subr.bf16.mxu0 %v1493
    %1825 = vmatpush1.bf16.msra.mxu0 %v1492
    %1826 = vmatprep.subr.bf16.mxu0 %v1501
    %1827 = vmatpush1.bf16.msra.mxu0 %v1500
    %1828 = vmatprep.subr.bf16.mxu0 %v1509
    %1829 = vmatpush1.bf16.msra.mxu0 %v1508
    %1830 = vmatprep.subr.bf16.mxu0 %v1517
    %1831 = vmatpush1.bf16.msra.mxu0 %v1516
    %1832 = vmatprep.subr.bf16.mxu0 %v1525
    %1833 = vmatpush1.bf16.msra.mxu0 %v1524
    %1834 = vmatprep.subr.bf16.mxu0 %v1533
    %1835 = vmatpush1.bf16.msra.mxu0 %v1532
    %1836 = vmatprep.subr.bf16.mxu0 %v1541
    %1837 = vmatpush1.bf16.msra.mxu0 %v1540
    %1838 = vmatprep.subr.bf16.mxu0 %v1549
    %1839 = vmatpush1.bf16.msra.mxu0 %v1548
    %1840 = vmatprep.subr.bf16.mxu0 %v1557
    %1841 = vmatpush1.bf16.msra.mxu0 %v1556
    %1842 = vmatprep.mubr.bf16.mxu0 %v1563
    %1843 = vmatmul.mubr.bf16.gmra.mrb[0].mxu0 %v1562
    %v1844 = vpop.f32.mrb[0].mxu0
    %v1845 = vadd.f32 %v1804, %v1844
    %v1846 = vpop.f32.mrb[0].mxu0
    %v1847 = vadd.f32 %v1806, %v1846
    %v1848 = vpop.f32.mrb[0].mxu0
    %v1849 = vpop.f32.mrb[0].mxu0
    %1850 = vdwg.mxu0
    %1851 = vmatprep.subr.bf16.mxu0 %v1311
    %1852 = vmatpush1.bf16.msra.mxu0 %v1310
    %1853 = vmatprep.subr.bf16.mxu0 %v1319
    %1854 = vmatpush1.bf16.msra.mxu0 %v1318
    %1855 = vmatprep.subr.bf16.mxu0 %v1327
    %1856 = vmatpush1.bf16.msra.mxu0 %v1326
    %1857 = vmatprep.subr.bf16.mxu0 %v1335
    %1858 = vmatpush1.bf16.msra.mxu0 %v1334
    %1859 = vmatprep.subr.bf16.mxu0 %v1343
    %1860 = vmatpush1.bf16.msra.mxu0 %v1342
    %1861 = vmatprep.subr.bf16.mxu0 %v1351
    %1862 = vmatpush1.bf16.msra.mxu0 %v1350
    %1863 = vmatprep.subr.bf16.mxu0 %v1359
    %1864 = vmatpush1.bf16.msra.mxu0 %v1358
    %1865 = vmatprep.subr.bf16.mxu0 %v1367
    %1866 = vmatpush1.bf16.msra.mxu0 %v1366
    %1867 = vmatprep.subr.bf16.mxu0 %v1375
    %1868 = vmatpush1.bf16.msra.mxu0 %v1374
    %1869 = vmatprep.subr.bf16.mxu0 %v1383
    %1870 = vmatpush1.bf16.msra.mxu0 %v1382
    %1871 = vmatprep.subr.bf16.mxu0 %v1391
    %1872 = vmatpush1.bf16.msra.mxu0 %v1390
    %1873 = vmatprep.subr.bf16.mxu0 %v1399
    %1874 = vmatpush1.bf16.msra.mxu0 %v1398
    %1875 = vmatprep.subr.bf16.mxu0 %v1407
    %1876 = vmatpush1.bf16.msra.mxu0 %v1406
    %1877 = vmatprep.subr.bf16.mxu0 %v1415
    %1878 = vmatpush1.bf16.msra.mxu0 %v1414
    %1879 = vmatprep.subr.bf16.mxu0 %v1423
    %1880 = vmatpush1.bf16.msra.mxu0 %v1422
    %1881 = vmatprep.subr.bf16.mxu0 %v1431
    %1882 = vmatpush1.bf16.msra.mxu0 %v1430
    %1883 = vmatprep.mubr.bf16.mxu0 %v1561
    %1884 = vmatmul.mubr.bf16.gmra.mrb[0].mxu0 %v1560
    %v1885 = vpop.f32.mrb[0].mxu0
    %v1886 = vadd.f32 %v1592, %v1885
    %v1887 = vpop.f32.mrb[0].mxu0
    %v1888 = vadd.f32 %v1596, %v1887
    %v1889 = vpop.f32.mrb[0].mxu0
    %v1890 = vpop.f32.mrb[0].mxu0
    %1891 = vdwg.mxu0
    %1892 = vmatprep.subr.bf16.mxu0 %v1439
    %1893 = vmatpush1.bf16.msra.mxu0 %v1438
    %1894 = vmatprep.subr.bf16.mxu0 %v1447
    %1895 = vmatpush1.bf16.msra.mxu0 %v1446
    %1896 = vmatprep.subr.bf16.mxu0 %v1455
    %1897 = vmatpush1.bf16.msra.mxu0 %v1454
    %1898 = vmatprep.subr.bf16.mxu0 %v1463
    %1899 = vmatpush1.bf16.msra.mxu0 %v1462
    %1900 = vmatprep.subr.bf16.mxu0 %v1471
    %1901 = vmatpush1.bf16.msra.mxu0 %v1470
    %1902 = vmatprep.subr.bf16.mxu0 %v1479
    %1903 = vmatpush1.bf16.msra.mxu0 %v1478
    %1904 = vmatprep.subr.bf16.mxu0 %v1487
    %1905 = vmatpush1.bf16.msra.mxu0 %v1486
    %1906 = vmatprep.subr.bf16.mxu0 %v1495
    %1907 = vmatpush1.bf16.msra.mxu0 %v1494
    %1908 = vmatprep.subr.bf16.mxu0 %v1503
    %1909 = vmatpush1.bf16.msra.mxu0 %v1502
    %1910 = vmatprep.subr.bf16.mxu0 %v1511
    %1911 = vmatpush1.bf16.msra.mxu0 %v1510
    %1912 = vmatprep.subr.bf16.mxu0 %v1519
    %1913 = vmatpush1.bf16.msra.mxu0 %v1518
    %1914 = vmatprep.subr.bf16.mxu0 %v1527
    %1915 = vmatpush1.bf16.msra.mxu0 %v1526
    %1916 = vmatprep.subr.bf16.mxu0 %v1535
    %1917 = vmatpush1.bf16.msra.mxu0 %v1534
    %1918 = vmatprep.subr.bf16.mxu0 %v1543
    %1919 = vmatpush1.bf16.msra.mxu0 %v1542
    %1920 = vmatprep.subr.bf16.mxu0 %v1551
    %1921 = vmatpush1.bf16.msra.mxu0 %v1550
    %1922 = vmatprep.subr.bf16.mxu0 %v1559
    %1923 = vmatpush1.bf16.msra.mxu0 %v1558
    %1924 = vmatprep.mubr.bf16.mxu0 %v1563
    %1925 = vmatmul.mubr.bf16.gmra.mrb[0].mxu0 %v1562
    %v1926 = vpop.f32.mrb[0].mxu0
    %v1927 = vadd.f32 %v1886, %v1926
    %v1928 = vpop.f32.mrb[0].mxu0
    %v1929 = vadd.f32 %v1888, %v1928
    %v1930 = vpop.f32.mrb[0].mxu0
    %v1931 = vpop.f32.mrb[0].mxu0
    %1932 = vdwg.mxu0
    %v1933 = vrot.slane %v1681, 4
    %v1934 = vadd.f32 %v1681, %v1933
    %v1935 = vrot.slane %v1934, 2
    %v1936 = vadd.f32 %v1934, %v1935
    %v1937 = vrot.slane %v1936, 1
    %v1938 = vadd.f32 %v1936, %v1937
    %v1939 = vrot.slane %v1683, 4
    %v1940 = vadd.f32 %v1683, %v1939
    %v1941 = vrot.slane %v1940, 2
    %v1942 = vadd.f32 %v1940, %v1941
    %v1943 = vrot.slane %v1942, 1
    %v1944 = vadd.f32 %v1942, %v1943
    %v1945 = vrot.slane %v1763, 4
    %v1946 = vadd.f32 %v1763, %v1945
    %v1947 = vrot.slane %v1946, 2
    %v1948 = vadd.f32 %v1946, %v1947
    %v1949 = vrot.slane %v1948, 1
    %v1950 = vadd.f32 %v1948, %v1949
    %v1951 = vrot.slane %v1765, 4
    %v1952 = vadd.f32 %v1765, %v1951
    %v1953 = vrot.slane %v1952, 2
    %v1954 = vadd.f32 %v1952, %v1953
    %v1955 = vrot.slane %v1954, 1
    %v1956 = vadd.f32 %v1954, %v1955
    %v1957 = vrot.slane %v1845, 4
    %v1958 = vadd.f32 %v1845, %v1957
    %v1959 = vrot.slane %v1958, 2
    %v1960 = vadd.f32 %v1958, %v1959
    %v1961 = vrot.slane %v1960, 1
    %v1962 = vadd.f32 %v1960, %v1961
    %v1963 = vrot.slane %v1847, 4
    %v1964 = vadd.f32 %v1847, %v1963
    %v1965 = vrot.slane %v1964, 2
    %v1966 = vadd.f32 %v1964, %v1965
    %v1967 = vrot.slane %v1966, 1
    %v1968 = vadd.f32 %v1966, %v1967
    %v1969 = vrot.slane %v1927, 4
    %v1970 = vadd.f32 %v1927, %v1969
    %v1971 = vrot.slane %v1970, 2
    %v1972 = vadd.f32 %v1970, %v1971
    %v1973 = vrot.slane %v1972, 1
    %v1974 = vadd.f32 %v1972, %v1973
    %v1975 = vrot.slane %v1929, 4
    %v1976 = vadd.f32 %v1929, %v1975
    %v1977 = vrot.slane %v1976, 2
    %v1978 = vadd.f32 %v1976, %v1977
    %v1979 = vrot.slane %v1978, 1
    %v1980 = vadd.f32 %v1978, %v1979
    %v1981 = vmul.f32 %v1938, %v516
    %v1982 = vmul.f32 %v1944, %v516
    %v1983 = vmul.f32 %v1950, %v516
    %v1984 = vmul.f32 %v1956, %v516
    %v1985 = vmul.f32 %v1962, %v516
    %v1986 = vmul.f32 %v1968, %v516
    %v1987 = vmul.f32 %v1974, %v516
    %v1988 = vmul.f32 %v1980, %v516
    %v1989 = vmul.f32 %v1681, %v1681
    %v1990 = vmul.f32 %v1683, %v1683
    %v1991 = vmul.f32 %v1763, %v1763
    %v1992 = vmul.f32 %v1765, %v1765
    %v1993 = vmul.f32 %v1845, %v1845
    %v1994 = vmul.f32 %v1847, %v1847
    %v1995 = vmul.f32 %v1927, %v1927
    %v1996 = vmul.f32 %v1929, %v1929
    %v1997 = vrot.slane %v1989, 4
    %v1998 = vadd.f32 %v1989, %v1997
    %v1999 = vrot.slane %v1998, 2
    %v2000 = vadd.f32 %v1998, %v1999
    %v2001 = vrot.slane %v2000, 1
    %v2002 = vadd.f32 %v2000, %v2001
    %v2003 = vrot.slane %v1990, 4
    %v2004 = vadd.f32 %v1990, %v2003
    %v2005 = vrot.slane %v2004, 2
    %v2006 = vadd.f32 %v2004, %v2005
    %v2007 = vrot.slane %v2006, 1
    %v2008 = vadd.f32 %v2006, %v2007
    %v2009 = vrot.slane %v1991, 4
    %v2010 = vadd.f32 %v1991, %v2009
    %v2011 = vrot.slane %v2010, 2
    %v2012 = vadd.f32 %v2010, %v2011
    %v2013 = vrot.slane %v2012, 1
    %v2014 = vadd.f32 %v2012, %v2013
    %v2015 = vrot.slane %v1992, 4
    %v2016 = vadd.f32 %v1992, %v2015
    %v2017 = vrot.slane %v2016, 2
    %v2018 = vadd.f32 %v2016, %v2017
    %v2019 = vrot.slane %v2018, 1
    %v2020 = vadd.f32 %v2018, %v2019
    %v2021 = vrot.slane %v1993, 4
    %v2022 = vadd.f32 %v1993, %v2021
    %v2023 = vrot.slane %v2022, 2
    %v2024 = vadd.f32 %v2022, %v2023
    %v2025 = vrot.slane %v2024, 1
    %v2026 = vadd.f32 %v2024, %v2025
    %v2027 = vrot.slane %v1994, 4
    %v2028 = vadd.f32 %v1994, %v2027
    %v2029 = vrot.slane %v2028, 2
    %v2030 = vadd.f32 %v2028, %v2029
    %v2031 = vrot.slane %v2030, 1
    %v2032 = vadd.f32 %v2030, %v2031
    %v2033 = vrot.slane %v1995, 4
    %v2034 = vadd.f32 %v1995, %v2033
    %v2035 = vrot.slane %v2034, 2
    %v2036 = vadd.f32 %v2034, %v2035
    %v2037 = vrot.slane %v2036, 1
    %v2038 = vadd.f32 %v2036, %v2037
    %v2039 = vrot.slane %v1996, 4
    %v2040 = vadd.f32 %v1996, %v2039
    %v2041 = vrot.slane %v2040, 2
    %v2042 = vadd.f32 %v2040, %v2041
    %v2043 = vrot.slane %v2042, 1
    %v2044 = vadd.f32 %v2042, %v2043
    %v2045 = vmul.f32 %v2002, %v516
    %v2046 = vmul.f32 %v2008, %v516
    %v2047 = vmul.f32 %v2014, %v516
    %v2048 = vmul.f32 %v2020, %v516
    %v2049 = vmul.f32 %v2026, %v516
    %v2050 = vmul.f32 %v2032, %v516
    %v2051 = vmul.f32 %v2038, %v516
    %v2052 = vmul.f32 %v2044, %v516
    %v2053 = vmul.f32 %v1981, %v1981
    %v2054 = vmul.f32 %v1982, %v1982
    %v2055 = vmul.f32 %v1983, %v1983
    %v2056 = vmul.f32 %v1984, %v1984
    %v2057 = vmul.f32 %v1985, %v1985
    %v2058 = vmul.f32 %v1986, %v1986
    %v2059 = vmul.f32 %v1987, %v1987
    %v2060 = vmul.f32 %v1988, %v1988
    %v2061 = vsub.f32 %v2045, %v2053
    %v2062 = vsub.f32 %v2046, %v2054
    %v2063 = vsub.f32 %v2047, %v2055
    %v2064 = vsub.f32 %v2048, %v2056
    %v2065 = vsub.f32 %v2049, %v2057
    %v2066 = vsub.f32 %v2050, %v2058
    %v2067 = vsub.f32 %v2051, %v2059
    %v2068 = vsub.f32 %v2052, %v2060
    %v2069 = vadd.f32 %v2061, 0.8
    %v2070 = vadd.f32 %v2062, 0.8
    %v2071 = vadd.f32 %v2063, 0.8
    %v2072 = vadd.f32 %v2064, 0.8
    %v2073 = vadd.f32 %v2065, 0.8
    %v2074 = vadd.f32 %v2066, 0.8
    %v2075 = vadd.f32 %v2067, 0.8
    %v2076 = vadd.f32 %v2068, 0.8
    %v2077 = vrsqrt.pop %v2069
    %v2078 = vrsqrt.pop %v2070
    %v2079 = vrsqrt.pop %v2071
    %v2080 = vrsqrt.pop %v2072
    %v2081 = vrsqrt.pop %v2073
    %v2082 = vrsqrt.pop %v2074
    %v2083 = vrsqrt.pop %v2075
    %v2084 = vrsqrt.pop %v2076
    %v2093 = vcombine.low %v2077, %v2078
    %v2094 = vcombine.low %v2079, %v2080
    %v2095 = vcombine.low %v2081, %v2082
    %v2096 = vcombine.low %v2083, %v2084
    %v2098 = vunpack.c.l.s4 1966171168
    %v2099 = vunpack.c.0.s8 %v2098
    %v2100 = vlaneseq
    %v2101 = vshrl.u32 %v2100, 7
    %v2102 = vsub.s32 %v2099, %v2101
    %v2103 = vrot.slane %v2093, %v2102
    %v2105 = vunpack.c.l.s4 1966171168
    %v2106 = vunpack.c.0.s8 %v2105
    %v2107 = vlaneseq
    %v2108 = vshrl.u32 %v2107, 7
    %v2109 = vsub.s32 %v2106, %v2108
    %v2110 = vrot.slane %v2094, %v2109
    %v2112 = vunpack.c.l.s4 1966171168
    %v2113 = vunpack.c.0.s8 %v2112
    %v2114 = vlaneseq
    %v2115 = vshrl.u32 %v2114, 7
    %v2116 = vsub.s32 %v2113, %v2115
    %v2117 = vrot.slane %v2095, %v2116
    %v2119 = vunpack.c.l.s4 1966171168
    %v2120 = vunpack.c.0.s8 %v2119
    %v2121 = vlaneseq
    %v2122 = vshrl.u32 %v2121, 7
    %v2123 = vsub.s32 %v2120, %v2122
    %v2124 = vrot.slane %v2096, %v2123
    %v2125 = vcombine.low %v2103, %v2110
    %v2126 = vcombine.low %v2117, %v2124
    %v2128 = vunpack.c.l.s4 1966171168
    %v2129 = vunpack.c.0.s8 %v2128
    %v2130 = vlaneseq
    %v2131 = vshrl.u32 %v2130, 7
    %v2132 = vsub.s32 %v2129, %v2131
    %v2133 = vrot.slane %v2125, %v2132
    %v2135 = vunpack.c.l.s4 1966171168
    %v2136 = vunpack.c.0.s8 %v2135
    %v2137 = vlaneseq
    %v2138 = vshrl.u32 %v2137, 7
    %v2139 = vsub.s32 %v2136, %v2138
    %v2140 = vrot.slane %v2126, %v2139
    %v2141 = vcombine.low %v2133, %v2140
    %v2143 = vmul.f32 %v238, %v2141
    %v2145 = vlaneseq
    %v2146 = vshrl.u32 %v2145, 7
    %v2147 = vsub.s32 0, %v2146
    %v2148 = vrot.slane %v2143, %v2147
    %v2149 = vlaneseq
    %v2150 = vshrl.u32 %v2149, 7
    %v2151 = vsub.s32 1, %v2150
    %v2152 = vrot.slane %v2143, %v2151
    %v2153 = vlaneseq
    %v2154 = vshrl.u32 %v2153, 7
    %v2155 = vsub.s32 2, %v2154
    %v2156 = vrot.slane %v2143, %v2155
    %v2157 = vlaneseq
    %v2158 = vshrl.u32 %v2157, 7
    %v2159 = vsub.s32 3, %v2158
    %v2160 = vrot.slane %v2143, %v2159
    %v2161 = vlaneseq
    %v2162 = vshrl.u32 %v2161, 7
    %v2163 = vsub.s32 4, %v2162
    %v2164 = vrot.slane %v2143, %v2163
    %v2165 = vlaneseq
    %v2166 = vshrl.u32 %v2165, 7
    %v2167 = vsub.s32 5, %v2166
    %v2168 = vrot.slane %v2143, %v2167
    %v2169 = vlaneseq
    %v2170 = vshrl.u32 %v2169, 7
    %v2171 = vsub.s32 6, %v2170
    %v2172 = vrot.slane %v2143, %v2171
    %v2173 = vlaneseq
    %v2174 = vshrl.u32 %v2173, 7
    %v2175 = vsub.s32 7, %v2174
    %v2176 = vrot.slane %v2143, %v2175
    %v2185 = vmul.f32 %v1981, %v2148
    %v2186 = vmul.f32 %v1982, %v2152
    %v2187 = vmul.f32 %v1983, %v2156
    %v2188 = vmul.f32 %v1984, %v2160
    %v2189 = vmul.f32 %v1985, %v2164
    %v2190 = vmul.f32 %v1986, %v2168
    %v2191 = vmul.f32 %v1987, %v2172
    %v2192 = vmul.f32 %v1988, %v2176
    %v2201 = vcombine.low %v2185, %v2186
    %v2202 = vcombine.low %v2187, %v2188
    %v2203 = vcombine.low %v2189, %v2190
    %v2204 = vcombine.low %v2191, %v2192
    %v2206 = vunpack.c.l.s4 1966171168
    %v2207 = vunpack.c.0.s8 %v2206
    %v2208 = vlaneseq
    %v2209 = vshrl.u32 %v2208, 7
    %v2210 = vsub.s32 %v2207, %v2209
    %v2211 = vrot.slane %v2201, %v2210
    %v2213 = vunpack.c.l.s4 1966171168
    %v2214 = vunpack.c.0.s8 %v2213
    %v2215 = vlaneseq
    %v2216 = vshrl.u32 %v2215, 7
    %v2217 = vsub.s32 %v2214, %v2216
    %v2218 = vrot.slane %v2202, %v2217
    %v2220 = vunpack.c.l.s4 1966171168
    %v2221 = vunpack.c.0.s8 %v2220
    %v2222 = vlaneseq
    %v2223 = vshrl.u32 %v2222, 7
    %v2224 = vsub.s32 %v2221, %v2223
    %v2225 = vrot.slane %v2203, %v2224
    %v2227 = vunpack.c.l.s4 1966171168
    %v2228 = vunpack.c.0.s8 %v2227
    %v2229 = vlaneseq
    %v2230 = vshrl.u32 %v2229, 7
    %v2231 = vsub.s32 %v2228, %v2230
    %v2232 = vrot.slane %v2204, %v2231
    %v2233 = vcombine.low %v2211, %v2218
    %v2234 = vcombine.low %v2225, %v2232
    %v2236 = vunpack.c.l.s4 1966171168
    %v2237 = vunpack.c.0.s8 %v2236
    %v2238 = vlaneseq
    %v2239 = vshrl.u32 %v2238, 7
    %v2240 = vsub.s32 %v2237, %v2239
    %v2241 = vrot.slane %v2233, %v2240
    %v2243 = vunpack.c.l.s4 1966171168
    %v2244 = vunpack.c.0.s8 %v2243
    %v2245 = vlaneseq
    %v2246 = vshrl.u32 %v2245, 7
    %v2247 = vsub.s32 %v2244, %v2246
    %v2248 = vrot.slane %v2234, %v2247
    %v2249 = vcombine.low %v2241, %v2248
    %v2251 = vsub.f32 %v239, %v2249
    %v2252 = vmul.f32 %v1681, %v2148
    %v2253 = vmul.f32 %v1683, %v2152
    %v2254 = vmul.f32 %v1763, %v2156
    %v2255 = vmul.f32 %v1765, %v2160
    %v2256 = vmul.f32 %v1845, %v2164
    %v2257 = vmul.f32 %v1847, %v2168
    %v2258 = vmul.f32 %v1927, %v2172
    %v2259 = vmul.f32 %v1929, %v2176
    %v2261 = vlaneseq
    %v2262 = vshrl.u32 %v2261, 7
    %v2263 = vsub.s32 0, %v2262
    %v2264 = vrot.slane %v2251, %v2263
    %v2265 = vlaneseq
    %v2266 = vshrl.u32 %v2265, 7
    %v2267 = vsub.s32 1, %v2266
    %v2268 = vrot.slane %v2251, %v2267
    %v2269 = vlaneseq
    %v2270 = vshrl.u32 %v2269, 7
    %v2271 = vsub.s32 2, %v2270
    %v2272 = vrot.slane %v2251, %v2271
    %v2273 = vlaneseq
    %v2274 = vshrl.u32 %v2273, 7
    %v2275 = vsub.s32 3, %v2274
    %v2276 = vrot.slane %v2251, %v2275
    %v2277 = vlaneseq
    %v2278 = vshrl.u32 %v2277, 7
    %v2279 = vsub.s32 4, %v2278
    %v2280 = vrot.slane %v2251, %v2279
    %v2281 = vlaneseq
    %v2282 = vshrl.u32 %v2281, 7
    %v2283 = vsub.s32 5, %v2282
    %v2284 = vrot.slane %v2251, %v2283
    %v2285 = vlaneseq
    %v2286 = vshrl.u32 %v2285, 7
    %v2287 = vsub.s32 6, %v2286
    %v2288 = vrot.slane %v2251, %v2287
    %v2289 = vlaneseq
    %v2290 = vshrl.u32 %v2289, 7
    %v2291 = vsub.s32 7, %v2290
    %v2292 = vrot.slane %v2251, %v2291
    %v2301 = vadd.f32 %v2252, %v2264
    %v2302 = vadd.f32 %v2253, %v2268
    %v2303 = vadd.f32 %v2254, %v2272
    %v2304 = vadd.f32 %v2255, %v2276
    %v2305 = vadd.f32 %v2256, %v2280
    %v2306 = vadd.f32 %v2257, %v2284
    %v2307 = vadd.f32 %v2258, %v2288
    %v2308 = vadd.f32 %v2259, %v2292
    %v2309 = vmul.f32 %v2301, 0.2
    %v2310 = vmul.f32 %v2302, 0.2
    %v2311 = vmul.f32 %v2303, 0.2
    %v2312 = vmul.f32 %v2304, 0.2
    %v2313 = vmul.f32 %v2305, 0.2
    %v2314 = vmul.f32 %v2306, 0.2
    %v2315 = vmul.f32 %v2307, 0.2
    %v2316 = vmul.f32 %v2308, 0.2
    %v2317 = vmax.f32 %v2301, %v2309
    %v2318 = vmax.f32 %v2302, %v2310
    %v2319 = vmax.f32 %v2303, %v2311
    %v2320 = vmax.f32 %v2304, %v2312
    %v2321 = vmax.f32 %v2305, %v2313
    %v2322 = vmax.f32 %v2306, %v2314
    %v2323 = vmax.f32 %v2307, %v2315
    %v2324 = vmax.f32 %v2308, %v2316
    %s2325 = smul.u32 4, 128
    %s2326 = smul.u32 %s2325, 1
    %s2327 = sshll.u32 %s2326, 4
    %2328 = dma.done %s61, %s2327
    %v2329 = vld [vmem:[#allocation3] sm:$0xff]
    %v2330 = vld [vmem:[#allocation3 + $0x8] sm:$0xff]
    %v2331 = vld [vmem:[#allocation3 + $0x10] sm:$0xff]
    %v2332 = vld [vmem:[#allocation3 + $0x18] sm:$0xff]
    %v2333 = vld [vmem:[#allocation3 + $0x20] sm:$0xff]
    %v2334 = vld [vmem:[#allocation3 + $0x28] sm:$0xff]
    %v2335 = vld [vmem:[#allocation3 + $0x30] sm:$0xff]
    %v2336 = vld [vmem:[#allocation3 + $0x38] sm:$0xff]
    %v2337 = vld [vmem:[#allocation3 + $0x40] sm:$0xff]
    %v2338 = vld [vmem:[#allocation3 + $0x48] sm:$0xff]
    %v2339 = vld [vmem:[#allocation3 + $0x50] sm:$0xff]
    %v2340 = vld [vmem:[#allocation3 + $0x58] sm:$0xff]
    %v2341 = vld [vmem:[#allocation3 + $0x60] sm:$0xff]
    %v2342 = vld [vmem:[#allocation3 + $0x68] sm:$0xff]
    %v2343 = vld [vmem:[#allocation3 + $0x70] sm:$0xff]
    %v2344 = vld [vmem:[#allocation3 + $0x78] sm:$0xff]
    %v2345 = vld [vmem:[#allocation3 + $0x80] sm:$0xff]
    %v2346 = vld [vmem:[#allocation3 + $0x88] sm:$0xff]
    %v2347 = vld [vmem:[#allocation3 + $0x90] sm:$0xff]
    %v2348 = vld [vmem:[#allocation3 + $0x98] sm:$0xff]
    %v2349 = vld [vmem:[#allocation3 + $0xa0] sm:$0xff]
    %v2350 = vld [vmem:[#allocation3 + $0xa8] sm:$0xff]
    %v2351 = vld [vmem:[#allocation3 + $0xb0] sm:$0xff]
    %v2352 = vld [vmem:[#allocation3 + $0xb8] sm:$0xff]
    %v2353 = vld [vmem:[#allocation3 + $0xc0] sm:$0xff]
    %v2354 = vld [vmem:[#allocation3 + $0xc8] sm:$0xff]
    %v2355 = vld [vmem:[#allocation3 + $0xd0] sm:$0xff]
    %v2356 = vld [vmem:[#allocation3 + $0xd8] sm:$0xff]
    %v2357 = vld [vmem:[#allocation3 + $0xe0] sm:$0xff]
    %v2358 = vld [vmem:[#allocation3 + $0xe8] sm:$0xff]
    %v2359 = vld [vmem:[#allocation3 + $0xf0] sm:$0xff]
    %v2360 = vld [vmem:[#allocation3 + $0xf8] sm:$0xff]
    %v2361 = vld [vmem:[#allocation3 + $0x100] sm:$0xff]
    %v2362 = vld [vmem:[#allocation3 + $0x108] sm:$0xff]
    %v2363 = vld [vmem:[#allocation3 + $0x110] sm:$0xff]
    %v2364 = vld [vmem:[#allocation3 + $0x118] sm:$0xff]
    %v2365 = vld [vmem:[#allocation3 + $0x120] sm:$0xff]
    %v2366 = vld [vmem:[#allocation3 + $0x128] sm:$0xff]
    %v2367 = vld [vmem:[#allocation3 + $0x130] sm:$0xff]
    %v2368 = vld [vmem:[#allocation3 + $0x138] sm:$0xff]
    %v2369 = vld [vmem:[#allocation3 + $0x140] sm:$0xff]
    %v2370 = vld [vmem:[#allocation3 + $0x148] sm:$0xff]
    %v2371 = vld [vmem:[#allocation3 + $0x150] sm:$0xff]
    %v2372 = vld [vmem:[#allocation3 + $0x158] sm:$0xff]
    %v2373 = vld [vmem:[#allocation3 + $0x160] sm:$0xff]
    %v2374 = vld [vmem:[#allocation3 + $0x168] sm:$0xff]
    %v2375 = vld [vmem:[#allocation3 + $0x170] sm:$0xff]
    %v2376 = vld [vmem:[#allocation3 + $0x178] sm:$0xff]
    %v2377 = vld [vmem:[#allocation3 + $0x180] sm:$0xff]
    %v2378 = vld [vmem:[#allocation3 + $0x188] sm:$0xff]
    %v2379 = vld [vmem:[#allocation3 + $0x190] sm:$0xff]
    %v2380 = vld [vmem:[#allocation3 + $0x198] sm:$0xff]
    %v2381 = vld [vmem:[#allocation3 + $0x1a0] sm:$0xff]
    %v2382 = vld [vmem:[#allocation3 + $0x1a8] sm:$0xff]
    %v2383 = vld [vmem:[#allocation3 + $0x1b0] sm:$0xff]
    %v2384 = vld [vmem:[#allocation3 + $0x1b8] sm:$0xff]
    %v2385 = vld [vmem:[#allocation3 + $0x1c0] sm:$0xff]
    %v2386 = vld [vmem:[#allocation3 + $0x1c8] sm:$0xff]
    %v2387 = vld [vmem:[#allocation3 + $0x1d0] sm:$0xff]
    %v2388 = vld [vmem:[#allocation3 + $0x1d8] sm:$0xff]
    %v2389 = vld [vmem:[#allocation3 + $0x1e0] sm:$0xff]
    %v2390 = vld [vmem:[#allocation3 + $0x1e8] sm:$0xff]
    %v2391 = vld [vmem:[#allocation3 + $0x1f0] sm:$0xff]
    %v2392 = vld [vmem:[#allocation3 + $0x1f8] sm:$0xff]
    %v2393 = vpack.c.bf16 %v2317, %v2317
    %v2394 = vpack.c.bf16 %v2318, %v2318
    %v2395 = vpack.c.bf16 %v2319, %v2319
    %v2396 = vpack.c.bf16 %v2320, %v2320
    %v2397 = vpack.c.bf16 %v2321, %v2321
    %v2398 = vpack.c.bf16 %v2322, %v2322
    %v2399 = vpack.c.bf16 %v2323, %v2323
    %v2400 = vpack.c.bf16 %v2324, %v2324
    %v2402 = vlaneseq
    %v2403 = vshrl.u32 %v2402, 7
    %v2404 = vsub.s32 0, %v2403
    %v2405 = vrot.slane %v240, %v2404
    %2407 = vmatprep.subr.bf16.mxu0 0
    %2408 = vmatpush1.bf16.msra.mxu0 %v2329
    %2409 = vmatprep.subr.bf16.mxu0 0
    %2410 = vmatpush1.bf16.msra.mxu0 %v2330
    %2411 = vmatprep.subr.bf16.mxu0 0
    %2412 = vmatpush1.bf16.msra.mxu0 %v2331
    %2413 = vmatprep.subr.bf16.mxu0 0
    %2414 = vmatpush1.bf16.msra.mxu0 %v2332
    %2415 = vmatprep.subr.bf16.mxu0 0
    %2416 = vmatpush1.bf16.msra.mxu0 %v2333
    %2417 = vmatprep.subr.bf16.mxu0 0
    %2418 = vmatpush1.bf16.msra.mxu0 %v2334
    %2419 = vmatprep.subr.bf16.mxu0 0
    %2420 = vmatpush1.bf16.msra.mxu0 %v2335
    %2421 = vmatprep.subr.bf16.mxu0 0
    %2422 = vmatpush1.bf16.msra.mxu0 %v2336
    %2423 = vmatprep.subr.bf16.mxu0 0
    %2424 = vmatpush1.bf16.msra.mxu0 %v2337
    %2425 = vmatprep.subr.bf16.mxu0 0
    %2426 = vmatpush1.bf16.msra.mxu0 %v2338
    %2427 = vmatprep.subr.bf16.mxu0 0
    %2428 = vmatpush1.bf16.msra.mxu0 %v2339
    %2429 = vmatprep.subr.bf16.mxu0 0
    %2430 = vmatpush1.bf16.msra.mxu0 %v2340
    %2431 = vmatprep.subr.bf16.mxu0 0
    %2432 = vmatpush1.bf16.msra.mxu0 %v2341
    %2433 = vmatprep.subr.bf16.mxu0 0
    %2434 = vmatpush1.bf16.msra.mxu0 %v2342
    %2435 = vmatprep.subr.bf16.mxu0 0
    %2436 = vmatpush1.bf16.msra.mxu0 %v2343
    %2437 = vmatprep.subr.bf16.mxu0 0
    %2438 = vmatpush1.bf16.msra.mxu0 %v2344
    %2439 = vmatprep.mubr.bf16.mxu0 %v2394
    %2440 = vmatmul.mubr.bf16.gmra.mrb[0].mxu0 %v2393
    %v2441 = vpop.f32.mrb[0].mxu0
    %v2442 = vadd.f32 %v2405, %v2441
    %v2443 = vpop.f32.mrb[0].mxu0
    %v2444 = vpop.f32.mrb[0].mxu0
    %v2445 = vpop.f32.mrb[0].mxu0
    %2446 = vdwg.mxu0
    %2447 = vmatprep.subr.bf16.mxu0 0
    %2448 = vmatpush1.bf16.msra.mxu0 %v2345
    %2449 = vmatprep.subr.bf16.mxu0 0
    %2450 = vmatpush1.bf16.msra.mxu0 %v2346
    %2451 = vmatprep.subr.bf16.mxu0 0
    %2452 = vmatpush1.bf16.msra.mxu0 %v2347
    %2453 = vmatprep.subr.bf16.mxu0 0
    %2454 = vmatpush1.bf16.msra.mxu0 %v2348
    %2455 = vmatprep.subr.bf16.mxu0 0
    %2456 = vmatpush1.bf16.msra.mxu0 %v2349
    %2457 = vmatprep.subr.bf16.mxu0 0
    %2458 = vmatpush1.bf16.msra.mxu0 %v2350
    %2459 = vmatprep.subr.bf16.mxu0 0
    %2460 = vmatpush1.bf16.msra.mxu0 %v2351
    %2461 = vmatprep.subr.bf16.mxu0 0
    %2462 = vmatpush1.bf16.msra.mxu0 %v2352
    %2463 = vmatprep.subr.bf16.mxu0 0
    %2464 = vmatpush1.bf16.msra.mxu0 %v2353
    %2465 = vmatprep.subr.bf16.mxu0 0
    %2466 = vmatpush1.bf16.msra.mxu0 %v2354
    %2467 = vmatprep.subr.bf16.mxu0 0
    %2468 = vmatpush1.bf16.msra.mxu0 %v2355
    %2469 = vmatprep.subr.bf16.mxu0 0
    %2470 = vmatpush1.bf16.msra.mxu0 %v2356
    %2471 = vmatprep.subr.bf16.mxu0 0
    %2472 = vmatpush1.bf16.msra.mxu0 %v2357
    %2473 = vmatprep.subr.bf16.mxu0 0
    %2474 = vmatpush1.bf16.msra.mxu0 %v2358
    %2475 = vmatprep.subr.bf16.mxu0 0
    %2476 = vmatpush1.bf16.msra.mxu0 %v2359
    %2477 = vmatprep.subr.bf16.mxu0 0
    %2478 = vmatpush1.bf16.msra.mxu0 %v2360
    %2479 = vmatprep.mubr.bf16.mxu0 %v2396
    %2480 = vmatmul.mubr.bf16.gmra.mrb[0].mxu0 %v2395
    %v2481 = vpop.f32.mrb[0].mxu0
    %v2482 = vadd.f32 %v2442, %v2481
    %v2483 = vpop.f32.mrb[0].mxu0
    %v2484 = vpop.f32.mrb[0].mxu0
    %v2485 = vpop.f32.mrb[0].mxu0
    %2486 = vdwg.mxu0
    %2487 = vmatprep.subr.bf16.mxu0 0
    %2488 = vmatpush1.bf16.msra.mxu0 %v2361
    %2489 = vmatprep.subr.bf16.mxu0 0
    %2490 = vmatpush1.bf16.msra.mxu0 %v2362
    %2491 = vmatprep.subr.bf16.mxu0 0
    %2492 = vmatpush1.bf16.msra.mxu0 %v2363
    %2493 = vmatprep.subr.bf16.mxu0 0
    %2494 = vmatpush1.bf16.msra.mxu0 %v2364
    %2495 = vmatprep.subr.bf16.mxu0 0
    %2496 = vmatpush1.bf16.msra.mxu0 %v2365
    %2497 = vmatprep.subr.bf16.mxu0 0
    %2498 = vmatpush1.bf16.msra.mxu0 %v2366
    %2499 = vmatprep.subr.bf16.mxu0 0
    %2500 = vmatpush1.bf16.msra.mxu0 %v2367
    %2501 = vmatprep.subr.bf16.mxu0 0
    %2502 = vmatpush1.bf16.msra.mxu0 %v2368
    %2503 = vmatprep.subr.bf16.mxu0 0
    %2504 = vmatpush1.bf16.msra.mxu0 %v2369
    %2505 = vmatprep.subr.bf16.mxu0 0
    %2506 = vmatpush1.bf16.msra.mxu0 %v2370
    %2507 = vmatprep.subr.bf16.mxu0 0
    %2508 = vmatpush1.bf16.msra.mxu0 %v2371
    %2509 = vmatprep.subr.bf16.mxu0 0
    %2510 = vmatpush1.bf16.msra.mxu0 %v2372
    %2511 = vmatprep.subr.bf16.mxu0 0
    %2512 = vmatpush1.bf16.msra.mxu0 %v2373
    %2513 = vmatprep.subr.bf16.mxu0 0
    %2514 = vmatpush1.bf16.msra.mxu0 %v2374
    %2515 = vmatprep.subr.bf16.mxu0 0
    %2516 = vmatpush1.bf16.msra.mxu0 %v2375
    %2517 = vmatprep.subr.bf16.mxu0 0
    %2518 = vmatpush1.bf16.msra.mxu0 %v2376
    %2519 = vmatprep.mubr.bf16.mxu0 %v2398
    %2520 = vmatmul.mubr.bf16.gmra.mrb[0].mxu0 %v2397
    %v2521 = vpop.f32.mrb[0].mxu0
    %v2522 = vadd.f32 %v2482, %v2521
    %v2523 = vpop.f32.mrb[0].mxu0
    %v2524 = vpop.f32.mrb[0].mxu0
    %v2525 = vpop.f32.mrb[0].mxu0
    %2526 = vdwg.mxu0
    %2527 = vmatprep.subr.bf16.mxu0 0
    %2528 = vmatpush1.bf16.msra.mxu0 %v2377
    %2529 = vmatprep.subr.bf16.mxu0 0
    %2530 = vmatpush1.bf16.msra.mxu0 %v2378
    %2531 = vmatprep.subr.bf16.mxu0 0
    %2532 = vmatpush1.bf16.msra.mxu0 %v2379
    %2533 = vmatprep.subr.bf16.mxu0 0
    %2534 = vmatpush1.bf16.msra.mxu0 %v2380
    %2535 = vmatprep.subr.bf16.mxu0 0
    %2536 = vmatpush1.bf16.msra.mxu0 %v2381
    %2537 = vmatprep.subr.bf16.mxu0 0
    %2538 = vmatpush1.bf16.msra.mxu0 %v2382
    %2539 = vmatprep.subr.bf16.mxu0 0
    %2540 = vmatpush1.bf16.msra.mxu0 %v2383
    %2541 = vmatprep.subr.bf16.mxu0 0
    %2542 = vmatpush1.bf16.msra.mxu0 %v2384
    %2543 = vmatprep.subr.bf16.mxu0 0
    %2544 = vmatpush1.bf16.msra.mxu0 %v2385
    %2545 = vmatprep.subr.bf16.mxu0 0
    %2546 = vmatpush1.bf16.msra.mxu0 %v2386
    %2547 = vmatprep.subr.bf16.mxu0 0
    %2548 = vmatpush1.bf16.msra.mxu0 %v2387
    %2549 = vmatprep.subr.bf16.mxu0 0
    %2550 = vmatpush1.bf16.msra.mxu0 %v2388
    %2551 = vmatprep.subr.bf16.mxu0 0
    %2552 = vmatpush1.bf16.msra.mxu0 %v2389
    %2553 = vmatprep.subr.bf16.mxu0 0
    %2554 = vmatpush1.bf16.msra.mxu0 %v2390
    %2555 = vmatprep.subr.bf16.mxu0 0
    %2556 = vmatpush1.bf16.msra.mxu0 %v2391
    %2557 = vmatprep.subr.bf16.mxu0 0
    %2558 = vmatpush1.bf16.msra.mxu0 %v2392
    %2559 = vmatprep.mubr.bf16.mxu0 %v2400
    %2560 = vmatmul.mubr.bf16.gmra.mrb[0].mxu0 %v2399
    %v2561 = vpop.f32.mrb[0].mxu0
    %v2562 = vadd.f32 %v2522, %v2561
    %v2563 = vpop.f32.mrb[0].mxu0
    %v2564 = vpop.f32.mrb[0].mxu0
    %v2565 = vpop.f32.mrb[0].mxu0
    %2566 = vdwg.mxu0
    %v2567 = vld [vmem:[%s7] sm:$0x3f]
    %v2568 = vsub.f32 %v2567, 1.0
    %v2569 = vmul.f32 %v2568, 1e+30
    %v2571 = vcombine.high %v2562, %v2562
    %v2573 = vunpack.c.l.s4 1966171168
    %v2574 = vunpack.c.0.s8 %v2573
    %v2575 = vlaneseq
    %v2576 = vshrl.u32 %v2575, 7
    %v2577 = vsub.s32 %v2574, %v2576
    %v2578 = vrot.slane %v2562, %v2577
    %v2580 = vunpack.c.l.s4 1966171168
    %v2581 = vunpack.c.0.s8 %v2580
    %v2582 = vlaneseq
    %v2583 = vshrl.u32 %v2582, 7
    %v2584 = vsub.s32 %v2581, %v2583
    %v2585 = vrot.slane %v2571, %v2584
    %v2586 = vcombine.high %v2578, %v2578
    %v2587 = vcombine.high %v2585, %v2585
    %v2589 = vunpack.c.l.s4 1966171168
    %v2590 = vunpack.c.0.s8 %v2589
    %v2591 = vlaneseq
    %v2592 = vshrl.u32 %v2591, 7
    %v2593 = vsub.s32 %v2590, %v2592
    %v2594 = vrot.slane %v2578, %v2593
    %v2596 = vunpack.c.l.s4 1966171168
    %v2597 = vunpack.c.0.s8 %v2596
    %v2598 = vlaneseq
    %v2599 = vshrl.u32 %v2598, 7
    %v2600 = vsub.s32 %v2597, %v2599
    %v2601 = vrot.slane %v2585, %v2600
    %v2603 = vunpack.c.l.s4 1966171168
    %v2604 = vunpack.c.0.s8 %v2603
    %v2605 = vlaneseq
    %v2606 = vshrl.u32 %v2605, 7
    %v2607 = vsub.s32 %v2604, %v2606
    %v2608 = vrot.slane %v2586, %v2607
    %v2610 = vunpack.c.l.s4 1966171168
    %v2611 = vunpack.c.0.s8 %v2610
    %v2612 = vlaneseq
    %v2613 = vshrl.u32 %v2612, 7
    %v2614 = vsub.s32 %v2611, %v2613
    %v2615 = vrot.slane %v2587, %v2614
    %v2616 = vcombine.high %v2594, %v2594
    %v2617 = vcombine.high %v2601, %v2601
    %v2618 = vcombine.high %v2608, %v2608
    %v2619 = vcombine.high %v2615, %v2615
    %v2620 = vlaneseq
    %v2621 = vshrl.u32 %v2620, 7
    %v2622 = vsub.s32 0, %v2621
    %v2623 = vrot.slane %v2594, %v2622
    %v2624 = vlaneseq
    %v2625 = vshrl.u32 %v2624, 7
    %v2626 = vsub.s32 0, %v2625
    %v2627 = vrot.slane %v2608, %v2626
    %v2628 = vlaneseq
    %v2629 = vshrl.u32 %v2628, 7
    %v2630 = vsub.s32 0, %v2629
    %v2631 = vrot.slane %v2616, %v2630
    %v2632 = vlaneseq
    %v2633 = vshrl.u32 %v2632, 7
    %v2634 = vsub.s32 0, %v2633
    %v2635 = vrot.slane %v2618, %v2634
    %v2636 = vlaneseq
    %v2637 = vshrl.u32 %v2636, 7
    %v2638 = vsub.s32 0, %v2637
    %v2639 = vrot.slane %v2601, %v2638
    %v2640 = vlaneseq
    %v2641 = vshrl.u32 %v2640, 7
    %v2642 = vsub.s32 0, %v2641
    %v2643 = vrot.slane %v2615, %v2642
    %v2644 = vlaneseq
    %v2645 = vshrl.u32 %v2644, 7
    %v2646 = vsub.s32 0, %v2645
    %v2647 = vrot.slane %v2617, %v2646
    %v2648 = vlaneseq
    %v2649 = vshrl.u32 %v2648, 7
    %v2650 = vsub.s32 0, %v2649
    %v2651 = vrot.slane %v2619, %v2650
    %v2660 = vadd.f32 %v2623, %v2569
    %v2661 = vadd.f32 %v2627, %v2569
    %v2662 = vadd.f32 %v2631, %v2569
    %v2663 = vadd.f32 %v2635, %v2569
    %v2664 = vadd.f32 %v2639, %v2569
    %v2665 = vadd.f32 %v2643, %v2569
    %v2666 = vadd.f32 %v2647, %v2569
    %v2667 = vadd.f32 %v2651, %v2569
    %vm2668 = vcmask 783360
    %v2669 = vsel %vm2668, %v2660, -inf
    %2670 = vmax.xlane.f32.xlu0 %v2669
    %v2671 = vpop.xlane.xlu0 %2670
    %v2672 = vsel %vm2668, %v2661, -inf
    %2673 = vmax.xlane.f32.xlu0 %v2672
    %v2674 = vpop.xlane.xlu0 %2673
    %v2675 = vsel %vm2668, %v2662, -inf
    %2676 = vmax.xlane.f32.xlu0 %v2675
    %v2677 = vpop.xlane.xlu0 %2676
    %v2678 = vsel %vm2668, %v2663, -inf
    %2679 = vmax.xlane.f32.xlu0 %v2678
    %v2680 = vpop.xlane.xlu0 %2679
    %v2681 = vsel %vm2668, %v2664, -inf
    %2682 = vmax.xlane.f32.xlu0 %v2681
    %v2683 = vpop.xlane.xlu0 %2682
    %v2684 = vsel %vm2668, %v2665, -inf
    %2685 = vmax.xlane.f32.xlu0 %v2684
    %v2686 = vpop.xlane.xlu0 %2685
    %v2687 = vsel %vm2668, %v2666, -inf
    %2688 = vmax.xlane.f32.xlu0 %v2687
    %v2689 = vpop.xlane.xlu0 %2688
    %v2690 = vsel %vm2668, %v2667, -inf
    %2691 = vmax.xlane.f32.xlu0 %v2690
    %v2692 = vpop.xlane.xlu0 %2691
    %v2693 = vmul.f32 %v2671, %v2567
    %v2694 = vmul.f32 %v2674, %v2567
    %v2695 = vmul.f32 %v2677, %v2567
    %v2696 = vmul.f32 %v2680, %v2567
    %v2697 = vmul.f32 %v2683, %v2567
    %v2698 = vmul.f32 %v2686, %v2567
    %v2699 = vmul.f32 %v2689, %v2567
    %v2700 = vmul.f32 %v2692, %v2567
    %v2701 = vsel %vm2668, %v2693, 0.0
    %v2702 = vrot.slane %v2701, 4
    %v2703 = vadd.f32 %v2701, %v2702
    %v2704 = vrot.slane %v2703, 2
    %v2705 = vadd.f32 %v2703, %v2704
    %v2706 = vrot.slane %v2705, 1
    %v2707 = vadd.f32 %v2705, %v2706
    %v2708 = vsel %vm2668, %v2694, 0.0
    %v2709 = vrot.slane %v2708, 4
    %v2710 = vadd.f32 %v2708, %v2709
    %v2711 = vrot.slane %v2710, 2
    %v2712 = vadd.f32 %v2710, %v2711
    %v2713 = vrot.slane %v2712, 1
    %v2714 = vadd.f32 %v2712, %v2713
    %v2715 = vsel %vm2668, %v2695, 0.0
    %v2716 = vrot.slane %v2715, 4
    %v2717 = vadd.f32 %v2715, %v2716
    %v2718 = vrot.slane %v2717, 2
    %v2719 = vadd.f32 %v2717, %v2718
    %v2720 = vrot.slane %v2719, 1
    %v2721 = vadd.f32 %v2719, %v2720
    %v2722 = vsel %vm2668, %v2696, 0.0
    %v2723 = vrot.slane %v2722, 4
    %v2724 = vadd.f32 %v2722, %v2723
    %v2725 = vrot.slane %v2724, 2
    %v2726 = vadd.f32 %v2724, %v2725
    %v2727 = vrot.slane %v2726, 1
    %v2728 = vadd.f32 %v2726, %v2727
    %v2729 = vsel %vm2668, %v2697, 0.0
    %v2730 = vrot.slane %v2729, 4
    %v2731 = vadd.f32 %v2729, %v2730
    %v2732 = vrot.slane %v2731, 2
    %v2733 = vadd.f32 %v2731, %v2732
    %v2734 = vrot.slane %v2733, 1
    %v2735 = vadd.f32 %v2733, %v2734
    %v2736 = vsel %vm2668, %v2698, 0.0
    %v2737 = vrot.slane %v2736, 4
    %v2738 = vadd.f32 %v2736, %v2737
    %v2739 = vrot.slane %v2738, 2
    %v2740 = vadd.f32 %v2738, %v2739
    %v2741 = vrot.slane %v2740, 1
    %v2742 = vadd.f32 %v2740, %v2741
    %v2743 = vsel %vm2668, %v2699, 0.0
    %v2744 = vrot.slane %v2743, 4
    %v2745 = vadd.f32 %v2743, %v2744
    %v2746 = vrot.slane %v2745, 2
    %v2747 = vadd.f32 %v2745, %v2746
    %v2748 = vrot.slane %v2747, 1
    %v2749 = vadd.f32 %v2747, %v2748
    %v2750 = vsel %vm2668, %v2700, 0.0
    %v2751 = vrot.slane %v2750, 4
    %v2752 = vadd.f32 %v2750, %v2751
    %v2753 = vrot.slane %v2752, 2
    %v2754 = vadd.f32 %v2752, %v2753
    %v2755 = vrot.slane %v2754, 1
    %v2756 = vadd.f32 %v2754, %v2755
    %vm2765 = vcmask 1041409
    %v2766 = vsel %vm2765, %v2714, %v2707
    %vm2767 = vcmask 1042434
    %v2768 = vsel %vm2767, %v2721, %v2766
    %vm2769 = vcmask 1043459
    %v2770 = vsel %vm2769, %v2728, %v2768
    %vm2771 = vcmask 1044484
    %v2772 = vsel %vm2771, %v2735, %v2770
    %vm2773 = vcmask 1045509
    %v2774 = vsel %vm2773, %v2742, %v2772
    %vm2775 = vcmask 1046534
    %v2776 = vsel %vm2775, %v2749, %v2774
    %vm2777 = vcmask 1047559
    %v2778 = vsel %vm2777, %v2756, %v2776
    %v2780 = vsub.f32 %v2562, %v2778
    %v2781 = vmul.f32 %v2780, 1.442695
    %v2782 = vpow.pop %v2781
    %v2784 = vcombine.high %v2782, %v2782
    %v2786 = vunpack.c.l.s4 1966171168
    %v2787 = vunpack.c.0.s8 %v2786
    %v2788 = vlaneseq
    %v2789 = vshrl.u32 %v2788, 7
    %v2790 = vsub.s32 %v2787, %v2789
    %v2791 = vrot.slane %v2782, %v2790
    %v2793 = vunpack.c.l.s4 1966171168
    %v2794 = vunpack.c.0.s8 %v2793
    %v2795 = vlaneseq
    %v2796 = vshrl.u32 %v2795, 7
    %v2797 = vsub.s32 %v2794, %v2796
    %v2798 = vrot.slane %v2784, %v2797
    %v2799 = vcombine.high %v2791, %v2791
    %v2800 = vcombine.high %v2798, %v2798
    %v2802 = vunpack.c.l.s4 1966171168
    %v2803 = vunpack.c.0.s8 %v2802
    %v2804 = vlaneseq
    %v2805 = vshrl.u32 %v2804, 7
    %v2806 = vsub.s32 %v2803, %v2805
    %v2807 = vrot.slane %v2791, %v2806
    %v2809 = vunpack.c.l.s4 1966171168
    %v2810 = vunpack.c.0.s8 %v2809
    %v2811 = vlaneseq
    %v2812 = vshrl.u32 %v2811, 7
    %v2813 = vsub.s32 %v2810, %v2812
    %v2814 = vrot.slane %v2798, %v2813
    %v2816 = vunpack.c.l.s4 1966171168
    %v2817 = vunpack.c.0.s8 %v2816
    %v2818 = vlaneseq
    %v2819 = vshrl.u32 %v2818, 7
    %v2820 = vsub.s32 %v2817, %v2819
    %v2821 = vrot.slane %v2799, %v2820
    %v2823 = vunpack.c.l.s4 1966171168
    %v2824 = vunpack.c.0.s8 %v2823
    %v2825 = vlaneseq
    %v2826 = vshrl.u32 %v2825, 7
    %v2827 = vsub.s32 %v2824, %v2826
    %v2828 = vrot.slane %v2800, %v2827
    %v2829 = vcombine.high %v2807, %v2807
    %v2830 = vcombine.high %v2814, %v2814
    %v2831 = vcombine.high %v2821, %v2821
    %v2832 = vcombine.high %v2828, %v2828
    %v2833 = vlaneseq
    %v2834 = vshrl.u32 %v2833, 7
    %v2835 = vsub.s32 0, %v2834
    %v2836 = vrot.slane %v2807, %v2835
    %v2837 = vlaneseq
    %v2838 = vshrl.u32 %v2837, 7
    %v2839 = vsub.s32 0, %v2838
    %v2840 = vrot.slane %v2821, %v2839
    %v2841 = vlaneseq
    %v2842 = vshrl.u32 %v2841, 7
    %v2843 = vsub.s32 0, %v2842
    %v2844 = vrot.slane %v2829, %v2843
    %v2845 = vlaneseq
    %v2846 = vshrl.u32 %v2845, 7
    %v2847 = vsub.s32 0, %v2846
    %v2848 = vrot.slane %v2831, %v2847
    %v2849 = vlaneseq
    %v2850 = vshrl.u32 %v2849, 7
    %v2851 = vsub.s32 0, %v2850
    %v2852 = vrot.slane %v2814, %v2851
    %v2853 = vlaneseq
    %v2854 = vshrl.u32 %v2853, 7
    %v2855 = vsub.s32 0, %v2854
    %v2856 = vrot.slane %v2828, %v2855
    %v2857 = vlaneseq
    %v2858 = vshrl.u32 %v2857, 7
    %v2859 = vsub.s32 0, %v2858
    %v2860 = vrot.slane %v2830, %v2859
    %v2861 = vlaneseq
    %v2862 = vshrl.u32 %v2861, 7
    %v2863 = vsub.s32 0, %v2862
    %v2864 = vrot.slane %v2832, %v2863
    %v2873 = vmul.f32 %v2836, %v2567
    %v2874 = vmul.f32 %v2840, %v2567
    %v2875 = vmul.f32 %v2844, %v2567
    %v2876 = vmul.f32 %v2848, %v2567
    %v2877 = vmul.f32 %v2852, %v2567
    %v2878 = vmul.f32 %v2856, %v2567
    %v2879 = vmul.f32 %v2860, %v2567
    %v2880 = vmul.f32 %v2864, %v2567
    %v2881 = vsel %vm2668, %v2873, 0.0
    %2882 = vadd.xlane.f32.xlu0 %v2881
    %v2883 = vpop.xlane.xlu0 %2882
    %v2884 = vsel %vm2668, %v2874, 0.0
    %2885 = vadd.xlane.f32.xlu0 %v2884
    %v2886 = vpop.xlane.xlu0 %2885
    %v2887 = vsel %vm2668, %v2875, 0.0
    %2888 = vadd.xlane.f32.xlu0 %v2887
    %v2889 = vpop.xlane.xlu0 %2888
    %v2890 = vsel %vm2668, %v2876, 0.0
    %2891 = vadd.xlane.f32.xlu0 %v2890
    %v2892 = vpop.xlane.xlu0 %2891
    %v2893 = vsel %vm2668, %v2877, 0.0
    %2894 = vadd.xlane.f32.xlu0 %v2893
    %v2895 = vpop.xlane.xlu0 %2894
    %v2896 = vsel %vm2668, %v2878, 0.0
    %2897 = vadd.xlane.f32.xlu0 %v2896
    %v2898 = vpop.xlane.xlu0 %2897
    %v2899 = vsel %vm2668, %v2879, 0.0
    %2900 = vadd.xlane.f32.xlu0 %v2899
    %v2901 = vpop.xlane.xlu0 %2900
    %v2902 = vsel %vm2668, %v2880, 0.0
    %2903 = vadd.xlane.f32.xlu0 %v2902
    %v2904 = vpop.xlane.xlu0 %2903
    %v2905 = vrcp.pop %v2883
    %v2906 = vrcp.pop %v2886
    %v2907 = vrcp.pop %v2889
    %v2908 = vrcp.pop %v2892
    %v2909 = vrcp.pop %v2895
    %v2910 = vrcp.pop %v2898
    %v2911 = vrcp.pop %v2901
    %v2912 = vrcp.pop %v2904
    %v2913 = vmul.f32 %v2905, %v2567
    %v2914 = vmul.f32 %v2906, %v2567
    %v2915 = vmul.f32 %v2907, %v2567
    %v2916 = vmul.f32 %v2908, %v2567
    %v2917 = vmul.f32 %v2909, %v2567
    %v2918 = vmul.f32 %v2910, %v2567
    %v2919 = vmul.f32 %v2911, %v2567
    %v2920 = vmul.f32 %v2912, %v2567
    %v2921 = vsel %vm2668, %v2913, 0.0
    %v2922 = vrot.slane %v2921, 4
    %v2923 = vadd.f32 %v2921, %v2922
    %v2924 = vrot.slane %v2923, 2
    %v2925 = vadd.f32 %v2923, %v2924
    %v2926 = vrot.slane %v2925, 1
    %v2927 = vadd.f32 %v2925, %v2926
    %v2928 = vsel %vm2668, %v2914, 0.0
    %v2929 = vrot.slane %v2928, 4
    %v2930 = vadd.f32 %v2928, %v2929
    %v2931 = vrot.slane %v2930, 2
    %v2932 = vadd.f32 %v2930, %v2931
    %v2933 = vrot.slane %v2932, 1
    %v2934 = vadd.f32 %v2932, %v2933
    %v2935 = vsel %vm2668, %v2915, 0.0
    %v2936 = vrot.slane %v2935, 4
    %v2937 = vadd.f32 %v2935, %v2936
    %v2938 = vrot.slane %v2937, 2
    %v2939 = vadd.f32 %v2937, %v2938
    %v2940 = vrot.slane %v2939, 1
    %v2941 = vadd.f32 %v2939, %v2940
    %v2942 = vsel %vm2668, %v2916, 0.0
    %v2943 = vrot.slane %v2942, 4
    %v2944 = vadd.f32 %v2942, %v2943
    %v2945 = vrot.slane %v2944, 2
    %v2946 = vadd.f32 %v2944, %v2945
    %v2947 = vrot.slane %v2946, 1
    %v2948 = vadd.f32 %v2946, %v2947
    %v2949 = vsel %vm2668, %v2917, 0.0
    %v2950 = vrot.slane %v2949, 4
    %v2951 = vadd.f32 %v2949, %v2950
    %v2952 = vrot.slane %v2951, 2
    %v2953 = vadd.f32 %v2951, %v2952
    %v2954 = vrot.slane %v2953, 1
    %v2955 = vadd.f32 %v2953, %v2954
    %v2956 = vsel %vm2668, %v2918, 0.0
    %v2957 = vrot.slane %v2956, 4
    %v2958 = vadd.f32 %v2956, %v2957
    %v2959 = vrot.slane %v2958, 2
    %v2960 = vadd.f32 %v2958, %v2959
    %v2961 = vrot.slane %v2960, 1
    %v2962 = vadd.f32 %v2960, %v2961
    %v2963 = vsel %vm2668, %v2919, 0.0
    %v2964 = vrot.slane %v2963, 4
    %v2965 = vadd.f32 %v2963, %v2964
    %v2966 = vrot.slane %v2965, 2
    %v2967 = vadd.f32 %v2965, %v2966
    %v2968 = vrot.slane %v2967, 1
    %v2969 = vadd.f32 %v2967, %v2968
    %v2970 = vsel %vm2668, %v2920, 0.0
    %v2971 = vrot.slane %v2970, 4
    %v2972 = vadd.f32 %v2970, %v2971
    %v2973 = vrot.slane %v2972, 2
    %v2974 = vadd.f32 %v2972, %v2973
    %v2975 = vrot.slane %v2974, 1
    %v2976 = vadd.f32 %v2974, %v2975
    %v2985 = vsel %vm2765, %v2934, %v2927
    %v2986 = vsel %vm2767, %v2941, %v2985
    %v2987 = vsel %vm2769, %v2948, %v2986
    %v2988 = vsel %vm2771, %v2955, %v2987
    %v2989 = vsel %vm2773, %v2962, %v2988
    %v2990 = vsel %vm2775, %v2969, %v2989
    %v2991 = vsel %vm2777, %v2976, %v2990
    %v2993 = vmul.f32 %v2782, %v2991
    %vm2994 = vcmask 785408
    %2995 = vst.msk [vmem:[%s8] sm:$0xff] %vm2994, %v2993
    // Predicated region
    $region60: #{generator_forward.1} parent=1 // pred_check
      _
    $region61: #{generator_forward.1} parent=1 // pred_check_branch
      %2997 = sbr.rel (0) target = $region63
    $region62: #{generator_forward.1} parent=1 // pred_region
      _
    $region63: #{generator_forward.1} parent=1 // pred_fallthru
      _
    // Predicated region
    $region64: #{generator_forward.1} parent=1 // pred_check
      _
    $region65: #{generator_forward.1} parent=1 // pred_check_branch
      %2999 = sbr.rel (0) target = $region67
    $region66: #{generator_forward.1} parent=1 // pred_region
      _
    $region67: #{generator_forward.1} parent=1 // pred_fallthru
      _
  %3000 = vsyncmov [#allocation4]
  %s3001 = vpop.sfrf %3000
  %p3002 = scmp.eq.s32.totalorder %s3001, 0
  %p3003 = pneg %p3002
  %3005 = shalt.err (%p3003)
  %s3006 = scalar_lea.sflag [#allocation4], 1
  %3007 = vsyncmov %s3006
  %s3008 = vpop.sfrf %3007
  %p3009 = scmp.eq.s32.totalorder %s3008, 0
  %p3010 = pneg %p3009
  %3012 = shalt.err (%p3010)

</llo_original>
